<compile_context>
chip_gen: v6e
topology: v6e:2x2x1
jax: 0.10.0
libtpu: 0.0.40
codegen_flags: <defaults>
</compile_context>

<pallas_src>
import jax
import jax.numpy as jnp
from jax import lax
from jax.experimental import pallas as pl
from jax.experimental.pallas import tpu as pltpu


# ---------------------------------------------------------------------------
# Host-side constant-matrix builders (one-time precompute)
# ---------------------------------------------------------------------------
def bilinear_matrix(n_in, n_out):
    """(n_out, n_in) 1-D linear-interpolation matrix, align_corners=True."""
    if n_out == 1:
        return jnp.zeros((1, n_in), jnp.float32).at[0, 0].set(1.0)
    src = jnp.arange(n_out, dtype=jnp.float32) * (n_in - 1) / (n_out - 1)
    i0 = jnp.clip(jnp.floor(src).astype(jnp.int32), 0, max(n_in - 2, 0))
    frac = src - i0.astype(jnp.float32)
    i1 = jnp.clip(i0 + 1, 0, n_in - 1)
    return (jax.nn.one_hot(i0, n_in, dtype=jnp.float32) * (1.0 - frac)[:, None]
            + jax.nn.one_hot(i1, n_in, dtype=jnp.float32) * frac[:, None])


def make_col_upsample_matrix(aw, cin):
    """aw: (Wo, W). Returns (W*cin, Wo*cin): M[w*cin+c, wo*cin+c'] = aw[wo,w]*(c==c')."""
    wo, w_in = aw.shape
    eye_c = jnp.eye(cin, dtype=jnp.float32)
    m = aw.T[:, None, :, None] * eye_c[None, :, None, :]      # (W, cin, Wo, cin)
    return m.reshape(w_in * cin, wo * cin)


def make_banded_weights(w_hwio, n_cols):
    """w_hwio: (3, 3, cin, cout).  Returns (3, n_cols*cin, n_cols*cout) with
    B[dy, xs*cin + c, xo*cout + o] = w_hwio[dy, xs - xo + 1, c, o] if |xs-xo|<=1.
    (row-shifted activations) @ B[dy] then implements the dy-row of a 3x3 conv
    with zero padding, with dx shifts and channel contraction folded in."""
    _, _, cin, cout = w_hwio.shape
    e = jnp.stack([jnp.eye(n_cols, k=1 - dx, dtype=jnp.float32)
                   for dx in range(3)])                         # (3, n, n): E[dx, xs, xo]
    b = jnp.einsum("dsx,ydco->yscxo", e, w_hwio)                # (3, n, cin, n, cout)
    return b.reshape(3, n_cols * cin, n_cols * cout)


# ---------------------------------------------------------------------------
# The fused kernel (one grid step == one image)
# ---------------------------------------------------------------------------
def _segm_head_kernel(x_ref, ah_ref,
                      w1_ref, t1_ref, w2_ref, t2_ref,
                      w3_ref, t3_ref, w4_ref, t4_ref,
                      o_ref):
    f32, bf16 = jnp.float32, jnp.bfloat16
    rows = ah_ref.shape[0]                                       # 2H (static)

    # Row taps of the 3x3 convs as sublane rotations (XLU) + zero-row masks
    # (VPU) -- the MXU only runs the wide column/channel contractions.
    rid = lax.broadcasted_iota(jnp.int32, (rows, 1), 0)
    not_first = rid > 0                 # zero wrapped row of roll(+1)
    not_last = rid < rows - 1           # zero wrapped row of roll(-1)

    def conv3x3(a_f32, w_ref, bias, relu):
        # z[y] = A[y-1] @ W[0] + A[y] @ W[1] + A[y+1] @ W[2]  (+ bias, ReLU)
        # pltpu.roll follows jnp.roll semantics: roll(a, s)[y] = a[y - s].
        dn = jnp.where(not_first, pltpu.roll(a_f32, 1, axis=0), 0.0)
        up = jnp.where(not_last, pltpu.roll(a_f32, rows - 1, axis=0), 0.0)
        z = (jnp.dot(dn.astype(bf16), w_ref[0], preferred_element_type=f32)
             + jnp.dot(a_f32.astype(bf16), w_ref[1], preferred_element_type=f32)
             + jnp.dot(up.astype(bf16), w_ref[2], preferred_element_type=f32))
        z = z + bias
        return jnp.maximum(z, 0.0) if relu else z

    # Bilinear x2 row interpolation (align_corners=True) as one MXU matmul.
    # The column interpolation is folded into w1 host-side.
    xb = x_ref[0].astype(bf16)                                   # (H, W*Cin)
    r = jnp.dot(ah_ref[...], xb, preferred_element_type=f32)     # (2H, W*Cin)

    a = conv3x3(r, w1_ref, t1_ref[...], True)    # Up.conv[0:3]  -> (2H, 2W*(Cin//2))
    a = conv3x3(a, w2_ref, t2_ref[...], True)    # Up.conv[3:6]  -> (2H, 2W*hidden2)
    a = conv3x3(a, w3_ref, t3_ref[...], True)    # segm_net[0:3] -> (2H, 2W*class)
    a = conv3x3(a, w4_ref, t4_ref[...], False)   # segm_net[3]   -> (2H, 2W*class)

    o_ref[0] = a.astype(o_ref.dtype)


# ---------------------------------------------------------------------------
# Wrapper: one pallas_call for the whole head
# ---------------------------------------------------------------------------
def segm_head_forward(img_feat_nchw, params):
    n, cin, h, w = img_feat_nchw.shape
    ho, wo = 2 * h, 2 * w
    class_dim = params["class_dim"]

    # Boundary-only layout plumbing on the tiny input / final output.
    x2d = jnp.transpose(img_feat_nchw, (0, 2, 3, 1)).reshape(n, h, w * cin)

    inputs = [x2d, params["ah"]]
    in_specs = [
        pl.BlockSpec((1, h, w * cin), lambda i: (i, 0, 0)),
        pl.BlockSpec(params["ah"].shape, lambda i: (0, 0)),
    ]
    for k in ("1", "2", "3", "4"):
        wk, bk = params["w" + k], params["b" + k]
        inputs += [wk, bk]
        in_specs += [pl.BlockSpec(wk.shape, lambda i: (0, 0, 0)),
                     pl.BlockSpec(bk.shape, lambda i: (0, 0))]

    out = pl.pallas_call(
        _segm_head_kernel,
        out_shape=jax.ShapeDtypeStruct((n, ho, wo * class_dim), jnp.float32),
        grid=(n,),
        in_specs=in_specs,
        out_specs=pl.BlockSpec((1, ho, wo * class_dim), lambda i: (i, 0, 0)),
        compiler_params=pltpu.CompilerParams(
            dimension_semantics=("parallel",),
            vmem_limit_bytes=32 * 1024 * 1024),
    )(*inputs)

    segm = jnp.transpose(out.reshape(n, ho, wo, class_dim), (0, 3, 1, 2))
    return {"segm_logits": segm}


# ---------------------------------------------------------------------------
# Deterministic parameter construction (synthetic; BN in inference mode)
# ---------------------------------------------------------------------------
def make_segm_head_params(key, in_dim, hidden_dim1, hidden_dim2, class_dim, h, w,
                          w_dtype=jnp.bfloat16):
    del hidden_dim1  # unused by the PyTorch module (UpSampler ignores mid_dim)
    ho, wo = 2 * h, 2 * w
    ah = bilinear_matrix(h, ho)                        # (2H, H)
    aw = bilinear_matrix(w, wo)                        # (2W, W)
    awc = make_col_upsample_matrix(aw, in_dim)         # (W*Cin, 2W*Cin), f32

    params = {"class_dim": class_dim, "ah": ah.astype(w_dtype)}
    ref_layers = []
    layer_defs = [
        ("1", in_dim, in_dim // 2, True, True),        # Up.conv[0:3]
        ("2", in_dim // 2, hidden_dim2, True, True),   # Up.conv[3:6]
        ("3", hidden_dim2, class_dim, True, True),     # segm_net[0:3]
        ("4", class_dim, class_dim, False, False),     # segm_net[3]
    ]
    keys = jax.random.split(key, len(layer_defs))
    for kk, (name, cin, cout, with_bn, relu) in zip(keys, layer_defs):
        kw_, kb_ = jax.random.split(kk)
        w_oihw = (jax.random.normal(kw_, (cout, cin, 3, 3), jnp.float32)
                  / jnp.sqrt(9.0 * cin))
        conv_b = jax.random.normal(kb_, (cout,), jnp.float32) * 0.05
        if with_bn:
            gamma = 1.0 + 0.05 * jnp.arange(cout, dtype=jnp.float32) / cout
            beta = 0.01 * jnp.arange(cout, dtype=jnp.float32)
            mean = jnp.zeros((cout,), jnp.float32)
            var = jnp.ones((cout,), jnp.float32)
            s = gamma / jnp.sqrt(var + 1e-5)
            scale = s
            bias = (conv_b - mean) * s + beta
        else:
            scale = jnp.ones((cout,), jnp.float32)
            bias = conv_b
        w_hwio = jnp.transpose(w_oihw, (2, 3, 1, 0))             # (3,3,cin,cout)
        # Fold BN scale into the weights; build banded (lane-dense) form.
        banded = make_banded_weights(w_hwio * scale[None, None, None, :], wo)
        if name == "1":
            # Fold bilinear column-interp (x) channel-identity into conv1:
            # shift_rows(r @ Awc) @ B[dy] == shift_rows(r) @ (Awc @ B[dy]).
            banded = jnp.einsum("kc,dcn->dkn", awc, banded)      # (3, W*Cin, 2W*Cout)
        params["w" + name] = banded.astype(w_dtype)
        params["b" + name] = jnp.tile(bias, wo).reshape(1, wo * cout)
        ref_layers.append((w_hwio, scale, bias, relu))
    return params, ref_layers, (ah, aw)


# ---------------------------------------------------------------------------
# Pure-JAX reference (bf16 MXU operands, f32 accumulation; un-fused op order)
# ---------------------------------------------------------------------------
def segm_head_reference(img_feat_nchw, ref_layers, ah, aw):
    bf16, f32 = jnp.bfloat16, jnp.float32
    x = jnp.transpose(img_feat_nchw, (0, 2, 3, 1)).astype(bf16)          # NHWC
    r = jnp.einsum("oh,nhwc->nowc", ah.astype(bf16), x,
                   preferred_element_type=f32)
    a = jnp.einsum("pw,nowc->nopc", aw.astype(bf16), r.astype(bf16),
                   preferred_element_type=f32)
    for w_hwio, scale, bias, relu in ref_layers:
        y = lax.conv_general_dilated(
            a.astype(bf16), w_hwio.astype(bf16), window_strides=(1, 1),
            padding=((1, 1), (1, 1)),
            dimension_numbers=("NHWC", "HWIO", "NHWC"),
            preferred_element_type=f32)
        y = y * scale.reshape(1, 1, 1, -1) + bias.reshape(1, 1, 1, -1)
        a = jnp.maximum(y, 0.0) if relu else y
    return jnp.transpose(a, (0, 3, 1, 2))


if __name__ == "__main__":
    N, H, W = 2, 16, 16
    in_dim, hidden_dim1, hidden_dim2, class_dim = 8, 16, 16, 4  # hidden_dim1 unused

    key = jax.random.PRNGKey(0)
    kx, kp = jax.random.split(key)
    img_feat = jax.random.normal(kx, (N, in_dim, H, W), jnp.float32)

    params, ref_layers, (ah, aw) = make_segm_head_params(
        kp, in_dim, hidden_dim1, hidden_dim2, class_dim, H, W)

    fwd = jax.jit(lambda x: segm_head_forward(x, params))
    out = fwd(img_feat)
    segm = jax.block_until_ready(out["segm_logits"])
    assert segm.shape == (N, class_dim, 2 * H, 2 * W), segm.shape

    segm_ref = segm_head_reference(img_feat, ref_layers, ah, aw)
    max_err = float(jnp.max(jnp.abs(segm - segm_ref)))
    # Both sides use bf16 MXU operands with f32 accumulation, but the kernel
    # folds BN scale and the bilinear column-interp matrix into its bf16
    # weights, so rounding points differ slightly (few e-3).  Real tap/shift/
    # indexing bugs produce O(0.1..1) errors; 3e-2 is safe yet discriminating.
    assert max_err < 3e-2, f"max abs err {max_err}"

    print("KERNEL_OK")
</pallas_src>

<mosaic_0001>
module attributes {stable_mosaic.version = 11 : i64} {
  func.func @_segm_head_kernel(%arg0: i32, %arg1: memref<1x16x128xf32, #tpu.memory_space<vmem>>, %arg2: memref<32x16xbf16, #tpu.memory_space<vmem>>, %arg3: memref<3x128x128xbf16, #tpu.memory_space<vmem>>, %arg4: memref<1x128xf32, #tpu.memory_space<vmem>>, %arg5: memref<3x128x512xbf16, #tpu.memory_space<vmem>>, %arg6: memref<1x512xf32, #tpu.memory_space<vmem>>, %arg7: memref<3x512x128xbf16, #tpu.memory_space<vmem>>, %arg8: memref<1x128xf32, #tpu.memory_space<vmem>>, %arg9: memref<3x128x128xbf16, #tpu.memory_space<vmem>>, %arg10: memref<1x128xf32, #tpu.memory_space<vmem>>, %arg11: memref<1x32x128xf32, #tpu.memory_space<vmem>>) attributes {dimension_semantics = [#tpu.dimension_semantics<parallel>], iteration_bounds = array<i64: 2>, scalar_prefetch = 0 : i64, scratch_operands = 0 : i64, tpu.core_type = #tpu.core_type<tc>, window_params = [{transform_indices = @transform_0, window_bounds = array<i64: 1, 16, 128>}, {pipeline_mode = #tpu.pipeline_mode<synchronous>, transform_indices = @transform_1, window_bounds = array<i64: 32, 16>}, {pipeline_mode = #tpu.pipeline_mode<synchronous>, transform_indices = @transform_2, window_bounds = array<i64: 3, 128, 128>}, {pipeline_mode = #tpu.pipeline_mode<synchronous>, transform_indices = @transform_3, window_bounds = array<i64: 1, 128>}, {pipeline_mode = #tpu.pipeline_mode<synchronous>, transform_indices = @transform_4, window_bounds = array<i64: 3, 128, 512>}, {pipeline_mode = #tpu.pipeline_mode<synchronous>, transform_indices = @transform_5, window_bounds = array<i64: 1, 512>}, {pipeline_mode = #tpu.pipeline_mode<synchronous>, transform_indices = @transform_6, window_bounds = array<i64: 3, 512, 128>}, {pipeline_mode = #tpu.pipeline_mode<synchronous>, transform_indices = @transform_7, window_bounds = array<i64: 1, 128>}, {pipeline_mode = #tpu.pipeline_mode<synchronous>, transform_indices = @transform_8, window_bounds = array<i64: 3, 128, 128>}, {pipeline_mode = #tpu.pipeline_mode<synchronous>, transform_indices = @transform_9, window_bounds = array<i64: 1, 128>}, {transform_indices = @transform_10, window_bounds = array<i64: 1, 32, 128>}]} {
    %0 = tpu.iota {dimensions = array<i32: 0>} : vector<32x1xi32>
    %c0_i32 = arith.constant 0 : i32
    %1 = vector.broadcast %c0_i32 : i32 to vector<32x1xi32>
    %2 = arith.cmpi sgt, %0, %1 : vector<32x1xi32>
    %c31_i32 = arith.constant 31 : i32
    %3 = vector.broadcast %c31_i32 : i32 to vector<32x1xi32>
    %4 = arith.cmpi slt, %0, %3 : vector<32x1xi32>
    %c0 = arith.constant 0 : index
    %c0_0 = arith.constant 0 : index
    %c0_1 = arith.constant 0 : index
    %5 = vector.load %arg1[%c0, %c0_0, %c0_1] : memref<1x16x128xf32, #tpu.memory_space<vmem>>, vector<1x16x128xf32>
    %6 = vector.shape_cast %5 : vector<1x16x128xf32> to vector<16x128xf32>
    %7 = arith.truncf %6 : vector<16x128xf32> to vector<16x128xbf16>
    %c0_2 = arith.constant 0 : index
    %c0_3 = arith.constant 0 : index
    %8 = vector.load %arg2[%c0_2, %c0_3] : memref<32x16xbf16, #tpu.memory_space<vmem>>, vector<32x16xbf16>
    %cst = arith.constant dense<0.000000e+00> : vector<32x128xf32>
    %9 = tpu.matmul %8, %7, %cst {dimension_numbers = #tpu.dot_dimension_numbers<[1], [0], [0], [1], [0, 0, 1, 1], [], []>} : vector<32x16xbf16>, vector<16x128xbf16>, vector<32x128xf32> -> vector<32x128xf32>
    %c0_4 = arith.constant 0 : index
    %c0_5 = arith.constant 0 : index
    %10 = vector.load %arg4[%c0_4, %c0_5] : memref<1x128xf32, #tpu.memory_space<vmem>>, vector<1x128xf32>
    %c1_i32 = arith.constant 1 : i32
    %11 = tpu.dynamic_rotate %9 by %c1_i32 dim 0 : vector<32x128xf32>, i32 -> vector<32x128xf32>
    %cst_6 = arith.constant 0.000000e+00 : f32
    %12 = vector.shape_cast %2 : vector<32x1xi1> to vector<32x1xi1>
    %13 = vector.broadcast %12 : vector<32x1xi1> to vector<32x128xi1>
    %14 = vector.broadcast %cst_6 : f32 to vector<32x128xf32>
    %15 = arith.select %13, %11, %14 : vector<32x128xi1>, vector<32x128xf32>
    %c31_i32_7 = arith.constant 31 : i32
    %16 = tpu.dynamic_rotate %9 by %c31_i32_7 dim 0 : vector<32x128xf32>, i32 -> vector<32x128xf32>
    %cst_8 = arith.constant 0.000000e+00 : f32
    %17 = vector.shape_cast %4 : vector<32x1xi1> to vector<32x1xi1>
    %18 = vector.broadcast %17 : vector<32x1xi1> to vector<32x128xi1>
    %19 = vector.broadcast %cst_8 : f32 to vector<32x128xf32>
    %20 = arith.select %18, %16, %19 : vector<32x128xi1>, vector<32x128xf32>
    %21 = arith.truncf %15 : vector<32x128xf32> to vector<32x128xbf16>
    %c0_9 = arith.constant 0 : index
    %c0_10 = arith.constant 0 : index
    %c0_11 = arith.constant 0 : index
    %22 = vector.load %arg3[%c0_9, %c0_10, %c0_11] : memref<3x128x128xbf16, #tpu.memory_space<vmem>>, vector<1x128x128xbf16>
    %23 = vector.shape_cast %22 : vector<1x128x128xbf16> to vector<128x128xbf16>
    %cst_12 = arith.constant dense<0.000000e+00> : vector<32x128xf32>
    %24 = tpu.matmul %21, %23, %cst_12 {dimension_numbers = #tpu.dot_dimension_numbers<[1], [0], [0], [1], [0, 0, 1, 1], [], []>} : vector<32x128xbf16>, vector<128x128xbf16>, vector<32x128xf32> -> vector<32x128xf32>
    %25 = arith.truncf %9 : vector<32x128xf32> to vector<32x128xbf16>
    %c1 = arith.constant 1 : index
    %c0_13 = arith.constant 0 : index
    %c0_14 = arith.constant 0 : index
    %26 = vector.load %arg3[%c1, %c0_13, %c0_14] : memref<3x128x128xbf16, #tpu.memory_space<vmem>>, vector<1x128x128xbf16>
    %27 = vector.shape_cast %26 : vector<1x128x128xbf16> to vector<128x128xbf16>
    %cst_15 = arith.constant dense<0.000000e+00> : vector<32x128xf32>
    %28 = tpu.matmul %25, %27, %cst_15 {dimension_numbers = #tpu.dot_dimension_numbers<[1], [0], [0], [1], [0, 0, 1, 1], [], []>} : vector<32x128xbf16>, vector<128x128xbf16>, vector<32x128xf32> -> vector<32x128xf32>
    %29 = arith.addf %24, %28 : vector<32x128xf32>
    %30 = arith.truncf %20 : vector<32x128xf32> to vector<32x128xbf16>
    %c2 = arith.constant 2 : index
    %c0_16 = arith.constant 0 : index
    %c0_17 = arith.constant 0 : index
    %31 = vector.load %arg3[%c2, %c0_16, %c0_17] : memref<3x128x128xbf16, #tpu.memory_space<vmem>>, vector<1x128x128xbf16>
    %32 = vector.shape_cast %31 : vector<1x128x128xbf16> to vector<128x128xbf16>
    %cst_18 = arith.constant dense<0.000000e+00> : vector<32x128xf32>
    %33 = tpu.matmul %30, %32, %cst_18 {dimension_numbers = #tpu.dot_dimension_numbers<[1], [0], [0], [1], [0, 0, 1, 1], [], []>} : vector<32x128xbf16>, vector<128x128xbf16>, vector<32x128xf32> -> vector<32x128xf32>
    %34 = arith.addf %29, %33 : vector<32x128xf32>
    %35 = vector.broadcast %10 : vector<1x128xf32> to vector<32x128xf32>
    %36 = arith.addf %34, %35 : vector<32x128xf32>
    %cst_19 = arith.constant 0.000000e+00 : f32
    %37 = vector.broadcast %cst_19 : f32 to vector<32x128xf32>
    %38 = arith.maximumf %36, %37 : vector<32x128xf32>
    %c0_20 = arith.constant 0 : index
    %c0_21 = arith.constant 0 : index
    %39 = vector.load %arg6[%c0_20, %c0_21] : memref<1x512xf32, #tpu.memory_space<vmem>>, vector<1x512xf32>
    %c1_i32_22 = arith.constant 1 : i32
    %40 = tpu.dynamic_rotate %38 by %c1_i32_22 dim 0 : vector<32x128xf32>, i32 -> vector<32x128xf32>
    %cst_23 = arith.constant 0.000000e+00 : f32
    %41 = vector.shape_cast %2 : vector<32x1xi1> to vector<32x1xi1>
    %42 = vector.broadcast %41 : vector<32x1xi1> to vector<32x128xi1>
    %43 = vector.broadcast %cst_23 : f32 to vector<32x128xf32>
    %44 = arith.select %42, %40, %43 : vector<32x128xi1>, vector<32x128xf32>
    %c31_i32_24 = arith.constant 31 : i32
    %45 = tpu.dynamic_rotate %38 by %c31_i32_24 dim 0 : vector<32x128xf32>, i32 -> vector<32x128xf32>
    %cst_25 = arith.constant 0.000000e+00 : f32
    %46 = vector.shape_cast %4 : vector<32x1xi1> to vector<32x1xi1>
    %47 = vector.broadcast %46 : vector<32x1xi1> to vector<32x128xi1>
    %48 = vector.broadcast %cst_25 : f32 to vector<32x128xf32>
    %49 = arith.select %47, %45, %48 : vector<32x128xi1>, vector<32x128xf32>
    %50 = arith.truncf %44 : vector<32x128xf32> to vector<32x128xbf16>
    %c0_26 = arith.constant 0 : index
    %c0_27 = arith.constant 0 : index
    %c0_28 = arith.constant 0 : index
    %51 = vector.load %arg5[%c0_26, %c0_27, %c0_28] : memref<3x128x512xbf16, #tpu.memory_space<vmem>>, vector<1x128x512xbf16>
    %52 = vector.shape_cast %51 : vector<1x128x512xbf16> to vector<128x512xbf16>
    %cst_29 = arith.constant dense<0.000000e+00> : vector<32x512xf32>
    %53 = tpu.matmul %50, %52, %cst_29 {dimension_numbers = #tpu.dot_dimension_numbers<[1], [0], [0], [1], [0, 0, 1, 1], [], []>} : vector<32x128xbf16>, vector<128x512xbf16>, vector<32x512xf32> -> vector<32x512xf32>
    %54 = arith.truncf %38 : vector<32x128xf32> to vector<32x128xbf16>
    %c1_30 = arith.constant 1 : index
    %c0_31 = arith.constant 0 : index
    %c0_32 = arith.constant 0 : index
    %55 = vector.load %arg5[%c1_30, %c0_31, %c0_32] : memref<3x128x512xbf16, #tpu.memory_space<vmem>>, vector<1x128x512xbf16>
    %56 = vector.shape_cast %55 : vector<1x128x512xbf16> to vector<128x512xbf16>
    %cst_33 = arith.constant dense<0.000000e+00> : vector<32x512xf32>
    %57 = tpu.matmul %54, %56, %cst_33 {dimension_numbers = #tpu.dot_dimension_numbers<[1], [0], [0], [1], [0, 0, 1, 1], [], []>} : vector<32x128xbf16>, vector<128x512xbf16>, vector<32x512xf32> -> vector<32x512xf32>
    %58 = arith.addf %53, %57 : vector<32x512xf32>
    %59 = arith.truncf %49 : vector<32x128xf32> to vector<32x128xbf16>
    %c2_34 = arith.constant 2 : index
    %c0_35 = arith.constant 0 : index
    %c0_36 = arith.constant 0 : index
    %60 = vector.load %arg5[%c2_34, %c0_35, %c0_36] : memref<3x128x512xbf16, #tpu.memory_space<vmem>>, vector<1x128x512xbf16>
    %61 = vector.shape_cast %60 : vector<1x128x512xbf16> to vector<128x512xbf16>
    %cst_37 = arith.constant dense<0.000000e+00> : vector<32x512xf32>
    %62 = tpu.matmul %59, %61, %cst_37 {dimension_numbers = #tpu.dot_dimension_numbers<[1], [0], [0], [1], [0, 0, 1, 1], [], []>} : vector<32x128xbf16>, vector<128x512xbf16>, vector<32x512xf32> -> vector<32x512xf32>
    %63 = arith.addf %58, %62 : vector<32x512xf32>
    %64 = vector.broadcast %39 : vector<1x512xf32> to vector<32x512xf32>
    %65 = arith.addf %63, %64 : vector<32x512xf32>
    %cst_38 = arith.constant 0.000000e+00 : f32
    %66 = vector.broadcast %cst_38 : f32 to vector<32x512xf32>
    %67 = arith.maximumf %65, %66 : vector<32x512xf32>
    %c0_39 = arith.constant 0 : index
    %c0_40 = arith.constant 0 : index
    %68 = vector.load %arg8[%c0_39, %c0_40] : memref<1x128xf32, #tpu.memory_space<vmem>>, vector<1x128xf32>
    %c1_i32_41 = arith.constant 1 : i32
    %69 = tpu.dynamic_rotate %67 by %c1_i32_41 dim 0 : vector<32x512xf32>, i32 -> vector<32x512xf32>
    %cst_42 = arith.constant 0.000000e+00 : f32
    %70 = vector.shape_cast %2 : vector<32x1xi1> to vector<32x1xi1>
    %71 = vector.broadcast %70 : vector<32x1xi1> to vector<32x512xi1>
    %72 = vector.broadcast %cst_42 : f32 to vector<32x512xf32>
    %73 = arith.select %71, %69, %72 : vector<32x512xi1>, vector<32x512xf32>
    %c31_i32_43 = arith.constant 31 : i32
    %74 = tpu.dynamic_rotate %67 by %c31_i32_43 dim 0 : vector<32x512xf32>, i32 -> vector<32x512xf32>
    %cst_44 = arith.constant 0.000000e+00 : f32
    %75 = vector.shape_cast %4 : vector<32x1xi1> to vector<32x1xi1>
    %76 = vector.broadcast %75 : vector<32x1xi1> to vector<32x512xi1>
    %77 = vector.broadcast %cst_44 : f32 to vector<32x512xf32>
    %78 = arith.select %76, %74, %77 : vector<32x512xi1>, vector<32x512xf32>
    %79 = arith.truncf %73 : vector<32x512xf32> to vector<32x512xbf16>
    %c0_45 = arith.constant 0 : index
    %c0_46 = arith.constant 0 : index
    %c0_47 = arith.constant 0 : index
    %80 = vector.load %arg7[%c0_45, %c0_46, %c0_47] : memref<3x512x128xbf16, #tpu.memory_space<vmem>>, vector<1x512x128xbf16>
    %81 = vector.shape_cast %80 : vector<1x512x128xbf16> to vector<512x128xbf16>
    %cst_48 = arith.constant dense<0.000000e+00> : vector<32x128xf32>
    %82 = tpu.matmul %79, %81, %cst_48 {dimension_numbers = #tpu.dot_dimension_numbers<[1], [0], [0], [1], [0, 0, 1, 1], [], []>} : vector<32x512xbf16>, vector<512x128xbf16>, vector<32x128xf32> -> vector<32x128xf32>
    %83 = arith.truncf %67 : vector<32x512xf32> to vector<32x512xbf16>
    %c1_49 = arith.constant 1 : index
    %c0_50 = arith.constant 0 : index
    %c0_51 = arith.constant 0 : index
    %84 = vector.load %arg7[%c1_49, %c0_50, %c0_51] : memref<3x512x128xbf16, #tpu.memory_space<vmem>>, vector<1x512x128xbf16>
    %85 = vector.shape_cast %84 : vector<1x512x128xbf16> to vector<512x128xbf16>
    %cst_52 = arith.constant dense<0.000000e+00> : vector<32x128xf32>
    %86 = tpu.matmul %83, %85, %cst_52 {dimension_numbers = #tpu.dot_dimension_numbers<[1], [0], [0], [1], [0, 0, 1, 1], [], []>} : vector<32x512xbf16>, vector<512x128xbf16>, vector<32x128xf32> -> vector<32x128xf32>
    %87 = arith.addf %82, %86 : vector<32x128xf32>
    %88 = arith.truncf %78 : vector<32x512xf32> to vector<32x512xbf16>
    %c2_53 = arith.constant 2 : index
    %c0_54 = arith.constant 0 : index
    %c0_55 = arith.constant 0 : index
    %89 = vector.load %arg7[%c2_53, %c0_54, %c0_55] : memref<3x512x128xbf16, #tpu.memory_space<vmem>>, vector<1x512x128xbf16>
    %90 = vector.shape_cast %89 : vector<1x512x128xbf16> to vector<512x128xbf16>
    %cst_56 = arith.constant dense<0.000000e+00> : vector<32x128xf32>
    %91 = tpu.matmul %88, %90, %cst_56 {dimension_numbers = #tpu.dot_dimension_numbers<[1], [0], [0], [1], [0, 0, 1, 1], [], []>} : vector<32x512xbf16>, vector<512x128xbf16>, vector<32x128xf32> -> vector<32x128xf32>
    %92 = arith.addf %87, %91 : vector<32x128xf32>
    %93 = vector.broadcast %68 : vector<1x128xf32> to vector<32x128xf32>
    %94 = arith.addf %92, %93 : vector<32x128xf32>
    %cst_57 = arith.constant 0.000000e+00 : f32
    %95 = vector.broadcast %cst_57 : f32 to vector<32x128xf32>
    %96 = arith.maximumf %94, %95 : vector<32x128xf32>
    %c0_58 = arith.constant 0 : index
    %c0_59 = arith.constant 0 : index
    %97 = vector.load %arg10[%c0_58, %c0_59] : memref<1x128xf32, #tpu.memory_space<vmem>>, vector<1x128xf32>
    %c1_i32_60 = arith.constant 1 : i32
    %98 = tpu.dynamic_rotate %96 by %c1_i32_60 dim 0 : vector<32x128xf32>, i32 -> vector<32x128xf32>
    %cst_61 = arith.constant 0.000000e+00 : f32
    %99 = vector.shape_cast %2 : vector<32x1xi1> to vector<32x1xi1>
    %100 = vector.broadcast %99 : vector<32x1xi1> to vector<32x128xi1>
    %101 = vector.broadcast %cst_61 : f32 to vector<32x128xf32>
    %102 = arith.select %100, %98, %101 : vector<32x128xi1>, vector<32x128xf32>
    %c31_i32_62 = arith.constant 31 : i32
    %103 = tpu.dynamic_rotate %96 by %c31_i32_62 dim 0 : vector<32x128xf32>, i32 -> vector<32x128xf32>
    %cst_63 = arith.constant 0.000000e+00 : f32
    %104 = vector.shape_cast %4 : vector<32x1xi1> to vector<32x1xi1>
    %105 = vector.broadcast %104 : vector<32x1xi1> to vector<32x128xi1>
    %106 = vector.broadcast %cst_63 : f32 to vector<32x128xf32>
    %107 = arith.select %105, %103, %106 : vector<32x128xi1>, vector<32x128xf32>
    %108 = arith.truncf %102 : vector<32x128xf32> to vector<32x128xbf16>
    %c0_64 = arith.constant 0 : index
    %c0_65 = arith.constant 0 : index
    %c0_66 = arith.constant 0 : index
    %109 = vector.load %arg9[%c0_64, %c0_65, %c0_66] : memref<3x128x128xbf16, #tpu.memory_space<vmem>>, vector<1x128x128xbf16>
    %110 = vector.shape_cast %109 : vector<1x128x128xbf16> to vector<128x128xbf16>
    %cst_67 = arith.constant dense<0.000000e+00> : vector<32x128xf32>
    %111 = tpu.matmul %108, %110, %cst_67 {dimension_numbers = #tpu.dot_dimension_numbers<[1], [0], [0], [1], [0, 0, 1, 1], [], []>} : vector<32x128xbf16>, vector<128x128xbf16>, vector<32x128xf32> -> vector<32x128xf32>
    %112 = arith.truncf %96 : vector<32x128xf32> to vector<32x128xbf16>
    %c1_68 = arith.constant 1 : index
    %c0_69 = arith.constant 0 : index
    %c0_70 = arith.constant 0 : index
    %113 = vector.load %arg9[%c1_68, %c0_69, %c0_70] : memref<3x128x128xbf16, #tpu.memory_space<vmem>>, vector<1x128x128xbf16>
    %114 = vector.shape_cast %113 : vector<1x128x128xbf16> to vector<128x128xbf16>
    %cst_71 = arith.constant dense<0.000000e+00> : vector<32x128xf32>
    %115 = tpu.matmul %112, %114, %cst_71 {dimension_numbers = #tpu.dot_dimension_numbers<[1], [0], [0], [1], [0, 0, 1, 1], [], []>} : vector<32x128xbf16>, vector<128x128xbf16>, vector<32x128xf32> -> vector<32x128xf32>
    %116 = arith.addf %111, %115 : vector<32x128xf32>
    %117 = arith.truncf %107 : vector<32x128xf32> to vector<32x128xbf16>
    %c2_72 = arith.constant 2 : index
    %c0_73 = arith.constant 0 : index
    %c0_74 = arith.constant 0 : index
    %118 = vector.load %arg9[%c2_72, %c0_73, %c0_74] : memref<3x128x128xbf16, #tpu.memory_space<vmem>>, vector<1x128x128xbf16>
    %119 = vector.shape_cast %118 : vector<1x128x128xbf16> to vector<128x128xbf16>
    %cst_75 = arith.constant dense<0.000000e+00> : vector<32x128xf32>
    %120 = tpu.matmul %117, %119, %cst_75 {dimension_numbers = #tpu.dot_dimension_numbers<[1], [0], [0], [1], [0, 0, 1, 1], [], []>} : vector<32x128xbf16>, vector<128x128xbf16>, vector<32x128xf32> -> vector<32x128xf32>
    %121 = arith.addf %116, %120 : vector<32x128xf32>
    %122 = vector.broadcast %97 : vector<1x128xf32> to vector<32x128xf32>
    %123 = arith.addf %121, %122 : vector<32x128xf32>
    %c0_76 = arith.constant 0 : index
    %c0_77 = arith.constant 0 : index
    %c0_78 = arith.constant 0 : index
    %124 = vector.load %arg11[%c0_76, %c0_77, %c0_78] : memref<1x32x128xf32, #tpu.memory_space<vmem>>, vector<1x32x128xf32>
    %125 = vector.shape_cast %124 : vector<1x32x128xf32> to vector<32x128xf32>
    %126 = vector.shape_cast %123 : vector<32x128xf32> to vector<1x32x128xf32>
    tpu.vector_store %arg11[%c0_76, %c0_77, %c0_78], %126 {strides = array<i32>} : memref<1x32x128xf32, #tpu.memory_space<vmem>>, vector<1x32x128xf32>,
    return
  }
  func.func @transform_0(%arg0: i32) -> (i32, i32, i32) {
    %c0_i32 = arith.constant 0 : i32
    %c0_i32_0 = arith.constant 0 : i32
    %c0_i32_1 = arith.constant 0 : i32
    return %arg0, %c0_i32, %c0_i32_0 : i32, i32, i32
  }
  func.func @transform_1(%arg0: i32) -> (i32, i32) {
    %c0_i32 = arith.constant 0 : i32
    %c0_i32_0 = arith.constant 0 : i32
    %c0_i32_1 = arith.constant 0 : i32
    return %c0_i32, %c0_i32_0 : i32, i32
  }
  func.func @transform_2(%arg0: i32) -> (i32, i32, i32) {
    %c0_i32 = arith.constant 0 : i32
    %c0_i32_0 = arith.constant 0 : i32
    %c0_i32_1 = arith.constant 0 : i32
    %c0_i32_2 = arith.constant 0 : i32
    return %c0_i32, %c0_i32_0, %c0_i32_1 : i32, i32, i32
  }
  func.func @transform_3(%arg0: i32) -> (i32, i32) {
    %c0_i32 = arith.constant 0 : i32
    %c0_i32_0 = arith.constant 0 : i32
    %c0_i32_1 = arith.constant 0 : i32
    return %c0_i32, %c0_i32_0 : i32, i32
  }
  func.func @transform_4(%arg0: i32) -> (i32, i32, i32) {
    %c0_i32 = arith.constant 0 : i32
    %c0_i32_0 = arith.constant 0 : i32
    %c0_i32_1 = arith.constant 0 : i32
    %c0_i32_2 = arith.constant 0 : i32
    return %c0_i32, %c0_i32_0, %c0_i32_1 : i32, i32, i32
  }
  func.func @transform_5(%arg0: i32) -> (i32, i32) {
    %c0_i32 = arith.constant 0 : i32
    %c0_i32_0 = arith.constant 0 : i32
    %c0_i32_1 = arith.constant 0 : i32
    return %c0_i32, %c0_i32_0 : i32, i32
  }
  func.func @transform_6(%arg0: i32) -> (i32, i32, i32) {
    %c0_i32 = arith.constant 0 : i32
    %c0_i32_0 = arith.constant 0 : i32
    %c0_i32_1 = arith.constant 0 : i32
    %c0_i32_2 = arith.constant 0 : i32
    return %c0_i32, %c0_i32_0, %c0_i32_1 : i32, i32, i32
  }
  func.func @transform_7(%arg0: i32) -> (i32, i32) {
    %c0_i32 = arith.constant 0 : i32
    %c0_i32_0 = arith.constant 0 : i32
    %c0_i32_1 = arith.constant 0 : i32
    return %c0_i32, %c0_i32_0 : i32, i32
  }
  func.func @transform_8(%arg0: i32) -> (i32, i32, i32) {
    %c0_i32 = arith.constant 0 : i32
    %c0_i32_0 = arith.constant 0 : i32
    %c0_i32_1 = arith.constant 0 : i32
    %c0_i32_2 = arith.constant 0 : i32
    return %c0_i32, %c0_i32_0, %c0_i32_1 : i32, i32, i32
  }
  func.func @transform_9(%arg0: i32) -> (i32, i32) {
    %c0_i32 = arith.constant 0 : i32
    %c0_i32_0 = arith.constant 0 : i32
    %c0_i32_1 = arith.constant 0 : i32
    return %c0_i32, %c0_i32_0 : i32, i32
  }
  func.func @transform_10(%arg0: i32) -> (i32, i32, i32) {
    %c0_i32 = arith.constant 0 : i32
    %c0_i32_0 = arith.constant 0 : i32
    %c0_i32_1 = arith.constant 0 : i32
    return %arg0, %c0_i32, %c0_i32_0 : i32, i32, i32
  }
}

</mosaic_0001>

<llo_original>
// kernel: _lambda_.1
$region0: #{_lambda_.1}
  #allocation0 [shape = 'u32[]', space=smem, size = 0x4, offset = 0x4, fixed_abs, tag = 'smem constant byte address 0x4 - core index']
  #allocation1 [shape = 'u32[144,128]{1,0:T(1,128)}', space=vmem, size = 0x12000, scoped, tag = 'internal scratch']
  %s0 = inlined_call_operand.vmem [shape: f32[2,16,128], index: 0, kind: input, shape index: {}]
  %s1 = inlined_call_operand.vmem [shape: bf16[32,16], index: 1, kind: input, shape index: {}]
  %s2 = inlined_call_operand.hbm [shape: bf16[3,128,128], index: 2, kind: input, shape index: {}]
  %s3 = inlined_call_operand.vmem [shape: f32[1,128], index: 3, kind: input, shape index: {}]
  %s4 = inlined_call_operand.hbm [shape: bf16[3,128,512], index: 4, kind: input, shape index: {}]
  %s5 = inlined_call_operand.vmem [shape: f32[1,512], index: 5, kind: input, shape index: {}]
  %s6 = inlined_call_operand.vmem [shape: bf16[3,512,128], index: 6, kind: input, shape index: {}]
  %s7 = inlined_call_operand.vmem [shape: f32[1,128], index: 7, kind: input, shape index: {}]
  %s8 = inlined_call_operand.hbm [shape: bf16[3,128,128], index: 8, kind: input, shape index: {}]
  %s9 = inlined_call_operand.vmem [shape: f32[1,128], index: 9, kind: input, shape index: {}]
  %s10 = inlined_call_operand.vmem [shape: f32[2,32,128], index: 10, kind: output, shape index: {}]
  %s11 = sld [smem:[#allocation0]]
  $region85: #{_lambda_.1} parent=0
    _
  %s13 = ssub.s32 1, %s11
  %s14 = scalar_select 0, %s13, %s11
  $region1: #{_lambda_.1} parent=0
    #allocation2 [shape = 'u8[98304]{0}', space=vmem, size = 0x18000, scoped, tag = 'input window, operand 2, single buffered']
    #allocation3 [shape = 's32[2]{0}', space=sflag, size = 0x8, scoped, tag = 'scoped memory for _lambda_.1']
    #allocation4 [shape = 'u8[393216]{0}', space=vmem, size = 0x60000, scoped, tag = 'input window, operand 4, single buffered']
    #allocation5 [shape = 's32[1]{0}', space=sflag, size = 0x4, scoped, tag = 'scoped memory for _lambda_.1']
    #allocation6 [shape = 'u8[98304]{0}', space=vmem, size = 0x18000, scoped, tag = 'input window, operand 8, single buffered']
    %15 = vsyncpa [#allocation3], 0
    %16 = vsyncpa [#allocation5], 0
    loop: start=0, step=1, limit=4
    $region2: #{_lambda_.1} parent=1 // loop_pre_header
      _
    $region3: #{_lambda_.1} parent=1 // loop_header
      %s18 = sphi 0, %s22
      %p19 = scmp.ge.s32.totalorder %s18, 4
      %s28 = sphi 0, %s30
      %s31 = sphi 0, %s28
      %s32 = sphi 0, %s31
      %s48 = sphi 0, %s32
      %s52 = sphi 0, %s52
      %s54 = sphi 0, %s52
      %s55 = sphi 0, %s54
      %s69 = sphi 0, %s55
      %s73 = sphi 0, %s73
      %s75 = sphi 0, %s73
      %s76 = sphi 0, %s75
      %s90 = sphi 0, %s76
      %s94 = sphi 0, %s94
      %s96 = sphi 0, %s94
      %s97 = sphi 0, %s96
      %s111 = sphi 0, %s97
      %s115 = sphi 0, %s115
      %s117 = sphi 0, %s115
      %s118 = sphi 0, %s117
      %s132 = sphi 0, %s118
      %s136 = sphi 0, %s136
      %s138 = sphi 0, %s136
      %s139 = sphi 0, %s138
      %s153 = sphi 0, %s139
      %s157 = sphi 0, %s157
      %s159 = sphi 0, %s157
      %s160 = sphi 0, %s159
      %s174 = sphi 0, %s160
      %s178 = sphi 0, %s178
      %s180 = sphi 0, %s178
      %s181 = sphi 0, %s180
      %s195 = sphi 0, %s181
      %s199 = sphi 0, %s199
      %s201 = sphi 0, %s199
      %s202 = sphi 0, %s201
      %s216 = sphi 0, %s202
      %s220 = sphi 0, %s220
      %s222 = sphi 0, %s220
      %s223 = sphi 0, %s222
      %s237 = sphi 0, %s223
      %s243 = sphi 0, %s245
      %s246 = sphi 0, %s243
      %s247 = sphi 0, %s246
      %s263 = sphi 0, %s247
    $region4: #{_lambda_.1} parent=1 // loop_header_branch
      %21 = sbr.rel (%p19) target = $region8
    $region5: #{_lambda_.1} parent=1 // loop_body
      %s23 = ssub.s32 %s18, 1
      %s24 = ssub.s32 %s18, 2
      %s25 = sadd.s32 %s18, 1
      %s26 = ssub.s32 %s18, %s25
      %p27 = scmp.eq.s32.totalorder %s26, 0
      %s29 = sadd.s32 %s28, 1
      %s30 = scalar_select %p27, %s28, %s29
      %p33 = pneg %p27
      %p34 = scmp.eq.s32.totalorder %s18, 1
      %p35 = por %p33, %p34
      %p36 = scmp.ne.s32.totalorder %s28, %s31
      %p37 = scmp.eq.s32.totalorder %s18, 0
      %p38 = por %p36, %p37
      %p39 = scmp.ne.s32.totalorder %s28, %s31
      %p40 = scmp.eq.s32.totalorder %s23, 1
      %p41 = por %p39, %p40
      %p42 = scmp.ne.s32.totalorder %s31, %s32
      %p43 = scmp.eq.s32.totalorder %s23, 0
      %p44 = por %p42, %p43
      %p45 = scmp.ne.s32.totalorder %s31, %s32
      %p46 = scmp.eq.s32.totalorder %s24, 1
      %p47 = por %p45, %p46
      %p49 = scmp.ne.s32.totalorder %s32, %s48
      %p50 = scmp.eq.s32.totalorder %s24, 0
      %p51 = por %p49, %p50
      %s53 = sadd.s32 %s52, 1
      %p56 = scmp.eq.s32.totalorder %s18, 1
      %p57 = scmp.ne.s32.totalorder %s52, %s54
      %p58 = scmp.eq.s32.totalorder %s18, 0
      %p59 = por %p57, %p58
      %p60 = scmp.ne.s32.totalorder %s52, %s54
      %p61 = scmp.eq.s32.totalorder %s23, 1
      %p62 = por %p60, %p61
      %p63 = scmp.ne.s32.totalorder %s54, %s55
      %p64 = scmp.eq.s32.totalorder %s23, 0
      %p65 = por %p63, %p64
      %p66 = scmp.ne.s32.totalorder %s54, %s55
      %p67 = scmp.eq.s32.totalorder %s24, 1
      %p68 = por %p66, %p67
      %p70 = scmp.ne.s32.totalorder %s55, %s69
      %p71 = scmp.eq.s32.totalorder %s24, 0
      %p72 = por %p70, %p71
      %s74 = sadd.s32 %s73, 1
      %p77 = scmp.eq.s32.totalorder %s18, 1
      %p78 = scmp.ne.s32.totalorder %s73, %s75
      %p79 = scmp.eq.s32.totalorder %s18, 0
      %p80 = por %p78, %p79
      %p81 = scmp.ne.s32.totalorder %s73, %s75
      %p82 = scmp.eq.s32.totalorder %s23, 1
      %p83 = por %p81, %p82
      %p84 = scmp.ne.s32.totalorder %s75, %s76
      %p85 = scmp.eq.s32.totalorder %s23, 0
      %p86 = por %p84, %p85
      %p87 = scmp.ne.s32.totalorder %s75, %s76
      %p88 = scmp.eq.s32.totalorder %s24, 1
      %p89 = por %p87, %p88
      %p91 = scmp.ne.s32.totalorder %s76, %s90
      %p92 = scmp.eq.s32.totalorder %s24, 0
      %p93 = por %p91, %p92
      %s95 = sadd.s32 %s94, 1
      %p98 = scmp.eq.s32.totalorder %s18, 1
      %p99 = scmp.ne.s32.totalorder %s94, %s96
      %p100 = scmp.eq.s32.totalorder %s18, 0
      %p101 = por %p99, %p100
      %p102 = scmp.ne.s32.totalorder %s94, %s96
      %p103 = scmp.eq.s32.totalorder %s23, 1
      %p104 = por %p102, %p103
      %p105 = scmp.ne.s32.totalorder %s96, %s97
      %p106 = scmp.eq.s32.totalorder %s23, 0
      %p107 = por %p105, %p106
      %p108 = scmp.ne.s32.totalorder %s96, %s97
      %p109 = scmp.eq.s32.totalorder %s24, 1
      %p110 = por %p108, %p109
      %p112 = scmp.ne.s32.totalorder %s97, %s111
      %p113 = scmp.eq.s32.totalorder %s24, 0
      %p114 = por %p112, %p113
      %s116 = sadd.s32 %s115, 1
      %p119 = scmp.eq.s32.totalorder %s18, 1
      %p120 = scmp.ne.s32.totalorder %s115, %s117
      %p121 = scmp.eq.s32.totalorder %s18, 0
      %p122 = por %p120, %p121
      %p123 = scmp.ne.s32.totalorder %s115, %s117
      %p124 = scmp.eq.s32.totalorder %s23, 1
      %p125 = por %p123, %p124
      %p126 = scmp.ne.s32.totalorder %s117, %s118
      %p127 = scmp.eq.s32.totalorder %s23, 0
      %p128 = por %p126, %p127
      %p129 = scmp.ne.s32.totalorder %s117, %s118
      %p130 = scmp.eq.s32.totalorder %s24, 1
      %p131 = por %p129, %p130
      %p133 = scmp.ne.s32.totalorder %s118, %s132
      %p134 = scmp.eq.s32.totalorder %s24, 0
      %p135 = por %p133, %p134
      %s137 = sadd.s32 %s136, 1
      %p140 = scmp.eq.s32.totalorder %s18, 1
      %p141 = scmp.ne.s32.totalorder %s136, %s138
      %p142 = scmp.eq.s32.totalorder %s18, 0
      %p143 = por %p141, %p142
      %p144 = scmp.ne.s32.totalorder %s136, %s138
      %p145 = scmp.eq.s32.totalorder %s23, 1
      %p146 = por %p144, %p145
      %p147 = scmp.ne.s32.totalorder %s138, %s139
      %p148 = scmp.eq.s32.totalorder %s23, 0
      %p149 = por %p147, %p148
      %p150 = scmp.ne.s32.totalorder %s138, %s139
      %p151 = scmp.eq.s32.totalorder %s24, 1
      %p152 = por %p150, %p151
      %p154 = scmp.ne.s32.totalorder %s139, %s153
      %p155 = scmp.eq.s32.totalorder %s24, 0
      %p156 = por %p154, %p155
      %s158 = sadd.s32 %s157, 1
      %p161 = scmp.eq.s32.totalorder %s18, 1
      %p162 = scmp.ne.s32.totalorder %s157, %s159
      %p163 = scmp.eq.s32.totalorder %s18, 0
      %p164 = por %p162, %p163
      %p165 = scmp.ne.s32.totalorder %s157, %s159
      %p166 = scmp.eq.s32.totalorder %s23, 1
      %p167 = por %p165, %p166
      %p168 = scmp.ne.s32.totalorder %s159, %s160
      %p169 = scmp.eq.s32.totalorder %s23, 0
      %p170 = por %p168, %p169
      %p171 = scmp.ne.s32.totalorder %s159, %s160
      %p172 = scmp.eq.s32.totalorder %s24, 1
      %p173 = por %p171, %p172
      %p175 = scmp.ne.s32.totalorder %s160, %s174
      %p176 = scmp.eq.s32.totalorder %s24, 0
      %p177 = por %p175, %p176
      %s179 = sadd.s32 %s178, 1
      %p182 = scmp.eq.s32.totalorder %s18, 1
      %p183 = scmp.ne.s32.totalorder %s178, %s180
      %p184 = scmp.eq.s32.totalorder %s18, 0
      %p185 = por %p183, %p184
      %p186 = scmp.ne.s32.totalorder %s178, %s180
      %p187 = scmp.eq.s32.totalorder %s23, 1
      %p188 = por %p186, %p187
      %p189 = scmp.ne.s32.totalorder %s180, %s181
      %p190 = scmp.eq.s32.totalorder %s23, 0
      %p191 = por %p189, %p190
      %p192 = scmp.ne.s32.totalorder %s180, %s181
      %p193 = scmp.eq.s32.totalorder %s24, 1
      %p194 = por %p192, %p193
      %p196 = scmp.ne.s32.totalorder %s181, %s195
      %p197 = scmp.eq.s32.totalorder %s24, 0
      %p198 = por %p196, %p197
      %s200 = sadd.s32 %s199, 1
      %p203 = scmp.eq.s32.totalorder %s18, 1
      %p204 = scmp.ne.s32.totalorder %s199, %s201
      %p205 = scmp.eq.s32.totalorder %s18, 0
      %p206 = por %p204, %p205
      %p207 = scmp.ne.s32.totalorder %s199, %s201
      %p208 = scmp.eq.s32.totalorder %s23, 1
      %p209 = por %p207, %p208
      %p210 = scmp.ne.s32.totalorder %s201, %s202
      %p211 = scmp.eq.s32.totalorder %s23, 0
      %p212 = por %p210, %p211
      %p213 = scmp.ne.s32.totalorder %s201, %s202
      %p214 = scmp.eq.s32.totalorder %s24, 1
      %p215 = por %p213, %p214
      %p217 = scmp.ne.s32.totalorder %s202, %s216
      %p218 = scmp.eq.s32.totalorder %s24, 0
      %p219 = por %p217, %p218
      %s221 = sadd.s32 %s220, 1
      %p224 = scmp.eq.s32.totalorder %s18, 1
      %p225 = scmp.ne.s32.totalorder %s220, %s222
      %p226 = scmp.eq.s32.totalorder %s18, 0
      %p227 = por %p225, %p226
      %p228 = scmp.ne.s32.totalorder %s220, %s222
      %p229 = scmp.eq.s32.totalorder %s23, 1
      %p230 = por %p228, %p229
      %p231 = scmp.ne.s32.totalorder %s222, %s223
      %p232 = scmp.eq.s32.totalorder %s23, 0
      %p233 = por %p231, %p232
      %p234 = scmp.ne.s32.totalorder %s222, %s223
      %p235 = scmp.eq.s32.totalorder %s24, 1
      %p236 = por %p234, %p235
      %p238 = scmp.ne.s32.totalorder %s223, %s237
      %p239 = scmp.eq.s32.totalorder %s24, 0
      %p240 = por %p238, %p239
      %s241 = ssub.s32 %s18, %s25
      %p242 = scmp.eq.s32.totalorder %s241, 0
      %s244 = sadd.s32 %s243, 1
      %s245 = scalar_select %p242, %s243, %s244
      %p248 = pneg %p242
      %p249 = scmp.eq.s32.totalorder %s18, 1
      %p250 = por %p248, %p249
      %p251 = scmp.ne.s32.totalorder %s243, %s246
      %p252 = scmp.eq.s32.totalorder %s18, 0
      %p253 = por %p251, %p252
      %p254 = scmp.ne.s32.totalorder %s243, %s246
      %p255 = scmp.eq.s32.totalorder %s23, 1
      %p256 = por %p254, %p255
      %p257 = scmp.ne.s32.totalorder %s246, %s247
      %p258 = scmp.eq.s32.totalorder %s23, 0
      %p259 = por %p257, %p258
      %p260 = scmp.ne.s32.totalorder %s246, %s247
      %p261 = scmp.eq.s32.totalorder %s24, 1
      %p262 = por %p260, %p261
      %p264 = scmp.ne.s32.totalorder %s247, %s263
      %p265 = scmp.eq.s32.totalorder %s24, 0
      %p266 = por %p264, %p265
      %p267 = scmp.le.s32.totalorder 1, %s18
      %p268 = scmp.lt.s32.totalorder %s18, 3
      %p269 = pnand %p267, %p268
      %p270 = pneg %p269
      // Predicated region
      $region9: #{_lambda_.1} parent=5 // pred_check
        _
      $region10: #{_lambda_.1} parent=5 // pred_check_branch
        %272 = sbr.rel (%p269) target = $region12
      $region11: #{_lambda_.1} parent=5 // pred_region
        %s273 = ssub.s32 %s18, 1
        // Predicated region
        $region13: #{_lambda_.1} parent=11 // pred_check
          %p274 = pneg %p65
        $region14: #{_lambda_.1} parent=11 // pred_check_branch
          %276 = sbr.rel (%p274) target = $region16
        $region15: #{_lambda_.1} parent=11 // pred_region
          _
        $region16: #{_lambda_.1} parent=11 // pred_fallthru
          _
        // Predicated region
        $region17: #{_lambda_.1} parent=11 // pred_check
          %p277 = pneg %p86
        $region18: #{_lambda_.1} parent=11 // pred_check_branch
          %279 = sbr.rel (%p277) target = $region20
        $region19: #{_lambda_.1} parent=11 // pred_region
          %s281 = ssub.s32 3072, 3072
          %282 = vsyncadd [#allocation3], %s281
          %s283 = sshll.u32 [#allocation2], 4
          %s284 = int_to_ptr.vmem [resolvable:$true] %s283
          %289 = dma.hbm_to_vmem [thread:$0]  %s2, 3072, %s284, [#allocation3], 64, 64, 4
        $region20: #{_lambda_.1} parent=11 // pred_fallthru
          _
        // Predicated region
        $region21: #{_lambda_.1} parent=11 // pred_check
          %p290 = pneg %p107
        $region22: #{_lambda_.1} parent=11 // pred_check_branch
          %292 = sbr.rel (%p290) target = $region24
        $region23: #{_lambda_.1} parent=11 // pred_region
          _
        $region24: #{_lambda_.1} parent=11 // pred_fallthru
          _
        // Predicated region
        $region25: #{_lambda_.1} parent=11 // pred_check
          %p293 = pneg %p128
        $region26: #{_lambda_.1} parent=11 // pred_check_branch
          %295 = sbr.rel (%p293) target = $region28
        $region27: #{_lambda_.1} parent=11 // pred_region
          %s297 = ssub.s32 12288, 12288
          %298 = vsyncadd [#allocation5], %s297
          %s299 = sshll.u32 [#allocation4], 4
          %s300 = int_to_ptr.vmem [resolvable:$true] %s299
          %305 = dma.hbm_to_vmem [thread:$0]  %s4, 12288, %s300, [#allocation5], 256, 256, 16
        $region28: #{_lambda_.1} parent=11 // pred_fallthru
          _
        // Predicated region
        $region29: #{_lambda_.1} parent=11 // pred_check
          %p306 = pneg %p149
        $region30: #{_lambda_.1} parent=11 // pred_check_branch
          %308 = sbr.rel (%p306) target = $region32
        $region31: #{_lambda_.1} parent=11 // pred_region
          _
        $region32: #{_lambda_.1} parent=11 // pred_fallthru
          _
        // Predicated region
        $region33: #{_lambda_.1} parent=11 // pred_check
          %p309 = pneg %p170
        $region34: #{_lambda_.1} parent=11 // pred_check_branch
          %311 = sbr.rel (%p309) target = $region36
        $region35: #{_lambda_.1} parent=11 // pred_region
          _
        $region36: #{_lambda_.1} parent=11 // pred_fallthru
          _
        // Predicated region
        $region37: #{_lambda_.1} parent=11 // pred_check
          %p312 = pneg %p191
        $region38: #{_lambda_.1} parent=11 // pred_check_branch
          %314 = sbr.rel (%p312) target = $region40
        $region39: #{_lambda_.1} parent=11 // pred_region
          _
        $region40: #{_lambda_.1} parent=11 // pred_fallthru
          _
        // Predicated region
        $region41: #{_lambda_.1} parent=11 // pred_check
          %p315 = pneg %p212
        $region42: #{_lambda_.1} parent=11 // pred_check_branch
          %317 = sbr.rel (%p315) target = $region44
        $region43: #{_lambda_.1} parent=11 // pred_region
          %s319 = ssub.s32 3072, 3072
          %320 = vsyncadd [#allocation5], %s319
          %s321 = sshll.u32 [#allocation6], 4
          %s322 = int_to_ptr.vmem [resolvable:$true] %s321
          %327 = dma.hbm_to_vmem [thread:$0]  %s8, 3072, %s322, [#allocation5], 64, 64, 4
        $region44: #{_lambda_.1} parent=11 // pred_fallthru
          _
        // Predicated region
        $region45: #{_lambda_.1} parent=11 // pred_check
          %p328 = pneg %p233
        $region46: #{_lambda_.1} parent=11 // pred_check_branch
          %330 = sbr.rel (%p328) target = $region48
        $region47: #{_lambda_.1} parent=11 // pred_region
          _
        $region48: #{_lambda_.1} parent=11 // pred_fallthru
          _
      $region12: #{_lambda_.1} parent=5 // pred_fallthru
        _
      %p331 = scmp.lt.s32.totalorder %s18, 2
      // Predicated region
      $region49: #{_lambda_.1} parent=5 // pred_check
        %p332 = pneg %p331
      $region50: #{_lambda_.1} parent=5 // pred_check_branch
        %334 = sbr.rel (%p332) target = $region52
      $region51: #{_lambda_.1} parent=5 // pred_region
        // Predicated region
        $region53: #{_lambda_.1} parent=51 // pred_check
          %p335 = pneg %p38
        $region54: #{_lambda_.1} parent=51 // pred_check_branch
          %337 = sbr.rel (%p335) target = $region56
        $region55: #{_lambda_.1} parent=51 // pred_region
          %p338 = scmp.lt.s32.totalorder %s18, 1
          %s339 = scalar_select %p338, %s18, 1
          %s340 = smul.addr %s339, 2
          %s341 = smul.addr %s340, 8
          %s342 = scalar_lea.vmem %s0, %s341
        $region56: #{_lambda_.1} parent=51 // pred_fallthru
          _
      $region52: #{_lambda_.1} parent=5 // pred_fallthru
        _
      %p343 = scmp.le.s32.totalorder 1, %s18
      %p344 = scmp.lt.s32.totalorder %s18, 3
      %p345 = pnand %p343, %p344
      %p346 = pneg %p345
      // Predicated region
      $region57: #{_lambda_.1} parent=5 // pred_check
        _
      $region58: #{_lambda_.1} parent=5 // pred_check_branch
        %348 = sbr.rel (%p345) target = $region60
      $region59: #{_lambda_.1} parent=5 // pred_region
        %s349 = ssub.s32 %s18, 1
        // Predicated region
        $region61: #{_lambda_.1} parent=59 // pred_check
          %p350 = pneg %p86
        $region62: #{_lambda_.1} parent=59 // pred_check_branch
          %352 = sbr.rel (%p350) target = $region64
        $region63: #{_lambda_.1} parent=59 // pred_region
          %353 = dma.done [#allocation3], 3072
        $region64: #{_lambda_.1} parent=59 // pred_fallthru
          _
        // Predicated region
        $region65: #{_lambda_.1} parent=59 // pred_check
          %p354 = pneg %p128
        $region66: #{_lambda_.1} parent=59 // pred_check_branch
          %356 = sbr.rel (%p354) target = $region68
        $region67: #{_lambda_.1} parent=59 // pred_region
          %357 = dma.done [#allocation5], 12288
        $region68: #{_lambda_.1} parent=59 // pred_fallthru
          _
        // Predicated region
        $region69: #{_lambda_.1} parent=59 // pred_check
          %p358 = pneg %p212
        $region70: #{_lambda_.1} parent=59 // pred_check_branch
          %360 = sbr.rel (%p358) target = $region72
        $region71: #{_lambda_.1} parent=59 // pred_region
          %361 = dma.done [#allocation5], 3072
        $region72: #{_lambda_.1} parent=59 // pred_fallthru
          _
        %p362 = scmp.lt.s32.totalorder %s23, 1
        %s363 = scalar_select %p362, %s23, 1
        %s364 = smul.addr %s363, 2
        %s365 = smul.addr %s364, 8
        %s366 = scalar_lea.vmem %s0, %s365
        %p367 = pneg %p44
        %p368 = pneg %p41
        %p369 = pneg %p65
        %p370 = pneg %p62
        %p371 = pneg %p86
        %p372 = pneg %p83
        %p373 = pneg %p107
        %p374 = pneg %p104
        %p375 = pneg %p128
        %p376 = pneg %p125
        %p377 = pneg %p149
        %p378 = pneg %p146
        %p379 = pneg %p170
        %p380 = pneg %p167
        %p381 = pneg %p191
        %p382 = pneg %p188
        %p383 = pneg %p212
        %p384 = pneg %p209
        %p385 = pneg %p233
        %p386 = pneg %p230
        %p387 = pneg %p259
        %p388 = pneg %p256
        %p389 = scmp.lt.s32.totalorder %s23, 1
        %s390 = scalar_select %p389, %s23, 1
        %s391 = smul.addr %s390, 4
        %s392 = smul.addr %s391, 8
        %s393 = scalar_lea.vmem %s10, %s392
        %p394 = scmp.lt.s32.totalorder %s23, 1
        %s395 = scalar_select %p394, %s23, 1
        %s396 = smul.addr %s395, 2
        %s397 = smul.addr %s396, 8
        %s398 = scalar_lea.vmem %s0, %s397
        %p399 = scmp.lt.s32.totalorder %s23, 1
        %s400 = scalar_select %p399, %s23, 1
        %s401 = smul.addr %s400, 4
        %s402 = smul.addr %s401, 8
        %s403 = scalar_lea.vmem %s10, %s402
        %v405 = vlaneseq
        %v406 = vshrl.u32 %v405, 7
        %v407 = vadd.s32 %v406, 8
        %v408 = vadd.s32 %v406, 16
        %v409 = vadd.s32 %v406, 24
        %vm410 = vcmp.gt.s32.totalorder %v406, 0
        %vm411 = vcmp.gt.s32.totalorder %v407, 0
        %vm412 = vcmp.gt.s32.totalorder %v408, 0
        %vm413 = vcmp.gt.s32.totalorder %v409, 0
        %vm414 = vcmp.lt.s32.totalorder %v406, 31
        %vm415 = vcmp.lt.s32.totalorder %v407, 31
        %vm416 = vcmp.lt.s32.totalorder %v408, 31
        %vm417 = vcmp.lt.s32.totalorder %v409, 31
        %v418 = vld [vmem:[%s398] sm:$0xff]
        %v419 = vld [vmem:[%s398 + $0x8] sm:$0xff]
        %v420 = vpack.c.bf16 %v419, %v418
        %v421 = vld [vmem:[%s1] sm:$0xf]
        %v422 = vld [vmem:[%s1 + $0x4] sm:$0xf]
        %v423 = vld [vmem:[%s1 + $0x8] sm:$0xf]
        %v424 = vld [vmem:[%s1 + $0xc] sm:$0xf]
        %v429 = vunpack.c.l.b16 %v421
        %v430 = vunpack.c.l.b16 %v422
        %v431 = vunpack.c.l.b16 %v423
        %v432 = vunpack.c.l.b16 %v424
        %v433 = vpack.c.b16 %v430, %v429
        %v434 = vpack.c.b16 %v432, %v431
        %vm435 = vcmask 130048
        %v437 = vsel %vm435, %v433, 0
        %v440 = vsel %vm435, %v434, 0
        %442 = vmatprep.subr.bf16.mxu0 0
        %443 = vmatpush1.bf16.msra.mxu0 0
        %444 = vmatprep.subr.bf16.mxu0 0
        %445 = vmatpush1.bf16.msra.mxu0 0
        %446 = vmatprep.subr.bf16.mxu0 0
        %447 = vmatpush1.bf16.msra.mxu0 0
        %448 = vmatprep.subr.bf16.mxu0 0
        %449 = vmatpush1.bf16.msra.mxu0 0
        %450 = vmatprep.subr.bf16.mxu0 0
        %451 = vmatpush1.bf16.msra.mxu0 0
        %452 = vmatprep.subr.bf16.mxu0 0
        %453 = vmatpush1.bf16.msra.mxu0 0
        %454 = vmatprep.subr.bf16.mxu0 0
        %455 = vmatpush1.bf16.msra.mxu0 0
        %456 = vmatprep.subr.bf16.mxu0 0
        %457 = vmatpush1.bf16.msra.mxu0 %v420
        %458 = vmatprep.subr.bf16.mxu0 0
        %459 = vmatpush2.bf16.msra.mxu0 0
        %460 = vmatprep.subr.bf16.mxu0 0
        %461 = vmatpush2.bf16.msra.mxu0 0
        %462 = vmatprep.subr.bf16.mxu0 0
        %463 = vmatpush2.bf16.msra.mxu0 0
        %464 = vmatprep.subr.bf16.mxu0 0
        %465 = vmatpush2.bf16.msra.mxu0 0
        %466 = vmatprep.subr.bf16.mxu0 0
        %467 = vmatpush2.bf16.msra.mxu0 0
        %468 = vmatprep.subr.bf16.mxu0 0
        %469 = vmatpush2.bf16.msra.mxu0 0
        %470 = vmatprep.subr.bf16.mxu0 0
        %471 = vmatpush2.bf16.msra.mxu0 0
        %472 = vmatprep.subr.bf16.mxu0 0
        %473 = vmatpush2.bf16.msra.mxu0 0
        %474 = vmatprep.mubr.bf16.mxu0 0
        %475 = vmatmul.mubr.bf16.gmra.mxu0 %v437
        %v476 = vpop.f32.mrf.mxu0
        %v477 = vadd.f32 0.0, %v476
        %v478 = vpop.f32.mrf.mxu0
        %v479 = vpop.f32.mrf.mxu0
        %v480 = vadd.f32 0.0, %v479
        %v481 = vpop.f32.mrf.mxu0
        %482 = vmatprep.mubr.bf16.mxu0 0
        %483 = vmatmul.mubr.bf16.gmra.mxu0 %v440
        %v484 = vpop.f32.mrf.mxu0
        %v485 = vadd.f32 0.0, %v484
        %v486 = vpop.f32.mrf.mxu0
        %v487 = vpop.f32.mrf.mxu0
        %v488 = vadd.f32 0.0, %v487
        %v489 = vpop.f32.mrf.mxu0
        %490 = vdwg.mxu0
        %v491 = vld [vmem:[%s3] sm:$0x1]
        %v492 = vrot.slane %v477, 7
        %v493 = vrot.slane %v480, 7
        %v494 = vrot.slane %v485, 7
        %v495 = vrot.slane %v488, 7
        %vm496 = vcmp.lt.s32.totalorder %v406, 1
        %v497 = vsel %vm496, %v494, %v495
        %v498 = vsel %vm496, %v493, %v494
        %v499 = vsel %vm496, %v492, %v493
        %v500 = vsel %vm496, %v495, %v492
        %v501 = vsel %vm410, 1, 0
        %v502 = vsel %vm411, 1, 0
        %v503 = vsel %vm412, 1, 0
        %v504 = vsel %vm413, 1, 0
        %vm505 = vcmp.eq.s32.totalorder %v501, 1
        %vm506 = vcmp.eq.s32.totalorder %v502, 1
        %vm507 = vcmp.eq.s32.totalorder %v503, 1
        %vm508 = vcmp.eq.s32.totalorder %v504, 1
        %v509 = vsel %vm505, %v500, 0.0
        %v510 = vsel %vm506, %v499, 0.0
        %v511 = vsel %vm507, %v498, 0.0
        %v512 = vsel %vm508, %v497, 0.0
        %v513 = vrot.slane %v477, 1
        %v514 = vrot.slane %v480, 1
        %v515 = vrot.slane %v485, 1
        %v516 = vrot.slane %v488, 1
        %vm517 = vcmp.lt.s32.totalorder %v406, 7
        %v518 = vsel %vm517, %v515, %v516
        %v519 = vsel %vm517, %v514, %v515
        %v520 = vsel %vm517, %v513, %v514
        %v521 = vsel %vm517, %v516, %v513
        %v522 = vsel %vm414, 1, 0
        %v523 = vsel %vm415, 1, 0
        %v524 = vsel %vm416, 1, 0
        %v525 = vsel %vm417, 1, 0
        %vm526 = vcmp.eq.s32.totalorder %v522, 1
        %vm527 = vcmp.eq.s32.totalorder %v523, 1
        %vm528 = vcmp.eq.s32.totalorder %v524, 1
        %vm529 = vcmp.eq.s32.totalorder %v525, 1
        %v530 = vsel %vm526, %v520, 0.0
        %v531 = vsel %vm527, %v519, 0.0
        %v532 = vsel %vm528, %v518, 0.0
        %v533 = vsel %vm529, %v521, 0.0
        %v534 = vpack.c.bf16 %v510, %v509
        %v535 = vpack.c.bf16 %v512, %v511
        %v536 = vld [vmem:[#allocation2] sm:$0xf]
        %v537 = vld [vmem:[#allocation2 + $0x4] sm:$0xf]
        %v538 = vld [vmem:[#allocation2 + $0x8] sm:$0xf]
        %v539 = vld [vmem:[#allocation2 + $0xc] sm:$0xf]
        %v540 = vld [vmem:[#allocation2 + $0x10] sm:$0xf]
        %v541 = vld [vmem:[#allocation2 + $0x14] sm:$0xf]
        %v542 = vld [vmem:[#allocation2 + $0x18] sm:$0xf]
        %v543 = vld [vmem:[#allocation2 + $0x1c] sm:$0xf]
        %v544 = vld [vmem:[#allocation2 + $0x20] sm:$0xf]
        %v545 = vld [vmem:[#allocation2 + $0x24] sm:$0xf]
        %v546 = vld [vmem:[#allocation2 + $0x28] sm:$0xf]
        %v547 = vld [vmem:[#allocation2 + $0x2c] sm:$0xf]
        %v548 = vld [vmem:[#allocation2 + $0x30] sm:$0xf]
        %v549 = vld [vmem:[#allocation2 + $0x34] sm:$0xf]
        %v550 = vld [vmem:[#allocation2 + $0x38] sm:$0xf]
        %v551 = vld [vmem:[#allocation2 + $0x3c] sm:$0xf]
        %v552 = vpack.c.bf16 %v480, %v477
        %v553 = vpack.c.bf16 %v488, %v485
        %s554 = scalar_lea.vmem [#allocation2], 64
        %v555 = vld [vmem:[%s554] sm:$0xf]
        %v556 = vld [vmem:[%s554 + $0x4] sm:$0xf]
        %v557 = vld [vmem:[%s554 + $0x8] sm:$0xf]
        %v558 = vld [vmem:[%s554 + $0xc] sm:$0xf]
        %v559 = vld [vmem:[%s554 + $0x10] sm:$0xf]
        %v560 = vld [vmem:[%s554 + $0x14] sm:$0xf]
        %v561 = vld [vmem:[%s554 + $0x18] sm:$0xf]
        %v562 = vld [vmem:[%s554 + $0x1c] sm:$0xf]
        %v563 = vld [vmem:[%s554 + $0x20] sm:$0xf]
        %v564 = vld [vmem:[%s554 + $0x24] sm:$0xf]
        %v565 = vld [vmem:[%s554 + $0x28] sm:$0xf]
        %v566 = vld [vmem:[%s554 + $0x2c] sm:$0xf]
        %v567 = vld [vmem:[%s554 + $0x30] sm:$0xf]
        %v568 = vld [vmem:[%s554 + $0x34] sm:$0xf]
        %v569 = vld [vmem:[%s554 + $0x38] sm:$0xf]
        %v570 = vld [vmem:[%s554 + $0x3c] sm:$0xf]
        %v587 = vunpack.c.l.b16 %v555
        %v588 = vunpack.c.l.b16 %v556
        %v589 = vunpack.c.l.b16 %v557
        %v590 = vunpack.c.l.b16 %v558
        %v591 = vunpack.c.l.b16 %v559
        %v592 = vunpack.c.l.b16 %v560
        %v593 = vunpack.c.l.b16 %v561
        %v594 = vunpack.c.l.b16 %v562
        %v595 = vunpack.c.l.b16 %v563
        %v596 = vunpack.c.l.b16 %v564
        %v597 = vunpack.c.l.b16 %v565
        %v598 = vunpack.c.l.b16 %v566
        %v599 = vunpack.c.l.b16 %v567
        %v600 = vunpack.c.l.b16 %v568
        %v601 = vunpack.c.l.b16 %v569
        %v602 = vunpack.c.l.b16 %v570
        %v603 = vpack.c.b16 %v588, %v587
        %v604 = vpack.c.b16 %v590, %v589
        %v605 = vpack.c.b16 %v592, %v591
        %v606 = vpack.c.b16 %v594, %v593
        %v607 = vpack.c.b16 %v596, %v595
        %v608 = vpack.c.b16 %v598, %v597
        %v609 = vpack.c.b16 %v600, %v599
        %v610 = vpack.c.b16 %v602, %v601
        %619 = vmatprep.subr.bf16.mxu0 0
        %620 = vmatpush1.bf16.msra.mxu0 %v610
        %621 = vmatprep.subr.bf16.mxu0 0
        %622 = vmatpush1.bf16.msra.mxu0 %v609
        %623 = vmatprep.subr.bf16.mxu0 0
        %624 = vmatpush1.bf16.msra.mxu0 %v608
        %625 = vmatprep.subr.bf16.mxu0 0
        %626 = vmatpush1.bf16.msra.mxu0 %v607
        %627 = vmatprep.subr.bf16.mxu0 0
        %628 = vmatpush1.bf16.msra.mxu0 %v606
        %629 = vmatprep.subr.bf16.mxu0 0
        %630 = vmatpush1.bf16.msra.mxu0 %v605
        %631 = vmatprep.subr.bf16.mxu0 0
        %632 = vmatpush1.bf16.msra.mxu0 %v604
        %633 = vmatprep.subr.bf16.mxu0 0
        %634 = vmatpush1.bf16.msra.mxu0 %v603
        %635 = vmatprep.subr.bf16.mxu0 0
        %636 = vmatpush2.bf16.msra.mxu0 0
        %637 = vmatprep.subr.bf16.mxu0 0
        %638 = vmatpush2.bf16.msra.mxu0 0
        %639 = vmatprep.subr.bf16.mxu0 0
        %640 = vmatpush2.bf16.msra.mxu0 0
        %641 = vmatprep.subr.bf16.mxu0 0
        %642 = vmatpush2.bf16.msra.mxu0 0
        %643 = vmatprep.subr.bf16.mxu0 0
        %644 = vmatpush2.bf16.msra.mxu0 0
        %645 = vmatprep.subr.bf16.mxu0 0
        %646 = vmatpush2.bf16.msra.mxu0 0
        %647 = vmatprep.subr.bf16.mxu0 0
        %648 = vmatpush2.bf16.msra.mxu0 0
        %649 = vmatprep.subr.bf16.mxu0 0
        %650 = vmatpush2.bf16.msra.mxu0 0
        %651 = vmatprep.mubr.bf16.mxu0 0
        %652 = vmatmul.mubr.bf16.gmra.mxu0 %v552
        %v653 = vpop.f32.mrf.mxu0
        %v654 = vadd.f32 0.0, %v653
        %v655 = vpop.f32.mrf.mxu0
        %v656 = vpop.f32.mrf.mxu0
        %v657 = vadd.f32 0.0, %v656
        %v658 = vpop.f32.mrf.mxu0
        %659 = vmatprep.mubr.bf16.mxu0 0
        %660 = vmatmul.mubr.bf16.gmra.mxu0 %v553
        %v661 = vpop.f32.mrf.mxu0
        %v662 = vadd.f32 0.0, %v661
        %v663 = vpop.f32.mrf.mxu0
        %v664 = vpop.f32.mrf.mxu0
        %v665 = vadd.f32 0.0, %v664
        %v666 = vpop.f32.mrf.mxu0
        %667 = vdwg.mxu0
        %v684 = vunpack.c.l.b16 %v536
        %v685 = vunpack.c.l.b16 %v537
        %v686 = vunpack.c.l.b16 %v538
        %v687 = vunpack.c.l.b16 %v539
        %v688 = vunpack.c.l.b16 %v540
        %v689 = vunpack.c.l.b16 %v541
        %v690 = vunpack.c.l.b16 %v542
        %v691 = vunpack.c.l.b16 %v543
        %v692 = vunpack.c.l.b16 %v544
        %v693 = vunpack.c.l.b16 %v545
        %v694 = vunpack.c.l.b16 %v546
        %v695 = vunpack.c.l.b16 %v547
        %v696 = vunpack.c.l.b16 %v548
        %v697 = vunpack.c.l.b16 %v549
        %v698 = vunpack.c.l.b16 %v550
        %v699 = vunpack.c.l.b16 %v551
        %v700 = vpack.c.b16 %v685, %v684
        %v701 = vpack.c.b16 %v687, %v686
        %v702 = vpack.c.b16 %v689, %v688
        %v703 = vpack.c.b16 %v691, %v690
        %v704 = vpack.c.b16 %v693, %v692
        %v705 = vpack.c.b16 %v695, %v694
        %v706 = vpack.c.b16 %v697, %v696
        %v707 = vpack.c.b16 %v699, %v698
        %716 = vmatprep.subr.bf16.mxu0 0
        %717 = vmatpush1.bf16.msra.mxu0 %v707
        %718 = vmatprep.subr.bf16.mxu0 0
        %719 = vmatpush1.bf16.msra.mxu0 %v706
        %720 = vmatprep.subr.bf16.mxu0 0
        %721 = vmatpush1.bf16.msra.mxu0 %v705
        %722 = vmatprep.subr.bf16.mxu0 0
        %723 = vmatpush1.bf16.msra.mxu0 %v704
        %724 = vmatprep.subr.bf16.mxu0 0
        %725 = vmatpush1.bf16.msra.mxu0 %v703
        %726 = vmatprep.subr.bf16.mxu0 0
        %727 = vmatpush1.bf16.msra.mxu0 %v702
        %728 = vmatprep.subr.bf16.mxu0 0
        %729 = vmatpush1.bf16.msra.mxu0 %v701
        %730 = vmatprep.subr.bf16.mxu0 0
        %731 = vmatpush1.bf16.msra.mxu0 %v700
        %732 = vmatprep.subr.bf16.mxu0 0
        %733 = vmatpush2.bf16.msra.mxu0 0
        %734 = vmatprep.subr.bf16.mxu0 0
        %735 = vmatpush2.bf16.msra.mxu0 0
        %736 = vmatprep.subr.bf16.mxu0 0
        %737 = vmatpush2.bf16.msra.mxu0 0
        %738 = vmatprep.subr.bf16.mxu0 0
        %739 = vmatpush2.bf16.msra.mxu0 0
        %740 = vmatprep.subr.bf16.mxu0 0
        %741 = vmatpush2.bf16.msra.mxu0 0
        %742 = vmatprep.subr.bf16.mxu0 0
        %743 = vmatpush2.bf16.msra.mxu0 0
        %744 = vmatprep.subr.bf16.mxu0 0
        %745 = vmatpush2.bf16.msra.mxu0 0
        %746 = vmatprep.subr.bf16.mxu0 0
        %747 = vmatpush2.bf16.msra.mxu0 0
        %748 = vmatprep.mubr.bf16.mxu0 0
        %749 = vmatmul.mubr.bf16.gmra.mxu0 %v534
        %v750 = vpop.f32.mrf.mxu0
        %v751 = vadd.f32 %v654, %v750
        %v752 = vpop.f32.mrf.mxu0
        %v753 = vpop.f32.mrf.mxu0
        %v754 = vadd.f32 %v657, %v753
        %v755 = vpop.f32.mrf.mxu0
        %756 = vmatprep.mubr.bf16.mxu0 0
        %757 = vmatmul.mubr.bf16.gmra.mxu0 %v535
        %v758 = vpop.f32.mrf.mxu0
        %v759 = vadd.f32 %v662, %v758
        %v760 = vpop.f32.mrf.mxu0
        %v761 = vpop.f32.mrf.mxu0
        %v762 = vadd.f32 %v665, %v761
        %v763 = vpop.f32.mrf.mxu0
        %764 = vdwg.mxu0
        %v765 = vpack.c.bf16 %v531, %v530
        %v766 = vpack.c.bf16 %v533, %v532
        %s767 = scalar_lea.vmem [#allocation2], 128
        %v768 = vld [vmem:[%s767] sm:$0xf]
        %v769 = vld [vmem:[%s767 + $0x4] sm:$0xf]
        %v770 = vld [vmem:[%s767 + $0x8] sm:$0xf]
        %v771 = vld [vmem:[%s767 + $0xc] sm:$0xf]
        %v772 = vld [vmem:[%s767 + $0x10] sm:$0xf]
        %v773 = vld [vmem:[%s767 + $0x14] sm:$0xf]
        %v774 = vld [vmem:[%s767 + $0x18] sm:$0xf]
        %v775 = vld [vmem:[%s767 + $0x1c] sm:$0xf]
        %v776 = vld [vmem:[%s767 + $0x20] sm:$0xf]
        %v777 = vld [vmem:[%s767 + $0x24] sm:$0xf]
        %v778 = vld [vmem:[%s767 + $0x28] sm:$0xf]
        %v779 = vld [vmem:[%s767 + $0x2c] sm:$0xf]
        %v780 = vld [vmem:[%s767 + $0x30] sm:$0xf]
        %v781 = vld [vmem:[%s767 + $0x34] sm:$0xf]
        %v782 = vld [vmem:[%s767 + $0x38] sm:$0xf]
        %v783 = vld [vmem:[%s767 + $0x3c] sm:$0xf]
        %v800 = vunpack.c.l.b16 %v768
        %v801 = vunpack.c.l.b16 %v769
        %v802 = vunpack.c.l.b16 %v770
        %v803 = vunpack.c.l.b16 %v771
        %v804 = vunpack.c.l.b16 %v772
        %v805 = vunpack.c.l.b16 %v773
        %v806 = vunpack.c.l.b16 %v774
        %v807 = vunpack.c.l.b16 %v775
        %v808 = vunpack.c.l.b16 %v776
        %v809 = vunpack.c.l.b16 %v777
        %v810 = vunpack.c.l.b16 %v778
        %v811 = vunpack.c.l.b16 %v779
        %v812 = vunpack.c.l.b16 %v780
        %v813 = vunpack.c.l.b16 %v781
        %v814 = vunpack.c.l.b16 %v782
        %v815 = vunpack.c.l.b16 %v783
        %v816 = vpack.c.b16 %v801, %v800
        %v817 = vpack.c.b16 %v803, %v802
        %v818 = vpack.c.b16 %v805, %v804
        %v819 = vpack.c.b16 %v807, %v806
        %v820 = vpack.c.b16 %v809, %v808
        %v821 = vpack.c.b16 %v811, %v810
        %v822 = vpack.c.b16 %v813, %v812
        %v823 = vpack.c.b16 %v815, %v814
        %832 = vmatprep.subr.bf16.mxu0 0
        %833 = vmatpush1.bf16.msra.mxu0 %v823
        %834 = vmatprep.subr.bf16.mxu0 0
        %835 = vmatpush1.bf16.msra.mxu0 %v822
        %836 = vmatprep.subr.bf16.mxu0 0
        %837 = vmatpush1.bf16.msra.mxu0 %v821
        %838 = vmatprep.subr.bf16.mxu0 0
        %839 = vmatpush1.bf16.msra.mxu0 %v820
        %840 = vmatprep.subr.bf16.mxu0 0
        %841 = vmatpush1.bf16.msra.mxu0 %v819
        %842 = vmatprep.subr.bf16.mxu0 0
        %843 = vmatpush1.bf16.msra.mxu0 %v818
        %844 = vmatprep.subr.bf16.mxu0 0
        %845 = vmatpush1.bf16.msra.mxu0 %v817
        %846 = vmatprep.subr.bf16.mxu0 0
        %847 = vmatpush1.bf16.msra.mxu0 %v816
        %848 = vmatprep.subr.bf16.mxu0 0
        %849 = vmatpush2.bf16.msra.mxu0 0
        %850 = vmatprep.subr.bf16.mxu0 0
        %851 = vmatpush2.bf16.msra.mxu0 0
        %852 = vmatprep.subr.bf16.mxu0 0
        %853 = vmatpush2.bf16.msra.mxu0 0
        %854 = vmatprep.subr.bf16.mxu0 0
        %855 = vmatpush2.bf16.msra.mxu0 0
        %856 = vmatprep.subr.bf16.mxu0 0
        %857 = vmatpush2.bf16.msra.mxu0 0
        %858 = vmatprep.subr.bf16.mxu0 0
        %859 = vmatpush2.bf16.msra.mxu0 0
        %860 = vmatprep.subr.bf16.mxu0 0
        %861 = vmatpush2.bf16.msra.mxu0 0
        %862 = vmatprep.subr.bf16.mxu0 0
        %863 = vmatpush2.bf16.msra.mxu0 0
        %864 = vmatprep.mubr.bf16.mxu0 0
        %865 = vmatmul.mubr.bf16.gmra.mxu0 %v765
        %v866 = vpop.f32.mrf.mxu0
        %v867 = vadd.f32 0.0, %v866
        %v868 = vpop.f32.mrf.mxu0
        %v869 = vpop.f32.mrf.mxu0
        %v870 = vadd.f32 0.0, %v869
        %v871 = vpop.f32.mrf.mxu0
        %872 = vmatprep.mubr.bf16.mxu0 0
        %873 = vmatmul.mubr.bf16.gmra.mxu0 %v766
        %v874 = vpop.f32.mrf.mxu0
        %v875 = vadd.f32 0.0, %v874
        %v876 = vpop.f32.mrf.mxu0
        %v877 = vpop.f32.mrf.mxu0
        %v878 = vadd.f32 0.0, %v877
        %v879 = vpop.f32.mrf.mxu0
        %880 = vdwg.mxu0
        %v881 = vadd.f32 %v751, %v867
        %v882 = vadd.f32 %v754, %v870
        %v883 = vadd.f32 %v759, %v875
        %v884 = vadd.f32 %v762, %v878
        %v886 = vlaneseq
        %v887 = vshrl.u32 %v886, 7
        %v888 = vsub.s32 0, %v887
        %v889 = vrot.slane %v491, %v888
        %v891 = vadd.f32 %v881, %v889
        %v892 = vadd.f32 %v882, %v889
        %v893 = vadd.f32 %v883, %v889
        %v894 = vadd.f32 %v884, %v889
        %v895 = vmax.f32 %v891, 0.0
        %v896 = vmax.f32 %v892, 0.0
        %v897 = vmax.f32 %v893, 0.0
        %v898 = vmax.f32 %v894, 0.0
        %v899 = vld [vmem:[%s5] sm:$0xf]
        %v900 = vrot.slane %v895, 7
        %v901 = vrot.slane %v896, 7
        %v902 = vrot.slane %v897, 7
        %v903 = vrot.slane %v898, 7
        %v904 = vsel %vm496, %v902, %v903
        %v905 = vsel %vm496, %v901, %v902
        %v906 = vsel %vm496, %v900, %v901
        %v907 = vsel %vm496, %v903, %v900
        %v908 = vsel %vm505, %v907, 0.0
        %v909 = vsel %vm506, %v906, 0.0
        %v910 = vsel %vm507, %v905, 0.0
        %v911 = vsel %vm508, %v904, 0.0
        %v912 = vrot.slane %v895, 1
        %v913 = vrot.slane %v896, 1
        %v914 = vrot.slane %v897, 1
        %v915 = vrot.slane %v898, 1
        %v916 = vsel %vm517, %v914, %v915
        %v917 = vsel %vm517, %v913, %v914
        %v918 = vsel %vm517, %v912, %v913
        %v919 = vsel %vm517, %v915, %v912
        %v920 = vsel %vm526, %v918, 0.0
        %v921 = vsel %vm527, %v917, 0.0
        %v922 = vsel %vm528, %v916, 0.0
        %v923 = vsel %vm529, %v919, 0.0
        %v924 = vpack.c.bf16 %v909, %v908
        %v925 = vpack.c.bf16 %v911, %v910
        %v926 = vld [vmem:[#allocation4] sm:$0xff]
        %v927 = vld [vmem:[#allocation4 + $0x8] sm:$0xff]
        %v928 = vld [vmem:[#allocation4 + $0x10] sm:$0xff]
        %v929 = vld [vmem:[#allocation4 + $0x18] sm:$0xff]
        %v930 = vld [vmem:[#allocation4 + $0x20] sm:$0xff]
        %v931 = vld [vmem:[#allocation4 + $0x28] sm:$0xff]
        %v932 = vld [vmem:[#allocation4 + $0x30] sm:$0xff]
        %v933 = vld [vmem:[#allocation4 + $0x38] sm:$0xff]
        %v934 = vld [vmem:[#allocation4 + $0x40] sm:$0xff]
        %v935 = vld [vmem:[#allocation4 + $0x48] sm:$0xff]
        %v936 = vld [vmem:[#allocation4 + $0x50] sm:$0xff]
        %v937 = vld [vmem:[#allocation4 + $0x58] sm:$0xff]
        %v938 = vld [vmem:[#allocation4 + $0x60] sm:$0xff]
        %v939 = vld [vmem:[#allocation4 + $0x68] sm:$0xff]
        %v940 = vld [vmem:[#allocation4 + $0x70] sm:$0xff]
        %v941 = vld [vmem:[#allocation4 + $0x78] sm:$0xff]
        %v942 = vld [vmem:[#allocation4 + $0x80] sm:$0xff]
        %v943 = vld [vmem:[#allocation4 + $0x88] sm:$0xff]
        %v944 = vld [vmem:[#allocation4 + $0x90] sm:$0xff]
        %v945 = vld [vmem:[#allocation4 + $0x98] sm:$0xff]
        %v946 = vld [vmem:[#allocation4 + $0xa0] sm:$0xff]
        %v947 = vld [vmem:[#allocation4 + $0xa8] sm:$0xff]
        %v948 = vld [vmem:[#allocation4 + $0xb0] sm:$0xff]
        %v949 = vld [vmem:[#allocation4 + $0xb8] sm:$0xff]
        %v950 = vld [vmem:[#allocation4 + $0xc0] sm:$0xff]
        %v951 = vld [vmem:[#allocation4 + $0xc8] sm:$0xff]
        %v952 = vld [vmem:[#allocation4 + $0xd0] sm:$0xff]
        %v953 = vld [vmem:[#allocation4 + $0xd8] sm:$0xff]
        %v954 = vld [vmem:[#allocation4 + $0xe0] sm:$0xff]
        %v955 = vld [vmem:[#allocation4 + $0xe8] sm:$0xff]
        %v956 = vld [vmem:[#allocation4 + $0xf0] sm:$0xff]
        %v957 = vld [vmem:[#allocation4 + $0xf8] sm:$0xff]
        %v958 = vpack.c.bf16 %v896, %v895
        %v959 = vpack.c.bf16 %v898, %v897
        %s960 = scalar_lea.vmem [#allocation4], 256
        %v961 = vld [vmem:[%s960] sm:$0xff]
        %v962 = vld [vmem:[%s960 + $0x8] sm:$0xff]
        %v963 = vld [vmem:[%s960 + $0x10] sm:$0xff]
        %v964 = vld [vmem:[%s960 + $0x18] sm:$0xff]
        %v965 = vld [vmem:[%s960 + $0x20] sm:$0xff]
        %v966 = vld [vmem:[%s960 + $0x28] sm:$0xff]
        %v967 = vld [vmem:[%s960 + $0x30] sm:$0xff]
        %v968 = vld [vmem:[%s960 + $0x38] sm:$0xff]
        %v969 = vld [vmem:[%s960 + $0x40] sm:$0xff]
        %v970 = vld [vmem:[%s960 + $0x48] sm:$0xff]
        %v971 = vld [vmem:[%s960 + $0x50] sm:$0xff]
        %v972 = vld [vmem:[%s960 + $0x58] sm:$0xff]
        %v973 = vld [vmem:[%s960 + $0x60] sm:$0xff]
        %v974 = vld [vmem:[%s960 + $0x68] sm:$0xff]
        %v975 = vld [vmem:[%s960 + $0x70] sm:$0xff]
        %v976 = vld [vmem:[%s960 + $0x78] sm:$0xff]
        %v977 = vld [vmem:[%s960 + $0x80] sm:$0xff]
        %v978 = vld [vmem:[%s960 + $0x88] sm:$0xff]
        %v979 = vld [vmem:[%s960 + $0x90] sm:$0xff]
        %v980 = vld [vmem:[%s960 + $0x98] sm:$0xff]
        %v981 = vld [vmem:[%s960 + $0xa0] sm:$0xff]
        %v982 = vld [vmem:[%s960 + $0xa8] sm:$0xff]
        %v983 = vld [vmem:[%s960 + $0xb0] sm:$0xff]
        %v984 = vld [vmem:[%s960 + $0xb8] sm:$0xff]
        %v985 = vld [vmem:[%s960 + $0xc0] sm:$0xff]
        %v986 = vld [vmem:[%s960 + $0xc8] sm:$0xff]
        %v987 = vld [vmem:[%s960 + $0xd0] sm:$0xff]
        %v988 = vld [vmem:[%s960 + $0xd8] sm:$0xff]
        %v989 = vld [vmem:[%s960 + $0xe0] sm:$0xff]
        %v990 = vld [vmem:[%s960 + $0xe8] sm:$0xff]
        %v991 = vld [vmem:[%s960 + $0xf0] sm:$0xff]
        %v992 = vld [vmem:[%s960 + $0xf8] sm:$0xff]
        %v1025 = vunpack.c.l.b16 %v961
        %v1026 = vunpack.c.h.b16 %v961
        %v1027 = vunpack.c.l.b16 %v962
        %v1028 = vunpack.c.h.b16 %v962
        %v1029 = vunpack.c.l.b16 %v963
        %v1030 = vunpack.c.h.b16 %v963
        %v1031 = vunpack.c.l.b16 %v964
        %v1032 = vunpack.c.h.b16 %v964
        %v1033 = vunpack.c.l.b16 %v965
        %v1034 = vunpack.c.h.b16 %v965
        %v1035 = vunpack.c.l.b16 %v966
        %v1036 = vunpack.c.h.b16 %v966
        %v1037 = vunpack.c.l.b16 %v967
        %v1038 = vunpack.c.h.b16 %v967
        %v1039 = vunpack.c.l.b16 %v968
        %v1040 = vunpack.c.h.b16 %v968
        %v1041 = vunpack.c.l.b16 %v969
        %v1042 = vunpack.c.h.b16 %v969
        %v1043 = vunpack.c.l.b16 %v970
        %v1044 = vunpack.c.h.b16 %v970
        %v1045 = vunpack.c.l.b16 %v971
        %v1046 = vunpack.c.h.b16 %v971
        %v1047 = vunpack.c.l.b16 %v972
        %v1048 = vunpack.c.h.b16 %v972
        %v1049 = vunpack.c.l.b16 %v973
        %v1050 = vunpack.c.h.b16 %v973
        %v1051 = vunpack.c.l.b16 %v974
        %v1052 = vunpack.c.h.b16 %v974
        %v1053 = vunpack.c.l.b16 %v975
        %v1054 = vunpack.c.h.b16 %v975
        %v1055 = vunpack.c.l.b16 %v976
        %v1056 = vunpack.c.h.b16 %v976
        %v1057 = vunpack.c.l.b16 %v977
        %v1058 = vunpack.c.h.b16 %v977
        %v1059 = vunpack.c.l.b16 %v978
        %v1060 = vunpack.c.h.b16 %v978
        %v1061 = vunpack.c.l.b16 %v979
        %v1062 = vunpack.c.h.b16 %v979
        %v1063 = vunpack.c.l.b16 %v980
        %v1064 = vunpack.c.h.b16 %v980
        %v1065 = vunpack.c.l.b16 %v981
        %v1066 = vunpack.c.h.b16 %v981
        %v1067 = vunpack.c.l.b16 %v982
        %v1068 = vunpack.c.h.b16 %v982
        %v1069 = vunpack.c.l.b16 %v983
        %v1070 = vunpack.c.h.b16 %v983
        %v1071 = vunpack.c.l.b16 %v984
        %v1072 = vunpack.c.h.b16 %v984
        %v1073 = vunpack.c.l.b16 %v985
        %v1074 = vunpack.c.h.b16 %v985
        %v1075 = vunpack.c.l.b16 %v986
        %v1076 = vunpack.c.h.b16 %v986
        %v1077 = vunpack.c.l.b16 %v987
        %v1078 = vunpack.c.h.b16 %v987
        %v1079 = vunpack.c.l.b16 %v988
        %v1080 = vunpack.c.h.b16 %v988
        %v1081 = vunpack.c.l.b16 %v989
        %v1082 = vunpack.c.h.b16 %v989
        %v1083 = vunpack.c.l.b16 %v990
        %v1084 = vunpack.c.h.b16 %v990
        %v1085 = vunpack.c.l.b16 %v991
        %v1086 = vunpack.c.h.b16 %v991
        %v1087 = vunpack.c.l.b16 %v992
        %v1088 = vunpack.c.h.b16 %v992
        %v1089 = vpack.c.b16 %v1029, %v1025
        %v1090 = vpack.c.b16 %v1030, %v1026
        %v1091 = vpack.c.b16 %v1031, %v1027
        %v1092 = vpack.c.b16 %v1032, %v1028
        %v1093 = vpack.c.b16 %v1037, %v1033
        %v1094 = vpack.c.b16 %v1038, %v1034
        %v1095 = vpack.c.b16 %v1039, %v1035
        %v1096 = vpack.c.b16 %v1040, %v1036
        %v1097 = vpack.c.b16 %v1045, %v1041
        %v1098 = vpack.c.b16 %v1046, %v1042
        %v1099 = vpack.c.b16 %v1047, %v1043
        %v1100 = vpack.c.b16 %v1048, %v1044
        %v1101 = vpack.c.b16 %v1053, %v1049
        %v1102 = vpack.c.b16 %v1054, %v1050
        %v1103 = vpack.c.b16 %v1055, %v1051
        %v1104 = vpack.c.b16 %v1056, %v1052
        %v1105 = vpack.c.b16 %v1061, %v1057
        %v1106 = vpack.c.b16 %v1062, %v1058
        %v1107 = vpack.c.b16 %v1063, %v1059
        %v1108 = vpack.c.b16 %v1064, %v1060
        %v1109 = vpack.c.b16 %v1069, %v1065
        %v1110 = vpack.c.b16 %v1070, %v1066
        %v1111 = vpack.c.b16 %v1071, %v1067
        %v1112 = vpack.c.b16 %v1072, %v1068
        %v1113 = vpack.c.b16 %v1077, %v1073
        %v1114 = vpack.c.b16 %v1078, %v1074
        %v1115 = vpack.c.b16 %v1079, %v1075
        %v1116 = vpack.c.b16 %v1080, %v1076
        %v1117 = vpack.c.b16 %v1085, %v1081
        %v1118 = vpack.c.b16 %v1086, %v1082
        %v1119 = vpack.c.b16 %v1087, %v1083
        %v1120 = vpack.c.b16 %v1088, %v1084
        %1153 = vmatprep.subr.bf16.mxu0 %v1118
        %1154 = vmatpush1.bf16.msra.mxu0 %v1117
        %1155 = vmatprep.subr.bf16.mxu0 %v1114
        %1156 = vmatpush1.bf16.msra.mxu0 %v1113
        %1157 = vmatprep.subr.bf16.mxu0 %v1110
        %1158 = vmatpush1.bf16.msra.mxu0 %v1109
        %1159 = vmatprep.subr.bf16.mxu0 %v1106
        %1160 = vmatpush1.bf16.msra.mxu0 %v1105
        %1161 = vmatprep.subr.bf16.mxu0 %v1102
        %1162 = vmatpush1.bf16.msra.mxu0 %v1101
        %1163 = vmatprep.subr.bf16.mxu0 %v1098
        %1164 = vmatpush1.bf16.msra.mxu0 %v1097
        %1165 = vmatprep.subr.bf16.mxu0 %v1094
        %1166 = vmatpush1.bf16.msra.mxu0 %v1093
        %1167 = vmatprep.subr.bf16.mxu0 %v1090
        %1168 = vmatpush1.bf16.msra.mxu0 %v1089
        %1169 = vmatprep.subr.bf16.mxu0 0
        %1170 = vmatpush2.bf16.msra.mxu0 0
        %1171 = vmatprep.subr.bf16.mxu0 0
        %1172 = vmatpush2.bf16.msra.mxu0 0
        %1173 = vmatprep.subr.bf16.mxu0 0
        %1174 = vmatpush2.bf16.msra.mxu0 0
        %1175 = vmatprep.subr.bf16.mxu0 0
        %1176 = vmatpush2.bf16.msra.mxu0 0
        %1177 = vmatprep.subr.bf16.mxu0 0
        %1178 = vmatpush2.bf16.msra.mxu0 0
        %1179 = vmatprep.subr.bf16.mxu0 0
        %1180 = vmatpush2.bf16.msra.mxu0 0
        %1181 = vmatprep.subr.bf16.mxu0 0
        %1182 = vmatpush2.bf16.msra.mxu0 0
        %1183 = vmatprep.subr.bf16.mxu0 0
        %1184 = vmatpush2.bf16.msra.mxu0 0
        %1185 = vmatprep.mubr.bf16.mxu0 0
        %1186 = vmatmul.mubr.bf16.gmra.mxu0 %v958
        %v1187 = vpop.f32.mrf.mxu0
        %v1188 = vadd.f32 0.0, %v1187
        %v1189 = vpop.f32.mrf.mxu0
        %v1190 = vadd.f32 0.0, %v1189
        %v1191 = vpop.f32.mrf.mxu0
        %v1192 = vadd.f32 0.0, %v1191
        %v1193 = vpop.f32.mrf.mxu0
        %v1194 = vadd.f32 0.0, %v1193
        %1195 = vmatprep.mubr.bf16.mxu0 0
        %1196 = vmatmul.mubr.bf16.gmra.mxu0 %v959
        %v1197 = vpop.f32.mrf.mxu0
        %v1198 = vadd.f32 0.0, %v1197
        %v1199 = vpop.f32.mrf.mxu0
        %v1200 = vadd.f32 0.0, %v1199
        %v1201 = vpop.f32.mrf.mxu0
        %v1202 = vadd.f32 0.0, %v1201
        %v1203 = vpop.f32.mrf.mxu0
        %v1204 = vadd.f32 0.0, %v1203
        %1205 = vdwg.mxu0
        %1206 = vmatprep.subr.bf16.mxu0 %v1120
        %1207 = vmatpush1.bf16.msra.mxu0 %v1119
        %1208 = vmatprep.subr.bf16.mxu0 %v1116
        %1209 = vmatpush1.bf16.msra.mxu0 %v1115
        %1210 = vmatprep.subr.bf16.mxu0 %v1112
        %1211 = vmatpush1.bf16.msra.mxu0 %v1111
        %1212 = vmatprep.subr.bf16.mxu0 %v1108
        %1213 = vmatpush1.bf16.msra.mxu0 %v1107
        %1214 = vmatprep.subr.bf16.mxu0 %v1104
        %1215 = vmatpush1.bf16.msra.mxu0 %v1103
        %1216 = vmatprep.subr.bf16.mxu0 %v1100
        %1217 = vmatpush1.bf16.msra.mxu0 %v1099
        %1218 = vmatprep.subr.bf16.mxu0 %v1096
        %1219 = vmatpush1.bf16.msra.mxu0 %v1095
        %1220 = vmatprep.subr.bf16.mxu0 %v1092
        %1221 = vmatpush1.bf16.msra.mxu0 %v1091
        %1222 = vmatprep.subr.bf16.mxu0 0
        %1223 = vmatpush2.bf16.msra.mxu0 0
        %1224 = vmatprep.subr.bf16.mxu0 0
        %1225 = vmatpush2.bf16.msra.mxu0 0
        %1226 = vmatprep.subr.bf16.mxu0 0
        %1227 = vmatpush2.bf16.msra.mxu0 0
        %1228 = vmatprep.subr.bf16.mxu0 0
        %1229 = vmatpush2.bf16.msra.mxu0 0
        %1230 = vmatprep.subr.bf16.mxu0 0
        %1231 = vmatpush2.bf16.msra.mxu0 0
        %1232 = vmatprep.subr.bf16.mxu0 0
        %1233 = vmatpush2.bf16.msra.mxu0 0
        %1234 = vmatprep.subr.bf16.mxu0 0
        %1235 = vmatpush2.bf16.msra.mxu0 0
        %1236 = vmatprep.subr.bf16.mxu0 0
        %1237 = vmatpush2.bf16.msra.mxu0 0
        %1238 = vmatprep.mubr.bf16.mxu0 0
        %1239 = vmatmul.mubr.bf16.gmra.mxu0 %v958
        %v1240 = vpop.f32.mrf.mxu0
        %v1241 = vadd.f32 0.0, %v1240
        %v1242 = vpop.f32.mrf.mxu0
        %v1243 = vadd.f32 0.0, %v1242
        %v1244 = vpop.f32.mrf.mxu0
        %v1245 = vadd.f32 0.0, %v1244
        %v1246 = vpop.f32.mrf.mxu0
        %v1247 = vadd.f32 0.0, %v1246
        %1248 = vmatprep.mubr.bf16.mxu0 0
        %1249 = vmatmul.mubr.bf16.gmra.mxu0 %v959
        %v1250 = vpop.f32.mrf.mxu0
        %v1251 = vadd.f32 0.0, %v1250
        %v1252 = vpop.f32.mrf.mxu0
        %v1253 = vadd.f32 0.0, %v1252
        %v1254 = vpop.f32.mrf.mxu0
        %v1255 = vadd.f32 0.0, %v1254
        %v1256 = vpop.f32.mrf.mxu0
        %v1257 = vadd.f32 0.0, %v1256
        %1258 = vdwg.mxu0
        %v1291 = vunpack.c.l.b16 %v926
        %v1292 = vunpack.c.h.b16 %v926
        %v1293 = vunpack.c.l.b16 %v927
        %v1294 = vunpack.c.h.b16 %v927
        %v1295 = vunpack.c.l.b16 %v928
        %v1296 = vunpack.c.h.b16 %v928
        %v1297 = vunpack.c.l.b16 %v929
        %v1298 = vunpack.c.h.b16 %v929
        %v1299 = vunpack.c.l.b16 %v930
        %v1300 = vunpack.c.h.b16 %v930
        %v1301 = vunpack.c.l.b16 %v931
        %v1302 = vunpack.c.h.b16 %v931
        %v1303 = vunpack.c.l.b16 %v932
        %v1304 = vunpack.c.h.b16 %v932
        %v1305 = vunpack.c.l.b16 %v933
        %v1306 = vunpack.c.h.b16 %v933
        %v1307 = vunpack.c.l.b16 %v934
        %v1308 = vunpack.c.h.b16 %v934
        %v1309 = vunpack.c.l.b16 %v935
        %v1310 = vunpack.c.h.b16 %v935
        %v1311 = vunpack.c.l.b16 %v936
        %v1312 = vunpack.c.h.b16 %v936
        %v1313 = vunpack.c.l.b16 %v937
        %v1314 = vunpack.c.h.b16 %v937
        %v1315 = vunpack.c.l.b16 %v938
        %v1316 = vunpack.c.h.b16 %v938
        %v1317 = vunpack.c.l.b16 %v939
        %v1318 = vunpack.c.h.b16 %v939
        %v1319 = vunpack.c.l.b16 %v940
        %v1320 = vunpack.c.h.b16 %v940
        %v1321 = vunpack.c.l.b16 %v941
        %v1322 = vunpack.c.h.b16 %v941
        %v1323 = vunpack.c.l.b16 %v942
        %v1324 = vunpack.c.h.b16 %v942
        %v1325 = vunpack.c.l.b16 %v943
        %v1326 = vunpack.c.h.b16 %v943
        %v1327 = vunpack.c.l.b16 %v944
        %v1328 = vunpack.c.h.b16 %v944
        %v1329 = vunpack.c.l.b16 %v945
        %v1330 = vunpack.c.h.b16 %v945
        %v1331 = vunpack.c.l.b16 %v946
        %v1332 = vunpack.c.h.b16 %v946
        %v1333 = vunpack.c.l.b16 %v947
        %v1334 = vunpack.c.h.b16 %v947
        %v1335 = vunpack.c.l.b16 %v948
        %v1336 = vunpack.c.h.b16 %v948
        %v1337 = vunpack.c.l.b16 %v949
        %v1338 = vunpack.c.h.b16 %v949
        %v1339 = vunpack.c.l.b16 %v950
        %v1340 = vunpack.c.h.b16 %v950
        %v1341 = vunpack.c.l.b16 %v951
        %v1342 = vunpack.c.h.b16 %v951
        %v1343 = vunpack.c.l.b16 %v952
        %v1344 = vunpack.c.h.b16 %v952
        %v1345 = vunpack.c.l.b16 %v953
        %v1346 = vunpack.c.h.b16 %v953
        %v1347 = vunpack.c.l.b16 %v954
        %v1348 = vunpack.c.h.b16 %v954
        %v1349 = vunpack.c.l.b16 %v955
        %v1350 = vunpack.c.h.b16 %v955
        %v1351 = vunpack.c.l.b16 %v956
        %v1352 = vunpack.c.h.b16 %v956
        %v1353 = vunpack.c.l.b16 %v957
        %v1354 = vunpack.c.h.b16 %v957
        %v1355 = vpack.c.b16 %v1295, %v1291
        %v1356 = vpack.c.b16 %v1296, %v1292
        %v1357 = vpack.c.b16 %v1297, %v1293
        %v1358 = vpack.c.b16 %v1298, %v1294
        %v1359 = vpack.c.b16 %v1303, %v1299
        %v1360 = vpack.c.b16 %v1304, %v1300
        %v1361 = vpack.c.b16 %v1305, %v1301
        %v1362 = vpack.c.b16 %v1306, %v1302
        %v1363 = vpack.c.b16 %v1311, %v1307
        %v1364 = vpack.c.b16 %v1312, %v1308
        %v1365 = vpack.c.b16 %v1313, %v1309
        %v1366 = vpack.c.b16 %v1314, %v1310
        %v1367 = vpack.c.b16 %v1319, %v1315
        %v1368 = vpack.c.b16 %v1320, %v1316
        %v1369 = vpack.c.b16 %v1321, %v1317
        %v1370 = vpack.c.b16 %v1322, %v1318
        %v1371 = vpack.c.b16 %v1327, %v1323
        %v1372 = vpack.c.b16 %v1328, %v1324
        %v1373 = vpack.c.b16 %v1329, %v1325
        %v1374 = vpack.c.b16 %v1330, %v1326
        %v1375 = vpack.c.b16 %v1335, %v1331
        %v1376 = vpack.c.b16 %v1336, %v1332
        %v1377 = vpack.c.b16 %v1337, %v1333
        %v1378 = vpack.c.b16 %v1338, %v1334
        %v1379 = vpack.c.b16 %v1343, %v1339
        %v1380 = vpack.c.b16 %v1344, %v1340
        %v1381 = vpack.c.b16 %v1345, %v1341
        %v1382 = vpack.c.b16 %v1346, %v1342
        %v1383 = vpack.c.b16 %v1351, %v1347
        %v1384 = vpack.c.b16 %v1352, %v1348
        %v1385 = vpack.c.b16 %v1353, %v1349
        %v1386 = vpack.c.b16 %v1354, %v1350
        %1419 = vmatprep.subr.bf16.mxu0 %v1384
        %1420 = vmatpush1.bf16.msra.mxu0 %v1383
        %1421 = vmatprep.subr.bf16.mxu0 %v1380
        %1422 = vmatpush1.bf16.msra.mxu0 %v1379
        %1423 = vmatprep.subr.bf16.mxu0 %v1376
        %1424 = vmatpush1.bf16.msra.mxu0 %v1375
        %1425 = vmatprep.subr.bf16.mxu0 %v1372
        %1426 = vmatpush1.bf16.msra.mxu0 %v1371
        %1427 = vmatprep.subr.bf16.mxu0 %v1368
        %1428 = vmatpush1.bf16.msra.mxu0 %v1367
        %1429 = vmatprep.subr.bf16.mxu0 %v1364
        %1430 = vmatpush1.bf16.msra.mxu0 %v1363
        %1431 = vmatprep.subr.bf16.mxu0 %v1360
        %1432 = vmatpush1.bf16.msra.mxu0 %v1359
        %1433 = vmatprep.subr.bf16.mxu0 %v1356
        %1434 = vmatpush1.bf16.msra.mxu0 %v1355
        %1435 = vmatprep.subr.bf16.mxu0 0
        %1436 = vmatpush2.bf16.msra.mxu0 0
        %1437 = vmatprep.subr.bf16.mxu0 0
        %1438 = vmatpush2.bf16.msra.mxu0 0
        %1439 = vmatprep.subr.bf16.mxu0 0
        %1440 = vmatpush2.bf16.msra.mxu0 0
        %1441 = vmatprep.subr.bf16.mxu0 0
        %1442 = vmatpush2.bf16.msra.mxu0 0
        %1443 = vmatprep.subr.bf16.mxu0 0
        %1444 = vmatpush2.bf16.msra.mxu0 0
        %1445 = vmatprep.subr.bf16.mxu0 0
        %1446 = vmatpush2.bf16.msra.mxu0 0
        %1447 = vmatprep.subr.bf16.mxu0 0
        %1448 = vmatpush2.bf16.msra.mxu0 0
        %1449 = vmatprep.subr.bf16.mxu0 0
        %1450 = vmatpush2.bf16.msra.mxu0 0
        %1451 = vmatprep.mubr.bf16.mxu0 0
        %1452 = vmatmul.mubr.bf16.gmra.mxu0 %v924
        %v1453 = vpop.f32.mrf.mxu0
        %v1454 = vadd.f32 %v1188, %v1453
        %v1455 = vpop.f32.mrf.mxu0
        %v1456 = vadd.f32 %v1190, %v1455
        %v1457 = vpop.f32.mrf.mxu0
        %v1458 = vadd.f32 %v1192, %v1457
        %v1459 = vpop.f32.mrf.mxu0
        %v1460 = vadd.f32 %v1194, %v1459
        %1461 = vmatprep.mubr.bf16.mxu0 0
        %1462 = vmatmul.mubr.bf16.gmra.mxu0 %v925
        %v1463 = vpop.f32.mrf.mxu0
        %v1464 = vadd.f32 %v1198, %v1463
        %v1465 = vpop.f32.mrf.mxu0
        %v1466 = vadd.f32 %v1200, %v1465
        %v1467 = vpop.f32.mrf.mxu0
        %v1468 = vadd.f32 %v1202, %v1467
        %v1469 = vpop.f32.mrf.mxu0
        %v1470 = vadd.f32 %v1204, %v1469
        %1471 = vdwg.mxu0
        %1472 = vmatprep.subr.bf16.mxu0 %v1386
        %1473 = vmatpush1.bf16.msra.mxu0 %v1385
        %1474 = vmatprep.subr.bf16.mxu0 %v1382
        %1475 = vmatpush1.bf16.msra.mxu0 %v1381
        %1476 = vmatprep.subr.bf16.mxu0 %v1378
        %1477 = vmatpush1.bf16.msra.mxu0 %v1377
        %1478 = vmatprep.subr.bf16.mxu0 %v1374
        %1479 = vmatpush1.bf16.msra.mxu0 %v1373
        %1480 = vmatprep.subr.bf16.mxu0 %v1370
        %1481 = vmatpush1.bf16.msra.mxu0 %v1369
        %1482 = vmatprep.subr.bf16.mxu0 %v1366
        %1483 = vmatpush1.bf16.msra.mxu0 %v1365
        %1484 = vmatprep.subr.bf16.mxu0 %v1362
        %1485 = vmatpush1.bf16.msra.mxu0 %v1361
        %1486 = vmatprep.subr.bf16.mxu0 %v1358
        %1487 = vmatpush1.bf16.msra.mxu0 %v1357
        %1488 = vmatprep.subr.bf16.mxu0 0
        %1489 = vmatpush2.bf16.msra.mxu0 0
        %1490 = vmatprep.subr.bf16.mxu0 0
        %1491 = vmatpush2.bf16.msra.mxu0 0
        %1492 = vmatprep.subr.bf16.mxu0 0
        %1493 = vmatpush2.bf16.msra.mxu0 0
        %1494 = vmatprep.subr.bf16.mxu0 0
        %1495 = vmatpush2.bf16.msra.mxu0 0
        %1496 = vmatprep.subr.bf16.mxu0 0
        %1497 = vmatpush2.bf16.msra.mxu0 0
        %1498 = vmatprep.subr.bf16.mxu0 0
        %1499 = vmatpush2.bf16.msra.mxu0 0
        %1500 = vmatprep.subr.bf16.mxu0 0
        %1501 = vmatpush2.bf16.msra.mxu0 0
        %1502 = vmatprep.subr.bf16.mxu0 0
        %1503 = vmatpush2.bf16.msra.mxu0 0
        %1504 = vmatprep.mubr.bf16.mxu0 0
        %1505 = vmatmul.mubr.bf16.gmra.mxu0 %v924
        %v1506 = vpop.f32.mrf.mxu0
        %v1507 = vadd.f32 %v1241, %v1506
        %v1508 = vpop.f32.mrf.mxu0
        %v1509 = vadd.f32 %v1243, %v1508
        %v1510 = vpop.f32.mrf.mxu0
        %v1511 = vadd.f32 %v1245, %v1510
        %v1512 = vpop.f32.mrf.mxu0
        %v1513 = vadd.f32 %v1247, %v1512
        %1514 = vmatprep.mubr.bf16.mxu0 0
        %1515 = vmatmul.mubr.bf16.gmra.mxu0 %v925
        %v1516 = vpop.f32.mrf.mxu0
        %v1517 = vadd.f32 %v1251, %v1516
        %v1518 = vpop.f32.mrf.mxu0
        %v1519 = vadd.f32 %v1253, %v1518
        %v1520 = vpop.f32.mrf.mxu0
        %v1521 = vadd.f32 %v1255, %v1520
        %v1522 = vpop.f32.mrf.mxu0
        %v1523 = vadd.f32 %v1257, %v1522
        %1524 = vdwg.mxu0
        %v1525 = vpack.c.bf16 %v921, %v920
        %v1526 = vpack.c.bf16 %v923, %v922
        %s1527 = scalar_lea.vmem [#allocation4], 512
        %v1528 = vld [vmem:[%s1527] sm:$0xff]
        %v1529 = vld [vmem:[%s1527 + $0x8] sm:$0xff]
        %v1530 = vld [vmem:[%s1527 + $0x10] sm:$0xff]
        %v1531 = vld [vmem:[%s1527 + $0x18] sm:$0xff]
        %v1532 = vld [vmem:[%s1527 + $0x20] sm:$0xff]
        %v1533 = vld [vmem:[%s1527 + $0x28] sm:$0xff]
        %v1534 = vld [vmem:[%s1527 + $0x30] sm:$0xff]
        %v1535 = vld [vmem:[%s1527 + $0x38] sm:$0xff]
        %v1536 = vld [vmem:[%s1527 + $0x40] sm:$0xff]
        %v1537 = vld [vmem:[%s1527 + $0x48] sm:$0xff]
        %v1538 = vld [vmem:[%s1527 + $0x50] sm:$0xff]
        %v1539 = vld [vmem:[%s1527 + $0x58] sm:$0xff]
        %v1540 = vld [vmem:[%s1527 + $0x60] sm:$0xff]
        %v1541 = vld [vmem:[%s1527 + $0x68] sm:$0xff]
        %v1542 = vld [vmem:[%s1527 + $0x70] sm:$0xff]
        %v1543 = vld [vmem:[%s1527 + $0x78] sm:$0xff]
        %v1544 = vld [vmem:[%s1527 + $0x80] sm:$0xff]
        %v1545 = vld [vmem:[%s1527 + $0x88] sm:$0xff]
        %v1546 = vld [vmem:[%s1527 + $0x90] sm:$0xff]
        %v1547 = vld [vmem:[%s1527 + $0x98] sm:$0xff]
        %v1548 = vld [vmem:[%s1527 + $0xa0] sm:$0xff]
        %v1549 = vld [vmem:[%s1527 + $0xa8] sm:$0xff]
        %v1550 = vld [vmem:[%s1527 + $0xb0] sm:$0xff]
        %v1551 = vld [vmem:[%s1527 + $0xb8] sm:$0xff]
        %v1552 = vld [vmem:[%s1527 + $0xc0] sm:$0xff]
        %v1553 = vld [vmem:[%s1527 + $0xc8] sm:$0xff]
        %v1554 = vld [vmem:[%s1527 + $0xd0] sm:$0xff]
        %v1555 = vld [vmem:[%s1527 + $0xd8] sm:$0xff]
        %v1556 = vld [vmem:[%s1527 + $0xe0] sm:$0xff]
        %v1557 = vld [vmem:[%s1527 + $0xe8] sm:$0xff]
        %v1558 = vld [vmem:[%s1527 + $0xf0] sm:$0xff]
        %v1559 = vld [vmem:[%s1527 + $0xf8] sm:$0xff]
        %v1592 = vunpack.c.l.b16 %v1528
        %v1593 = vunpack.c.h.b16 %v1528
        %v1594 = vunpack.c.l.b16 %v1529
        %v1595 = vunpack.c.h.b16 %v1529
        %v1596 = vunpack.c.l.b16 %v1530
        %v1597 = vunpack.c.h.b16 %v1530
        %v1598 = vunpack.c.l.b16 %v1531
        %v1599 = vunpack.c.h.b16 %v1531
        %v1600 = vunpack.c.l.b16 %v1532
        %v1601 = vunpack.c.h.b16 %v1532
        %v1602 = vunpack.c.l.b16 %v1533
        %v1603 = vunpack.c.h.b16 %v1533
        %v1604 = vunpack.c.l.b16 %v1534
        %v1605 = vunpack.c.h.b16 %v1534
        %v1606 = vunpack.c.l.b16 %v1535
        %v1607 = vunpack.c.h.b16 %v1535
        %v1608 = vunpack.c.l.b16 %v1536
        %v1609 = vunpack.c.h.b16 %v1536
        %v1610 = vunpack.c.l.b16 %v1537
        %v1611 = vunpack.c.h.b16 %v1537
        %v1612 = vunpack.c.l.b16 %v1538
        %v1613 = vunpack.c.h.b16 %v1538
        %v1614 = vunpack.c.l.b16 %v1539
        %v1615 = vunpack.c.h.b16 %v1539
        %v1616 = vunpack.c.l.b16 %v1540
        %v1617 = vunpack.c.h.b16 %v1540
        %v1618 = vunpack.c.l.b16 %v1541
        %v1619 = vunpack.c.h.b16 %v1541
        %v1620 = vunpack.c.l.b16 %v1542
        %v1621 = vunpack.c.h.b16 %v1542
        %v1622 = vunpack.c.l.b16 %v1543
        %v1623 = vunpack.c.h.b16 %v1543
        %v1624 = vunpack.c.l.b16 %v1544
        %v1625 = vunpack.c.h.b16 %v1544
        %v1626 = vunpack.c.l.b16 %v1545
        %v1627 = vunpack.c.h.b16 %v1545
        %v1628 = vunpack.c.l.b16 %v1546
        %v1629 = vunpack.c.h.b16 %v1546
        %v1630 = vunpack.c.l.b16 %v1547
        %v1631 = vunpack.c.h.b16 %v1547
        %v1632 = vunpack.c.l.b16 %v1548
        %v1633 = vunpack.c.h.b16 %v1548
        %v1634 = vunpack.c.l.b16 %v1549
        %v1635 = vunpack.c.h.b16 %v1549
        %v1636 = vunpack.c.l.b16 %v1550
        %v1637 = vunpack.c.h.b16 %v1550
        %v1638 = vunpack.c.l.b16 %v1551
        %v1639 = vunpack.c.h.b16 %v1551
        %v1640 = vunpack.c.l.b16 %v1552
        %v1641 = vunpack.c.h.b16 %v1552
        %v1642 = vunpack.c.l.b16 %v1553
        %v1643 = vunpack.c.h.b16 %v1553
        %v1644 = vunpack.c.l.b16 %v1554
        %v1645 = vunpack.c.h.b16 %v1554
        %v1646 = vunpack.c.l.b16 %v1555
        %v1647 = vunpack.c.h.b16 %v1555
        %v1648 = vunpack.c.l.b16 %v1556
        %v1649 = vunpack.c.h.b16 %v1556
        %v1650 = vunpack.c.l.b16 %v1557
        %v1651 = vunpack.c.h.b16 %v1557
        %v1652 = vunpack.c.l.b16 %v1558
        %v1653 = vunpack.c.h.b16 %v1558
        %v1654 = vunpack.c.l.b16 %v1559
        %v1655 = vunpack.c.h.b16 %v1559
        %v1656 = vpack.c.b16 %v1596, %v1592
        %v1657 = vpack.c.b16 %v1597, %v1593
        %v1658 = vpack.c.b16 %v1598, %v1594
        %v1659 = vpack.c.b16 %v1599, %v1595
        %v1660 = vpack.c.b16 %v1604, %v1600
        %v1661 = vpack.c.b16 %v1605, %v1601
        %v1662 = vpack.c.b16 %v1606, %v1602
        %v1663 = vpack.c.b16 %v1607, %v1603
        %v1664 = vpack.c.b16 %v1612, %v1608
        %v1665 = vpack.c.b16 %v1613, %v1609
        %v1666 = vpack.c.b16 %v1614, %v1610
        %v1667 = vpack.c.b16 %v1615, %v1611
        %v1668 = vpack.c.b16 %v1620, %v1616
        %v1669 = vpack.c.b16 %v1621, %v1617
        %v1670 = vpack.c.b16 %v1622, %v1618
        %v1671 = vpack.c.b16 %v1623, %v1619
        %v1672 = vpack.c.b16 %v1628, %v1624
        %v1673 = vpack.c.b16 %v1629, %v1625
        %v1674 = vpack.c.b16 %v1630, %v1626
        %v1675 = vpack.c.b16 %v1631, %v1627
        %v1676 = vpack.c.b16 %v1636, %v1632
        %v1677 = vpack.c.b16 %v1637, %v1633
        %v1678 = vpack.c.b16 %v1638, %v1634
        %v1679 = vpack.c.b16 %v1639, %v1635
        %v1680 = vpack.c.b16 %v1644, %v1640
        %v1681 = vpack.c.b16 %v1645, %v1641
        %v1682 = vpack.c.b16 %v1646, %v1642
        %v1683 = vpack.c.b16 %v1647, %v1643
        %v1684 = vpack.c.b16 %v1652, %v1648
        %v1685 = vpack.c.b16 %v1653, %v1649
        %v1686 = vpack.c.b16 %v1654, %v1650
        %v1687 = vpack.c.b16 %v1655, %v1651
        %1720 = vmatprep.subr.bf16.mxu0 %v1685
        %1721 = vmatpush1.bf16.msra.mxu0 %v1684
        %1722 = vmatprep.subr.bf16.mxu0 %v1681
        %1723 = vmatpush1.bf16.msra.mxu0 %v1680
        %1724 = vmatprep.subr.bf16.mxu0 %v1677
        %1725 = vmatpush1.bf16.msra.mxu0 %v1676
        %1726 = vmatprep.subr.bf16.mxu0 %v1673
        %1727 = vmatpush1.bf16.msra.mxu0 %v1672
        %1728 = vmatprep.subr.bf16.mxu0 %v1669
        %1729 = vmatpush1.bf16.msra.mxu0 %v1668
        %1730 = vmatprep.subr.bf16.mxu0 %v1665
        %1731 = vmatpush1.bf16.msra.mxu0 %v1664
        %1732 = vmatprep.subr.bf16.mxu0 %v1661
        %1733 = vmatpush1.bf16.msra.mxu0 %v1660
        %1734 = vmatprep.subr.bf16.mxu0 %v1657
        %1735 = vmatpush1.bf16.msra.mxu0 %v1656
        %1736 = vmatprep.subr.bf16.mxu0 0
        %1737 = vmatpush2.bf16.msra.mxu0 0
        %1738 = vmatprep.subr.bf16.mxu0 0
        %1739 = vmatpush2.bf16.msra.mxu0 0
        %1740 = vmatprep.subr.bf16.mxu0 0
        %1741 = vmatpush2.bf16.msra.mxu0 0
        %1742 = vmatprep.subr.bf16.mxu0 0
        %1743 = vmatpush2.bf16.msra.mxu0 0
        %1744 = vmatprep.subr.bf16.mxu0 0
        %1745 = vmatpush2.bf16.msra.mxu0 0
        %1746 = vmatprep.subr.bf16.mxu0 0
        %1747 = vmatpush2.bf16.msra.mxu0 0
        %1748 = vmatprep.subr.bf16.mxu0 0
        %1749 = vmatpush2.bf16.msra.mxu0 0
        %1750 = vmatprep.subr.bf16.mxu0 0
        %1751 = vmatpush2.bf16.msra.mxu0 0
        %1752 = vmatprep.mubr.bf16.mxu0 0
        %1753 = vmatmul.mubr.bf16.gmra.mxu0 %v1525
        %v1754 = vpop.f32.mrf.mxu0
        %v1755 = vadd.f32 0.0, %v1754
        %v1756 = vpop.f32.mrf.mxu0
        %v1757 = vadd.f32 0.0, %v1756
        %v1758 = vpop.f32.mrf.mxu0
        %v1759 = vadd.f32 0.0, %v1758
        %v1760 = vpop.f32.mrf.mxu0
        %v1761 = vadd.f32 0.0, %v1760
        %1762 = vmatprep.mubr.bf16.mxu0 0
        %1763 = vmatmul.mubr.bf16.gmra.mxu0 %v1526
        %v1764 = vpop.f32.mrf.mxu0
        %v1765 = vadd.f32 0.0, %v1764
        %v1766 = vpop.f32.mrf.mxu0
        %v1767 = vadd.f32 0.0, %v1766
        %v1768 = vpop.f32.mrf.mxu0
        %v1769 = vadd.f32 0.0, %v1768
        %v1770 = vpop.f32.mrf.mxu0
        %v1771 = vadd.f32 0.0, %v1770
        %1772 = vdwg.mxu0
        %1773 = vmatprep.subr.bf16.mxu0 %v1687
        %1774 = vmatpush1.bf16.msra.mxu0 %v1686
        %1775 = vmatprep.subr.bf16.mxu0 %v1683
        %1776 = vmatpush1.bf16.msra.mxu0 %v1682
        %1777 = vmatprep.subr.bf16.mxu0 %v1679
        %1778 = vmatpush1.bf16.msra.mxu0 %v1678
        %1779 = vmatprep.subr.bf16.mxu0 %v1675
        %1780 = vmatpush1.bf16.msra.mxu0 %v1674
        %1781 = vmatprep.subr.bf16.mxu0 %v1671
        %1782 = vmatpush1.bf16.msra.mxu0 %v1670
        %1783 = vmatprep.subr.bf16.mxu0 %v1667
        %1784 = vmatpush1.bf16.msra.mxu0 %v1666
        %1785 = vmatprep.subr.bf16.mxu0 %v1663
        %1786 = vmatpush1.bf16.msra.mxu0 %v1662
        %1787 = vmatprep.subr.bf16.mxu0 %v1659
        %1788 = vmatpush1.bf16.msra.mxu0 %v1658
        %1789 = vmatprep.subr.bf16.mxu0 0
        %1790 = vmatpush2.bf16.msra.mxu0 0
        %1791 = vmatprep.subr.bf16.mxu0 0
        %1792 = vmatpush2.bf16.msra.mxu0 0
        %1793 = vmatprep.subr.bf16.mxu0 0
        %1794 = vmatpush2.bf16.msra.mxu0 0
        %1795 = vmatprep.subr.bf16.mxu0 0
        %1796 = vmatpush2.bf16.msra.mxu0 0
        %1797 = vmatprep.subr.bf16.mxu0 0
        %1798 = vmatpush2.bf16.msra.mxu0 0
        %1799 = vmatprep.subr.bf16.mxu0 0
        %1800 = vmatpush2.bf16.msra.mxu0 0
        %1801 = vmatprep.subr.bf16.mxu0 0
        %1802 = vmatpush2.bf16.msra.mxu0 0
        %1803 = vmatprep.subr.bf16.mxu0 0
        %1804 = vmatpush2.bf16.msra.mxu0 0
        %1805 = vmatprep.mubr.bf16.mxu0 0
        %1806 = vmatmul.mubr.bf16.gmra.mxu0 %v1525
        %v1807 = vpop.f32.mrf.mxu0
        %v1808 = vadd.f32 0.0, %v1807
        %v1809 = vpop.f32.mrf.mxu0
        %v1810 = vadd.f32 0.0, %v1809
        %v1811 = vpop.f32.mrf.mxu0
        %v1812 = vadd.f32 0.0, %v1811
        %v1813 = vpop.f32.mrf.mxu0
        %v1814 = vadd.f32 0.0, %v1813
        %1815 = vmatprep.mubr.bf16.mxu0 0
        %1816 = vmatmul.mubr.bf16.gmra.mxu0 %v1526
        %v1817 = vpop.f32.mrf.mxu0
        %v1818 = vadd.f32 0.0, %v1817
        %v1819 = vpop.f32.mrf.mxu0
        %v1820 = vadd.f32 0.0, %v1819
        %v1821 = vpop.f32.mrf.mxu0
        %v1822 = vadd.f32 0.0, %v1821
        %v1823 = vpop.f32.mrf.mxu0
        %v1824 = vadd.f32 0.0, %v1823
        %1825 = vdwg.mxu0
        %v1826 = vadd.f32 %v1454, %v1755
        %v1827 = vadd.f32 %v1456, %v1757
        %v1828 = vadd.f32 %v1507, %v1808
        %v1829 = vadd.f32 %v1509, %v1810
        %v1830 = vadd.f32 %v1458, %v1759
        %v1831 = vadd.f32 %v1460, %v1761
        %v1832 = vadd.f32 %v1511, %v1812
        %v1833 = vadd.f32 %v1513, %v1814
        %v1834 = vadd.f32 %v1464, %v1765
        %v1835 = vadd.f32 %v1466, %v1767
        %v1836 = vadd.f32 %v1517, %v1818
        %v1837 = vadd.f32 %v1519, %v1820
        %v1838 = vadd.f32 %v1468, %v1769
        %v1839 = vadd.f32 %v1470, %v1771
        %v1840 = vadd.f32 %v1521, %v1822
        %v1841 = vadd.f32 %v1523, %v1824
        %v1843 = vlaneseq
        %v1844 = vshrl.u32 %v1843, 7
        %v1845 = vsub.s32 0, %v1844
        %v1846 = vrot.slane %v899, %v1845
        %v1847 = vlaneseq
        %v1848 = vshrl.u32 %v1847, 7
        %v1849 = vsub.s32 1, %v1848
        %v1850 = vrot.slane %v899, %v1849
        %v1851 = vlaneseq
        %v1852 = vshrl.u32 %v1851, 7
        %v1853 = vsub.s32 2, %v1852
        %v1854 = vrot.slane %v899, %v1853
        %v1855 = vlaneseq
        %v1856 = vshrl.u32 %v1855, 7
        %v1857 = vsub.s32 3, %v1856
        %v1858 = vrot.slane %v899, %v1857
        %v1863 = vadd.f32 %v1826, %v1846
        %v1864 = vadd.f32 %v1827, %v1850
        %v1865 = vadd.f32 %v1828, %v1854
        %v1866 = vadd.f32 %v1829, %v1858
        %v1867 = vadd.f32 %v1830, %v1846
        %v1868 = vadd.f32 %v1831, %v1850
        %v1869 = vadd.f32 %v1832, %v1854
        %v1870 = vadd.f32 %v1833, %v1858
        %v1871 = vadd.f32 %v1834, %v1846
        %v1872 = vadd.f32 %v1835, %v1850
        %v1873 = vadd.f32 %v1836, %v1854
        %v1874 = vadd.f32 %v1837, %v1858
        %v1875 = vadd.f32 %v1838, %v1846
        %v1876 = vadd.f32 %v1839, %v1850
        %v1877 = vadd.f32 %v1840, %v1854
        %v1878 = vadd.f32 %v1841, %v1858
        %v1879 = vmax.f32 %v1863, 0.0
        %v1880 = vmax.f32 %v1864, 0.0
        %v1881 = vmax.f32 %v1865, 0.0
        %v1882 = vmax.f32 %v1866, 0.0
        %v1883 = vmax.f32 %v1867, 0.0
        %v1884 = vmax.f32 %v1868, 0.0
        %v1885 = vmax.f32 %v1869, 0.0
        %v1886 = vmax.f32 %v1870, 0.0
        %v1887 = vmax.f32 %v1871, 0.0
        %v1888 = vmax.f32 %v1872, 0.0
        %v1889 = vmax.f32 %v1873, 0.0
        %v1890 = vmax.f32 %v1874, 0.0
        %v1891 = vmax.f32 %v1875, 0.0
        %v1892 = vmax.f32 %v1876, 0.0
        %v1893 = vmax.f32 %v1877, 0.0
        %v1894 = vmax.f32 %v1878, 0.0
        %v1895 = vld [vmem:[%s7] sm:$0x1]
        %v1896 = vrot.slane %v1879, 7
        %v1897 = vrot.slane %v1880, 7
        %v1898 = vrot.slane %v1881, 7
        %v1899 = vrot.slane %v1882, 7
        %v1900 = vrot.slane %v1883, 7
        %v1901 = vrot.slane %v1884, 7
        %v1902 = vrot.slane %v1885, 7
        %v1903 = vrot.slane %v1886, 7
        %v1904 = vrot.slane %v1887, 7
        %v1905 = vrot.slane %v1888, 7
        %v1906 = vrot.slane %v1889, 7
        %v1907 = vrot.slane %v1890, 7
        %v1908 = vrot.slane %v1891, 7
        %v1909 = vrot.slane %v1892, 7
        %v1910 = vrot.slane %v1893, 7
        %v1911 = vrot.slane %v1894, 7
        %v1912 = vsel %vm496, %v1904, %v1908
        %v1913 = vsel %vm496, %v1905, %v1909
        %v1914 = vsel %vm496, %v1906, %v1910
        %v1915 = vsel %vm496, %v1907, %v1911
        %v1916 = vsel %vm496, %v1900, %v1904
        %v1917 = vsel %vm496, %v1901, %v1905
        %v1918 = vsel %vm496, %v1902, %v1906
        %v1919 = vsel %vm496, %v1903, %v1907
        %v1920 = vsel %vm496, %v1896, %v1900
        %v1921 = vsel %vm496, %v1897, %v1901
        %v1922 = vsel %vm496, %v1898, %v1902
        %v1923 = vsel %vm496, %v1899, %v1903
        %v1924 = vsel %vm496, %v1908, %v1896
        %v1925 = vsel %vm496, %v1909, %v1897
        %v1926 = vsel %vm496, %v1910, %v1898
        %v1927 = vsel %vm496, %v1911, %v1899
        %v1928 = vsel %vm505, %v1924, 0.0
        %v1929 = vsel %vm505, %v1925, 0.0
        %v1930 = vsel %vm505, %v1926, 0.0
        %v1931 = vsel %vm505, %v1927, 0.0
        %v1932 = vsel %vm506, %v1920, 0.0
        %v1933 = vsel %vm506, %v1921, 0.0
        %v1934 = vsel %vm506, %v1922, 0.0
        %v1935 = vsel %vm506, %v1923, 0.0
        %v1936 = vsel %vm507, %v1916, 0.0
        %v1937 = vsel %vm507, %v1917, 0.0
        %v1938 = vsel %vm507, %v1918, 0.0
        %v1939 = vsel %vm507, %v1919, 0.0
        %v1940 = vsel %vm508, %v1912, 0.0
        %v1941 = vsel %vm508, %v1913, 0.0
        %v1942 = vsel %vm508, %v1914, 0.0
        %v1943 = vsel %vm508, %v1915, 0.0
        %v1944 = vrot.slane %v1879, 1
        %v1945 = vrot.slane %v1880, 1
        %v1946 = vrot.slane %v1881, 1
        %v1947 = vrot.slane %v1882, 1
        %v1948 = vrot.slane %v1883, 1
        %v1949 = vrot.slane %v1884, 1
        %v1950 = vrot.slane %v1885, 1
        %v1951 = vrot.slane %v1886, 1
        %v1952 = vrot.slane %v1887, 1
        %v1953 = vrot.slane %v1888, 1
        %v1954 = vrot.slane %v1889, 1
        %v1955 = vrot.slane %v1890, 1
        %v1956 = vrot.slane %v1891, 1
        %v1957 = vrot.slane %v1892, 1
        %v1958 = vrot.slane %v1893, 1
        %v1959 = vrot.slane %v1894, 1
        %v1960 = vsel %vm517, %v1952, %v1956
        %v1961 = vsel %vm517, %v1953, %v1957
        %v1962 = vsel %vm517, %v1954, %v1958
        %v1963 = vsel %vm517, %v1955, %v1959
        %v1964 = vsel %vm517, %v1948, %v1952
        %v1965 = vsel %vm517, %v1949, %v1953
        %v1966 = vsel %vm517, %v1950, %v1954
        %v1967 = vsel %vm517, %v1951, %v1955
        %v1968 = vsel %vm517, %v1944, %v1948
        %v1969 = vsel %vm517, %v1945, %v1949
        %v1970 = vsel %vm517, %v1946, %v1950
        %v1971 = vsel %vm517, %v1947, %v1951
        %v1972 = vsel %vm517, %v1956, %v1944
        %v1973 = vsel %vm517, %v1957, %v1945
        %v1974 = vsel %vm517, %v1958, %v1946
        %v1975 = vsel %vm517, %v1959, %v1947
        %v1976 = vsel %vm526, %v1968, 0.0
        %v1977 = vsel %vm526, %v1969, 0.0
        %v1978 = vsel %vm526, %v1970, 0.0
        %v1979 = vsel %vm526, %v1971, 0.0
        %v1980 = vsel %vm527, %v1964, 0.0
        %v1981 = vsel %vm527, %v1965, 0.0
        %v1982 = vsel %vm527, %v1966, 0.0
        %v1983 = vsel %vm527, %v1967, 0.0
        %v1984 = vsel %vm528, %v1960, 0.0
        %v1985 = vsel %vm528, %v1961, 0.0
        %v1986 = vsel %vm528, %v1962, 0.0
        %v1987 = vsel %vm528, %v1963, 0.0
        %v1988 = vsel %vm529, %v1972, 0.0
        %v1989 = vsel %vm529, %v1973, 0.0
        %v1990 = vsel %vm529, %v1974, 0.0
        %v1991 = vsel %vm529, %v1975, 0.0
        %v1992 = vpack.c.bf16 %v1932, %v1928
        %v1993 = vpack.c.bf16 %v1933, %v1929
        %v1994 = vpack.c.bf16 %v1934, %v1930
        %v1995 = vpack.c.bf16 %v1935, %v1931
        %v1996 = vpack.c.bf16 %v1940, %v1936
        %v1997 = vpack.c.bf16 %v1941, %v1937
        %v1998 = vpack.c.bf16 %v1942, %v1938
        %v1999 = vpack.c.bf16 %v1943, %v1939
        %v2000 = vld [vmem:[%s6] sm:$0xf]
        %v2001 = vld [vmem:[%s6 + $0x4] sm:$0xf]
        %v2002 = vld [vmem:[%s6 + $0x8] sm:$0xf]
        %v2003 = vld [vmem:[%s6 + $0xc] sm:$0xf]
        %v2004 = vld [vmem:[%s6 + $0x10] sm:$0xf]
        %v2005 = vld [vmem:[%s6 + $0x14] sm:$0xf]
        %v2006 = vld [vmem:[%s6 + $0x18] sm:$0xf]
        %v2007 = vld [vmem:[%s6 + $0x1c] sm:$0xf]
        %v2008 = vld [vmem:[%s6 + $0x20] sm:$0xf]
        %v2009 = vld [vmem:[%s6 + $0x24] sm:$0xf]
        %v2010 = vld [vmem:[%s6 + $0x28] sm:$0xf]
        %v2011 = vld [vmem:[%s6 + $0x2c] sm:$0xf]
        %v2012 = vld [vmem:[%s6 + $0x30] sm:$0xf]
        %v2013 = vld [vmem:[%s6 + $0x34] sm:$0xf]
        %v2014 = vld [vmem:[%s6 + $0x38] sm:$0xf]
        %v2015 = vld [vmem:[%s6 + $0x3c] sm:$0xf]
        %v2016 = vld [vmem:[%s6 + $0x40] sm:$0xf]
        %v2017 = vld [vmem:[%s6 + $0x44] sm:$0xf]
        %v2018 = vld [vmem:[%s6 + $0x48] sm:$0xf]
        %v2019 = vld [vmem:[%s6 + $0x4c] sm:$0xf]
        %v2020 = vld [vmem:[%s6 + $0x50] sm:$0xf]
        %v2021 = vld [vmem:[%s6 + $0x54] sm:$0xf]
        %v2022 = vld [vmem:[%s6 + $0x58] sm:$0xf]
        %v2023 = vld [vmem:[%s6 + $0x5c] sm:$0xf]
        %v2024 = vld [vmem:[%s6 + $0x60] sm:$0xf]
        %v2025 = vld [vmem:[%s6 + $0x64] sm:$0xf]
        %v2026 = vld [vmem:[%s6 + $0x68] sm:$0xf]
        %v2027 = vld [vmem:[%s6 + $0x6c] sm:$0xf]
        %v2028 = vld [vmem:[%s6 + $0x70] sm:$0xf]
        %v2029 = vld [vmem:[%s6 + $0x74] sm:$0xf]
        %v2030 = vld [vmem:[%s6 + $0x78] sm:$0xf]
        %v2031 = vld [vmem:[%s6 + $0x7c] sm:$0xf]
        %v2032 = vld [vmem:[%s6 + $0x80] sm:$0xf]
        %v2033 = vld [vmem:[%s6 + $0x84] sm:$0xf]
        %v2034 = vld [vmem:[%s6 + $0x88] sm:$0xf]
        %v2035 = vld [vmem:[%s6 + $0x8c] sm:$0xf]
        %v2036 = vld [vmem:[%s6 + $0x90] sm:$0xf]
        %v2037 = vld [vmem:[%s6 + $0x94] sm:$0xf]
        %v2038 = vld [vmem:[%s6 + $0x98] sm:$0xf]
        %v2039 = vld [vmem:[%s6 + $0x9c] sm:$0xf]
        %v2040 = vld [vmem:[%s6 + $0xa0] sm:$0xf]
        %v2041 = vld [vmem:[%s6 + $0xa4] sm:$0xf]
        %v2042 = vld [vmem:[%s6 + $0xa8] sm:$0xf]
        %v2043 = vld [vmem:[%s6 + $0xac] sm:$0xf]
        %v2044 = vld [vmem:[%s6 + $0xb0] sm:$0xf]
        %v2045 = vld [vmem:[%s6 + $0xb4] sm:$0xf]
        %v2046 = vld [vmem:[%s6 + $0xb8] sm:$0xf]
        %v2047 = vld [vmem:[%s6 + $0xbc] sm:$0xf]
        %v2048 = vld [vmem:[%s6 + $0xc0] sm:$0xf]
        %v2049 = vld [vmem:[%s6 + $0xc4] sm:$0xf]
        %v2050 = vld [vmem:[%s6 + $0xc8] sm:$0xf]
        %v2051 = vld [vmem:[%s6 + $0xcc] sm:$0xf]
        %v2052 = vld [vmem:[%s6 + $0xd0] sm:$0xf]
        %v2053 = vld [vmem:[%s6 + $0xd4] sm:$0xf]
        %v2054 = vld [vmem:[%s6 + $0xd8] sm:$0xf]
        %v2055 = vld [vmem:[%s6 + $0xdc] sm:$0xf]
        %v2056 = vld [vmem:[%s6 + $0xe0] sm:$0xf]
        %v2057 = vld [vmem:[%s6 + $0xe4] sm:$0xf]
        %v2058 = vld [vmem:[%s6 + $0xe8] sm:$0xf]
        %v2059 = vld [vmem:[%s6 + $0xec] sm:$0xf]
        %v2060 = vld [vmem:[%s6 + $0xf0] sm:$0xf]
        %v2061 = vld [vmem:[%s6 + $0xf4] sm:$0xf]
        %v2062 = vld [vmem:[%s6 + $0xf8] sm:$0xf]
        %v2063 = vld [vmem:[%s6 + $0xfc] sm:$0xf]
        %v2064 = vpack.c.bf16 %v1883, %v1879
        %v2065 = vpack.c.bf16 %v1884, %v1880
        %v2066 = vpack.c.bf16 %v1885, %v1881
        %v2067 = vpack.c.bf16 %v1886, %v1882
        %v2068 = vpack.c.bf16 %v1891, %v1887
        %v2069 = vpack.c.bf16 %v1892, %v1888
        %v2070 = vpack.c.bf16 %v1893, %v1889
        %v2071 = vpack.c.bf16 %v1894, %v1890
        %s2072 = scalar_lea.vmem %s6, 256
        %v2073 = vld [vmem:[%s2072] sm:$0xf]
        %v2074 = vld [vmem:[%s2072 + $0x4] sm:$0xf]
        %v2075 = vld [vmem:[%s2072 + $0x8] sm:$0xf]
        %v2076 = vld [vmem:[%s2072 + $0xc] sm:$0xf]
        %v2077 = vld [vmem:[%s2072 + $0x10] sm:$0xf]
        %v2078 = vld [vmem:[%s2072 + $0x14] sm:$0xf]
        %v2079 = vld [vmem:[%s2072 + $0x18] sm:$0xf]
        %v2080 = vld [vmem:[%s2072 + $0x1c] sm:$0xf]
        %v2081 = vld [vmem:[%s2072 + $0x20] sm:$0xf]
        %v2082 = vld [vmem:[%s2072 + $0x24] sm:$0xf]
        %v2083 = vld [vmem:[%s2072 + $0x28] sm:$0xf]
        %v2084 = vld [vmem:[%s2072 + $0x2c] sm:$0xf]
        %v2085 = vld [vmem:[%s2072 + $0x30] sm:$0xf]
        %v2086 = vld [vmem:[%s2072 + $0x34] sm:$0xf]
        %v2087 = vld [vmem:[%s2072 + $0x38] sm:$0xf]
        %v2088 = vld [vmem:[%s2072 + $0x3c] sm:$0xf]
        %v2089 = vld [vmem:[%s2072 + $0x40] sm:$0xf]
        %v2090 = vld [vmem:[%s2072 + $0x44] sm:$0xf]
        %v2091 = vld [vmem:[%s2072 + $0x48] sm:$0xf]
        %v2092 = vld [vmem:[%s2072 + $0x4c] sm:$0xf]
        %v2093 = vld [vmem:[%s2072 + $0x50] sm:$0xf]
        %v2094 = vld [vmem:[%s2072 + $0x54] sm:$0xf]
        %v2095 = vld [vmem:[%s2072 + $0x58] sm:$0xf]
        %v2096 = vld [vmem:[%s2072 + $0x5c] sm:$0xf]
        %v2097 = vld [vmem:[%s2072 + $0x60] sm:$0xf]
        %v2098 = vld [vmem:[%s2072 + $0x64] sm:$0xf]
        %v2099 = vld [vmem:[%s2072 + $0x68] sm:$0xf]
        %v2100 = vld [vmem:[%s2072 + $0x6c] sm:$0xf]
        %v2101 = vld [vmem:[%s2072 + $0x70] sm:$0xf]
        %v2102 = vld [vmem:[%s2072 + $0x74] sm:$0xf]
        %v2103 = vld [vmem:[%s2072 + $0x78] sm:$0xf]
        %v2104 = vld [vmem:[%s2072 + $0x7c] sm:$0xf]
        %v2105 = vld [vmem:[%s2072 + $0x80] sm:$0xf]
        %v2106 = vld [vmem:[%s2072 + $0x84] sm:$0xf]
        %v2107 = vld [vmem:[%s2072 + $0x88] sm:$0xf]
        %v2108 = vld [vmem:[%s2072 + $0x8c] sm:$0xf]
        %v2109 = vld [vmem:[%s2072 + $0x90] sm:$0xf]
        %v2110 = vld [vmem:[%s2072 + $0x94] sm:$0xf]
        %v2111 = vld [vmem:[%s2072 + $0x98] sm:$0xf]
        %v2112 = vld [vmem:[%s2072 + $0x9c] sm:$0xf]
        %v2113 = vld [vmem:[%s2072 + $0xa0] sm:$0xf]
        %v2114 = vld [vmem:[%s2072 + $0xa4] sm:$0xf]
        %v2115 = vld [vmem:[%s2072 + $0xa8] sm:$0xf]
        %v2116 = vld [vmem:[%s2072 + $0xac] sm:$0xf]
        %v2117 = vld [vmem:[%s2072 + $0xb0] sm:$0xf]
        %v2118 = vld [vmem:[%s2072 + $0xb4] sm:$0xf]
        %v2119 = vld [vmem:[%s2072 + $0xb8] sm:$0xf]
        %v2120 = vld [vmem:[%s2072 + $0xbc] sm:$0xf]
        %v2121 = vld [vmem:[%s2072 + $0xc0] sm:$0xf]
        %v2122 = vld [vmem:[%s2072 + $0xc4] sm:$0xf]
        %v2123 = vld [vmem:[%s2072 + $0xc8] sm:$0xf]
        %v2124 = vld [vmem:[%s2072 + $0xcc] sm:$0xf]
        %v2125 = vld [vmem:[%s2072 + $0xd0] sm:$0xf]
        %v2126 = vld [vmem:[%s2072 + $0xd4] sm:$0xf]
        %v2127 = vld [vmem:[%s2072 + $0xd8] sm:$0xf]
        %v2128 = vld [vmem:[%s2072 + $0xdc] sm:$0xf]
        %v2129 = vld [vmem:[%s2072 + $0xe0] sm:$0xf]
        %v2130 = vld [vmem:[%s2072 + $0xe4] sm:$0xf]
        %v2131 = vld [vmem:[%s2072 + $0xe8] sm:$0xf]
        %v2132 = vld [vmem:[%s2072 + $0xec] sm:$0xf]
        %v2133 = vld [vmem:[%s2072 + $0xf0] sm:$0xf]
        %v2134 = vld [vmem:[%s2072 + $0xf4] sm:$0xf]
        %v2135 = vld [vmem:[%s2072 + $0xf8] sm:$0xf]
        %v2136 = vld [vmem:[%s2072 + $0xfc] sm:$0xf]
        %v2201 = vunpack.c.l.b16 %v2073
        %v2202 = vunpack.c.l.b16 %v2074
        %v2203 = vunpack.c.l.b16 %v2075
        %v2204 = vunpack.c.l.b16 %v2076
        %v2205 = vunpack.c.l.b16 %v2077
        %v2206 = vunpack.c.l.b16 %v2078
        %v2207 = vunpack.c.l.b16 %v2079
        %v2208 = vunpack.c.l.b16 %v2080
        %v2209 = vunpack.c.l.b16 %v2081
        %v2210 = vunpack.c.l.b16 %v2082
        %v2211 = vunpack.c.l.b16 %v2083
        %v2212 = vunpack.c.l.b16 %v2084
        %v2213 = vunpack.c.l.b16 %v2085
        %v2214 = vunpack.c.l.b16 %v2086
        %v2215 = vunpack.c.l.b16 %v2087
        %v2216 = vunpack.c.l.b16 %v2088
        %v2217 = vunpack.c.l.b16 %v2089
        %v2218 = vunpack.c.l.b16 %v2090
        %v2219 = vunpack.c.l.b16 %v2091
        %v2220 = vunpack.c.l.b16 %v2092
        %v2221 = vunpack.c.l.b16 %v2093
        %v2222 = vunpack.c.l.b16 %v2094
        %v2223 = vunpack.c.l.b16 %v2095
        %v2224 = vunpack.c.l.b16 %v2096
        %v2225 = vunpack.c.l.b16 %v2097
        %v2226 = vunpack.c.l.b16 %v2098
        %v2227 = vunpack.c.l.b16 %v2099
        %v2228 = vunpack.c.l.b16 %v2100
        %v2229 = vunpack.c.l.b16 %v2101
        %v2230 = vunpack.c.l.b16 %v2102
        %v2231 = vunpack.c.l.b16 %v2103
        %v2232 = vunpack.c.l.b16 %v2104
        %v2233 = vunpack.c.l.b16 %v2105
        %v2234 = vunpack.c.l.b16 %v2106
        %v2235 = vunpack.c.l.b16 %v2107
        %v2236 = vunpack.c.l.b16 %v2108
        %v2237 = vunpack.c.l.b16 %v2109
        %v2238 = vunpack.c.l.b16 %v2110
        %v2239 = vunpack.c.l.b16 %v2111
        %v2240 = vunpack.c.l.b16 %v2112
        %v2241 = vunpack.c.l.b16 %v2113
        %v2242 = vunpack.c.l.b16 %v2114
        %v2243 = vunpack.c.l.b16 %v2115
        %v2244 = vunpack.c.l.b16 %v2116
        %v2245 = vunpack.c.l.b16 %v2117
        %v2246 = vunpack.c.l.b16 %v2118
        %v2247 = vunpack.c.l.b16 %v2119
        %v2248 = vunpack.c.l.b16 %v2120
        %v2249 = vunpack.c.l.b16 %v2121
        %v2250 = vunpack.c.l.b16 %v2122
        %v2251 = vunpack.c.l.b16 %v2123
        %v2252 = vunpack.c.l.b16 %v2124
        %v2253 = vunpack.c.l.b16 %v2125
        %v2254 = vunpack.c.l.b16 %v2126
        %v2255 = vunpack.c.l.b16 %v2127
        %v2256 = vunpack.c.l.b16 %v2128
        %v2257 = vunpack.c.l.b16 %v2129
        %v2258 = vunpack.c.l.b16 %v2130
        %v2259 = vunpack.c.l.b16 %v2131
        %v2260 = vunpack.c.l.b16 %v2132
        %v2261 = vunpack.c.l.b16 %v2133
        %v2262 = vunpack.c.l.b16 %v2134
        %v2263 = vunpack.c.l.b16 %v2135
        %v2264 = vunpack.c.l.b16 %v2136
        %v2265 = vpack.c.b16 %v2202, %v2201
        %v2266 = vpack.c.b16 %v2204, %v2203
        %v2267 = vpack.c.b16 %v2206, %v2205
        %v2268 = vpack.c.b16 %v2208, %v2207
        %v2269 = vpack.c.b16 %v2210, %v2209
        %v2270 = vpack.c.b16 %v2212, %v2211
        %v2271 = vpack.c.b16 %v2214, %v2213
        %v2272 = vpack.c.b16 %v2216, %v2215
        %v2273 = vpack.c.b16 %v2218, %v2217
        %v2274 = vpack.c.b16 %v2220, %v2219
        %v2275 = vpack.c.b16 %v2222, %v2221
        %v2276 = vpack.c.b16 %v2224, %v2223
        %v2277 = vpack.c.b16 %v2226, %v2225
        %v2278 = vpack.c.b16 %v2228, %v2227
        %v2279 = vpack.c.b16 %v2230, %v2229
        %v2280 = vpack.c.b16 %v2232, %v2231
        %v2281 = vpack.c.b16 %v2234, %v2233
        %v2282 = vpack.c.b16 %v2236, %v2235
        %v2283 = vpack.c.b16 %v2238, %v2237
        %v2284 = vpack.c.b16 %v2240, %v2239
        %v2285 = vpack.c.b16 %v2242, %v2241
        %v2286 = vpack.c.b16 %v2244, %v2243
        %v2287 = vpack.c.b16 %v2246, %v2245
        %v2288 = vpack.c.b16 %v2248, %v2247
        %v2289 = vpack.c.b16 %v2250, %v2249
        %v2290 = vpack.c.b16 %v2252, %v2251
        %v2291 = vpack.c.b16 %v2254, %v2253
        %v2292 = vpack.c.b16 %v2256, %v2255
        %v2293 = vpack.c.b16 %v2258, %v2257
        %v2294 = vpack.c.b16 %v2260, %v2259
        %v2295 = vpack.c.b16 %v2262, %v2261
        %v2296 = vpack.c.b16 %v2264, %v2263
        %2329 = vmatprep.subr.bf16.mxu0 0
        %2330 = vmatpush1.bf16.msra.mxu0 %v2272
        %2331 = vmatprep.subr.bf16.mxu0 0
        %2332 = vmatpush1.bf16.msra.mxu0 %v2271
        %2333 = vmatprep.subr.bf16.mxu0 0
        %2334 = vmatpush1.bf16.msra.mxu0 %v2270
        %2335 = vmatprep.subr.bf16.mxu0 0
        %2336 = vmatpush1.bf16.msra.mxu0 %v2269
        %2337 = vmatprep.subr.bf16.mxu0 0
        %2338 = vmatpush1.bf16.msra.mxu0 %v2268
        %2339 = vmatprep.subr.bf16.mxu0 0
        %2340 = vmatpush1.bf16.msra.mxu0 %v2267
        %2341 = vmatprep.subr.bf16.mxu0 0
        %2342 = vmatpush1.bf16.msra.mxu0 %v2266
        %2343 = vmatprep.subr.bf16.mxu0 0
        %2344 = vmatpush1.bf16.msra.mxu0 %v2265
        %2345 = vmatprep.subr.bf16.mxu0 0
        %2346 = vmatpush2.bf16.msra.mxu0 %v2280
        %2347 = vmatprep.subr.bf16.mxu0 0
        %2348 = vmatpush2.bf16.msra.mxu0 %v2279
        %2349 = vmatprep.subr.bf16.mxu0 0
        %2350 = vmatpush2.bf16.msra.mxu0 %v2278
        %2351 = vmatprep.subr.bf16.mxu0 0
        %2352 = vmatpush2.bf16.msra.mxu0 %v2277
        %2353 = vmatprep.subr.bf16.mxu0 0
        %2354 = vmatpush2.bf16.msra.mxu0 %v2276
        %2355 = vmatprep.subr.bf16.mxu0 0
        %2356 = vmatpush2.bf16.msra.mxu0 %v2275
        %2357 = vmatprep.subr.bf16.mxu0 0
        %2358 = vmatpush2.bf16.msra.mxu0 %v2274
        %2359 = vmatprep.subr.bf16.mxu0 0
        %2360 = vmatpush2.bf16.msra.mxu0 %v2273
        %2361 = vmatprep.mubr.bf16.mxu0 %v2065
        %2362 = vmatmul.mubr.bf16.gmra.mxu0 %v2064
        %v2363 = vpop.f32.mrf.mxu0
        %v2364 = vadd.f32 0.0, %v2363
        %v2365 = vpop.f32.mrf.mxu0
        %v2366 = vpop.f32.mrf.mxu0
        %v2367 = vadd.f32 0.0, %v2366
        %v2368 = vpop.f32.mrf.mxu0
        %2369 = vmatprep.mubr.bf16.mxu0 %v2069
        %2370 = vmatmul.mubr.bf16.gmra.mxu0 %v2068
        %v2371 = vpop.f32.mrf.mxu0
        %v2372 = vadd.f32 0.0, %v2371
        %v2373 = vpop.f32.mrf.mxu0
        %v2374 = vpop.f32.mrf.mxu0
        %v2375 = vadd.f32 0.0, %v2374
        %v2376 = vpop.f32.mrf.mxu0
        %2377 = vdwg.mxu0
        %2378 = vmatprep.subr.bf16.mxu0 0
        %2379 = vmatpush1.bf16.msra.mxu0 %v2288
        %2380 = vmatprep.subr.bf16.mxu0 0
        %2381 = vmatpush1.bf16.msra.mxu0 %v2287
        %2382 = vmatprep.subr.bf16.mxu0 0
        %2383 = vmatpush1.bf16.msra.mxu0 %v2286
        %2384 = vmatprep.subr.bf16.mxu0 0
        %2385 = vmatpush1.bf16.msra.mxu0 %v2285
        %2386 = vmatprep.subr.bf16.mxu0 0
        %2387 = vmatpush1.bf16.msra.mxu0 %v2284
        %2388 = vmatprep.subr.bf16.mxu0 0
        %2389 = vmatpush1.bf16.msra.mxu0 %v2283
        %2390 = vmatprep.subr.bf16.mxu0 0
        %2391 = vmatpush1.bf16.msra.mxu0 %v2282
        %2392 = vmatprep.subr.bf16.mxu0 0
        %2393 = vmatpush1.bf16.msra.mxu0 %v2281
        %2394 = vmatprep.subr.bf16.mxu0 0
        %2395 = vmatpush2.bf16.msra.mxu0 %v2296
        %2396 = vmatprep.subr.bf16.mxu0 0
        %2397 = vmatpush2.bf16.msra.mxu0 %v2295
        %2398 = vmatprep.subr.bf16.mxu0 0
        %2399 = vmatpush2.bf16.msra.mxu0 %v2294
        %2400 = vmatprep.subr.bf16.mxu0 0
        %2401 = vmatpush2.bf16.msra.mxu0 %v2293
        %2402 = vmatprep.subr.bf16.mxu0 0
        %2403 = vmatpush2.bf16.msra.mxu0 %v2292
        %2404 = vmatprep.subr.bf16.mxu0 0
        %2405 = vmatpush2.bf16.msra.mxu0 %v2291
        %2406 = vmatprep.subr.bf16.mxu0 0
        %2407 = vmatpush2.bf16.msra.mxu0 %v2290
        %2408 = vmatprep.subr.bf16.mxu0 0
        %2409 = vmatpush2.bf16.msra.mxu0 %v2289
        %2410 = vmatprep.mubr.bf16.mxu0 %v2067
        %2411 = vmatmul.mubr.bf16.gmra.mxu0 %v2066
        %v2412 = vpop.f32.mrf.mxu0
        %v2413 = vadd.f32 %v2364, %v2412
        %v2414 = vpop.f32.mrf.mxu0
        %v2415 = vpop.f32.mrf.mxu0
        %v2416 = vadd.f32 %v2367, %v2415
        %v2417 = vpop.f32.mrf.mxu0
        %2418 = vmatprep.mubr.bf16.mxu0 %v2071
        %2419 = vmatmul.mubr.bf16.gmra.mxu0 %v2070
        %v2420 = vpop.f32.mrf.mxu0
        %v2421 = vadd.f32 %v2372, %v2420
        %v2422 = vpop.f32.mrf.mxu0
        %v2423 = vpop.f32.mrf.mxu0
        %v2424 = vadd.f32 %v2375, %v2423
        %v2425 = vpop.f32.mrf.mxu0
        %2426 = vdwg.mxu0
        %v2491 = vunpack.c.l.b16 %v2000
        %v2492 = vunpack.c.l.b16 %v2001
        %v2493 = vunpack.c.l.b16 %v2002
        %v2494 = vunpack.c.l.b16 %v2003
        %v2495 = vunpack.c.l.b16 %v2004
        %v2496 = vunpack.c.l.b16 %v2005
        %v2497 = vunpack.c.l.b16 %v2006
        %v2498 = vunpack.c.l.b16 %v2007
        %v2499 = vunpack.c.l.b16 %v2008
        %v2500 = vunpack.c.l.b16 %v2009
        %v2501 = vunpack.c.l.b16 %v2010
        %v2502 = vunpack.c.l.b16 %v2011
        %v2503 = vunpack.c.l.b16 %v2012
        %v2504 = vunpack.c.l.b16 %v2013
        %v2505 = vunpack.c.l.b16 %v2014
        %v2506 = vunpack.c.l.b16 %v2015
        %v2507 = vunpack.c.l.b16 %v2016
        %v2508 = vunpack.c.l.b16 %v2017
        %v2509 = vunpack.c.l.b16 %v2018
        %v2510 = vunpack.c.l.b16 %v2019
        %v2511 = vunpack.c.l.b16 %v2020
        %v2512 = vunpack.c.l.b16 %v2021
        %v2513 = vunpack.c.l.b16 %v2022
        %v2514 = vunpack.c.l.b16 %v2023
        %v2515 = vunpack.c.l.b16 %v2024
        %v2516 = vunpack.c.l.b16 %v2025
        %v2517 = vunpack.c.l.b16 %v2026
        %v2518 = vunpack.c.l.b16 %v2027
        %v2519 = vunpack.c.l.b16 %v2028
        %v2520 = vunpack.c.l.b16 %v2029
        %v2521 = vunpack.c.l.b16 %v2030
        %v2522 = vunpack.c.l.b16 %v2031
        %v2523 = vunpack.c.l.b16 %v2032
        %v2524 = vunpack.c.l.b16 %v2033
        %v2525 = vunpack.c.l.b16 %v2034
        %v2526 = vunpack.c.l.b16 %v2035
        %v2527 = vunpack.c.l.b16 %v2036
        %v2528 = vunpack.c.l.b16 %v2037
        %v2529 = vunpack.c.l.b16 %v2038
        %v2530 = vunpack.c.l.b16 %v2039
        %v2531 = vunpack.c.l.b16 %v2040
        %v2532 = vunpack.c.l.b16 %v2041
        %v2533 = vunpack.c.l.b16 %v2042
        %v2534 = vunpack.c.l.b16 %v2043
        %v2535 = vunpack.c.l.b16 %v2044
        %v2536 = vunpack.c.l.b16 %v2045
        %v2537 = vunpack.c.l.b16 %v2046
        %v2538 = vunpack.c.l.b16 %v2047
        %v2539 = vunpack.c.l.b16 %v2048
        %v2540 = vunpack.c.l.b16 %v2049
        %v2541 = vunpack.c.l.b16 %v2050
        %v2542 = vunpack.c.l.b16 %v2051
        %v2543 = vunpack.c.l.b16 %v2052
        %v2544 = vunpack.c.l.b16 %v2053
        %v2545 = vunpack.c.l.b16 %v2054
        %v2546 = vunpack.c.l.b16 %v2055
        %v2547 = vunpack.c.l.b16 %v2056
        %v2548 = vunpack.c.l.b16 %v2057
        %v2549 = vunpack.c.l.b16 %v2058
        %v2550 = vunpack.c.l.b16 %v2059
        %v2551 = vunpack.c.l.b16 %v2060
        %v2552 = vunpack.c.l.b16 %v2061
        %v2553 = vunpack.c.l.b16 %v2062
        %v2554 = vunpack.c.l.b16 %v2063
        %v2555 = vpack.c.b16 %v2492, %v2491
        %v2556 = vpack.c.b16 %v2494, %v2493
        %v2557 = vpack.c.b16 %v2496, %v2495
        %v2558 = vpack.c.b16 %v2498, %v2497
        %v2559 = vpack.c.b16 %v2500, %v2499
        %v2560 = vpack.c.b16 %v2502, %v2501
        %v2561 = vpack.c.b16 %v2504, %v2503
        %v2562 = vpack.c.b16 %v2506, %v2505
        %v2563 = vpack.c.b16 %v2508, %v2507
        %v2564 = vpack.c.b16 %v2510, %v2509
        %v2565 = vpack.c.b16 %v2512, %v2511
        %v2566 = vpack.c.b16 %v2514, %v2513
        %v2567 = vpack.c.b16 %v2516, %v2515
        %v2568 = vpack.c.b16 %v2518, %v2517
        %v2569 = vpack.c.b16 %v2520, %v2519
        %v2570 = vpack.c.b16 %v2522, %v2521
        %v2571 = vpack.c.b16 %v2524, %v2523
        %v2572 = vpack.c.b16 %v2526, %v2525
        %v2573 = vpack.c.b16 %v2528, %v2527
        %v2574 = vpack.c.b16 %v2530, %v2529
        %v2575 = vpack.c.b16 %v2532, %v2531
        %v2576 = vpack.c.b16 %v2534, %v2533
        %v2577 = vpack.c.b16 %v2536, %v2535
        %v2578 = vpack.c.b16 %v2538, %v2537
        %v2579 = vpack.c.b16 %v2540, %v2539
        %v2580 = vpack.c.b16 %v2542, %v2541
        %v2581 = vpack.c.b16 %v2544, %v2543
        %v2582 = vpack.c.b16 %v2546, %v2545
        %v2583 = vpack.c.b16 %v2548, %v2547
        %v2584 = vpack.c.b16 %v2550, %v2549
        %v2585 = vpack.c.b16 %v2552, %v2551
        %v2586 = vpack.c.b16 %v2554, %v2553
        %2619 = vmatprep.subr.bf16.mxu0 0
        %2620 = vmatpush1.bf16.msra.mxu0 %v2562
        %2621 = vmatprep.subr.bf16.mxu0 0
        %2622 = vmatpush1.bf16.msra.mxu0 %v2561
        %2623 = vmatprep.subr.bf16.mxu0 0
        %2624 = vmatpush1.bf16.msra.mxu0 %v2560
        %2625 = vmatprep.subr.bf16.mxu0 0
        %2626 = vmatpush1.bf16.msra.mxu0 %v2559
        %2627 = vmatprep.subr.bf16.mxu0 0
        %2628 = vmatpush1.bf16.msra.mxu0 %v2558
        %2629 = vmatprep.subr.bf16.mxu0 0
        %2630 = vmatpush1.bf16.msra.mxu0 %v2557
        %2631 = vmatprep.subr.bf16.mxu0 0
        %2632 = vmatpush1.bf16.msra.mxu0 %v2556
        %2633 = vmatprep.subr.bf16.mxu0 0
        %2634 = vmatpush1.bf16.msra.mxu0 %v2555
        %2635 = vmatprep.subr.bf16.mxu0 0
        %2636 = vmatpush2.bf16.msra.mxu0 %v2570
        %2637 = vmatprep.subr.bf16.mxu0 0
        %2638 = vmatpush2.bf16.msra.mxu0 %v2569
        %2639 = vmatprep.subr.bf16.mxu0 0
        %2640 = vmatpush2.bf16.msra.mxu0 %v2568
        %2641 = vmatprep.subr.bf16.mxu0 0
        %2642 = vmatpush2.bf16.msra.mxu0 %v2567
        %2643 = vmatprep.subr.bf16.mxu0 0
        %2644 = vmatpush2.bf16.msra.mxu0 %v2566
        %2645 = vmatprep.subr.bf16.mxu0 0
        %2646 = vmatpush2.bf16.msra.mxu0 %v2565
        %2647 = vmatprep.subr.bf16.mxu0 0
        %2648 = vmatpush2.bf16.msra.mxu0 %v2564
        %2649 = vmatprep.subr.bf16.mxu0 0
        %2650 = vmatpush2.bf16.msra.mxu0 %v2563
        %2651 = vmatprep.mubr.bf16.mxu0 %v1993
        %2652 = vmatmul.mubr.bf16.gmra.mxu0 %v1992
        %v2653 = vpop.f32.mrf.mxu0
        %v2654 = vadd.f32 %v2413, %v2653
        %v2655 = vpop.f32.mrf.mxu0
        %v2656 = vpop.f32.mrf.mxu0
        %v2657 = vadd.f32 %v2416, %v2656
        %v2658 = vpop.f32.mrf.mxu0
        %2659 = vmatprep.mubr.bf16.mxu0 %v1997
        %2660 = vmatmul.mubr.bf16.gmra.mxu0 %v1996
        %v2661 = vpop.f32.mrf.mxu0
        %v2662 = vadd.f32 %v2421, %v2661
        %v2663 = vpop.f32.mrf.mxu0
        %v2664 = vpop.f32.mrf.mxu0
        %v2665 = vadd.f32 %v2424, %v2664
        %v2666 = vpop.f32.mrf.mxu0
        %2667 = vdwg.mxu0
        %2668 = vmatprep.subr.bf16.mxu0 0
        %2669 = vmatpush1.bf16.msra.mxu0 %v2578
        %2670 = vmatprep.subr.bf16.mxu0 0
        %2671 = vmatpush1.bf16.msra.mxu0 %v2577
        %2672 = vmatprep.subr.bf16.mxu0 0
        %2673 = vmatpush1.bf16.msra.mxu0 %v2576
        %2674 = vmatprep.subr.bf16.mxu0 0
        %2675 = vmatpush1.bf16.msra.mxu0 %v2575
        %2676 = vmatprep.subr.bf16.mxu0 0
        %2677 = vmatpush1.bf16.msra.mxu0 %v2574
        %2678 = vmatprep.subr.bf16.mxu0 0
        %2679 = vmatpush1.bf16.msra.mxu0 %v2573
        %2680 = vmatprep.subr.bf16.mxu0 0
        %2681 = vmatpush1.bf16.msra.mxu0 %v2572
        %2682 = vmatprep.subr.bf16.mxu0 0
        %2683 = vmatpush1.bf16.msra.mxu0 %v2571
        %2684 = vmatprep.subr.bf16.mxu0 0
        %2685 = vmatpush2.bf16.msra.mxu0 %v2586
        %2686 = vmatprep.subr.bf16.mxu0 0
        %2687 = vmatpush2.bf16.msra.mxu0 %v2585
        %2688 = vmatprep.subr.bf16.mxu0 0
        %2689 = vmatpush2.bf16.msra.mxu0 %v2584
        %2690 = vmatprep.subr.bf16.mxu0 0
        %2691 = vmatpush2.bf16.msra.mxu0 %v2583
        %2692 = vmatprep.subr.bf16.mxu0 0
        %2693 = vmatpush2.bf16.msra.mxu0 %v2582
        %2694 = vmatprep.subr.bf16.mxu0 0
        %2695 = vmatpush2.bf16.msra.mxu0 %v2581
        %2696 = vmatprep.subr.bf16.mxu0 0
        %2697 = vmatpush2.bf16.msra.mxu0 %v2580
        %2698 = vmatprep.subr.bf16.mxu0 0
        %2699 = vmatpush2.bf16.msra.mxu0 %v2579
        %2700 = vmatprep.mubr.bf16.mxu0 %v1995
        %2701 = vmatmul.mubr.bf16.gmra.mxu0 %v1994
        %v2702 = vpop.f32.mrf.mxu0
        %v2703 = vadd.f32 %v2654, %v2702
        %v2704 = vpop.f32.mrf.mxu0
        %v2705 = vpop.f32.mrf.mxu0
        %v2706 = vadd.f32 %v2657, %v2705
        %v2707 = vpop.f32.mrf.mxu0
        %2708 = vmatprep.mubr.bf16.mxu0 %v1999
        %2709 = vmatmul.mubr.bf16.gmra.mxu0 %v1998
        %v2710 = vpop.f32.mrf.mxu0
        %v2711 = vadd.f32 %v2662, %v2710
        %v2712 = vpop.f32.mrf.mxu0
        %v2713 = vpop.f32.mrf.mxu0
        %v2714 = vadd.f32 %v2665, %v2713
        %v2715 = vpop.f32.mrf.mxu0
        %2716 = vdwg.mxu0
        %v2717 = vpack.c.bf16 %v1980, %v1976
        %v2718 = vpack.c.bf16 %v1981, %v1977
        %v2719 = vpack.c.bf16 %v1982, %v1978
        %v2720 = vpack.c.bf16 %v1983, %v1979
        %v2721 = vpack.c.bf16 %v1988, %v1984
        %v2722 = vpack.c.bf16 %v1989, %v1985
        %v2723 = vpack.c.bf16 %v1990, %v1986
        %v2724 = vpack.c.bf16 %v1991, %v1987
        %s2725 = scalar_lea.vmem %s6, 512
        %v2726 = vld [vmem:[%s2725] sm:$0xf]
        %v2727 = vld [vmem:[%s2725 + $0x4] sm:$0xf]
        %v2728 = vld [vmem:[%s2725 + $0x8] sm:$0xf]
        %v2729 = vld [vmem:[%s2725 + $0xc] sm:$0xf]
        %v2730 = vld [vmem:[%s2725 + $0x10] sm:$0xf]
        %v2731 = vld [vmem:[%s2725 + $0x14] sm:$0xf]
        %v2732 = vld [vmem:[%s2725 + $0x18] sm:$0xf]
        %v2733 = vld [vmem:[%s2725 + $0x1c] sm:$0xf]
        %v2734 = vld [vmem:[%s2725 + $0x20] sm:$0xf]
        %v2735 = vld [vmem:[%s2725 + $0x24] sm:$0xf]
        %v2736 = vld [vmem:[%s2725 + $0x28] sm:$0xf]
        %v2737 = vld [vmem:[%s2725 + $0x2c] sm:$0xf]
        %v2738 = vld [vmem:[%s2725 + $0x30] sm:$0xf]
        %v2739 = vld [vmem:[%s2725 + $0x34] sm:$0xf]
        %v2740 = vld [vmem:[%s2725 + $0x38] sm:$0xf]
        %v2741 = vld [vmem:[%s2725 + $0x3c] sm:$0xf]
        %v2742 = vld [vmem:[%s2725 + $0x40] sm:$0xf]
        %v2743 = vld [vmem:[%s2725 + $0x44] sm:$0xf]
        %v2744 = vld [vmem:[%s2725 + $0x48] sm:$0xf]
        %v2745 = vld [vmem:[%s2725 + $0x4c] sm:$0xf]
        %v2746 = vld [vmem:[%s2725 + $0x50] sm:$0xf]
        %v2747 = vld [vmem:[%s2725 + $0x54] sm:$0xf]
        %v2748 = vld [vmem:[%s2725 + $0x58] sm:$0xf]
        %v2749 = vld [vmem:[%s2725 + $0x5c] sm:$0xf]
        %v2750 = vld [vmem:[%s2725 + $0x60] sm:$0xf]
        %v2751 = vld [vmem:[%s2725 + $0x64] sm:$0xf]
        %v2752 = vld [vmem:[%s2725 + $0x68] sm:$0xf]
        %v2753 = vld [vmem:[%s2725 + $0x6c] sm:$0xf]
        %v2754 = vld [vmem:[%s2725 + $0x70] sm:$0xf]
        %v2755 = vld [vmem:[%s2725 + $0x74] sm:$0xf]
        %v2756 = vld [vmem:[%s2725 + $0x78] sm:$0xf]
        %v2757 = vld [vmem:[%s2725 + $0x7c] sm:$0xf]
        %v2758 = vld [vmem:[%s2725 + $0x80] sm:$0xf]
        %v2759 = vld [vmem:[%s2725 + $0x84] sm:$0xf]
        %v2760 = vld [vmem:[%s2725 + $0x88] sm:$0xf]
        %v2761 = vld [vmem:[%s2725 + $0x8c] sm:$0xf]
        %v2762 = vld [vmem:[%s2725 + $0x90] sm:$0xf]
        %v2763 = vld [vmem:[%s2725 + $0x94] sm:$0xf]
        %v2764 = vld [vmem:[%s2725 + $0x98] sm:$0xf]
        %v2765 = vld [vmem:[%s2725 + $0x9c] sm:$0xf]
        %v2766 = vld [vmem:[%s2725 + $0xa0] sm:$0xf]
        %v2767 = vld [vmem:[%s2725 + $0xa4] sm:$0xf]
        %v2768 = vld [vmem:[%s2725 + $0xa8] sm:$0xf]
        %v2769 = vld [vmem:[%s2725 + $0xac] sm:$0xf]
        %v2770 = vld [vmem:[%s2725 + $0xb0] sm:$0xf]
        %v2771 = vld [vmem:[%s2725 + $0xb4] sm:$0xf]
        %v2772 = vld [vmem:[%s2725 + $0xb8] sm:$0xf]
        %v2773 = vld [vmem:[%s2725 + $0xbc] sm:$0xf]
        %v2774 = vld [vmem:[%s2725 + $0xc0] sm:$0xf]
        %v2775 = vld [vmem:[%s2725 + $0xc4] sm:$0xf]
        %v2776 = vld [vmem:[%s2725 + $0xc8] sm:$0xf]
        %v2777 = vld [vmem:[%s2725 + $0xcc] sm:$0xf]
        %v2778 = vld [vmem:[%s2725 + $0xd0] sm:$0xf]
        %v2779 = vld [vmem:[%s2725 + $0xd4] sm:$0xf]
        %v2780 = vld [vmem:[%s2725 + $0xd8] sm:$0xf]
        %v2781 = vld [vmem:[%s2725 + $0xdc] sm:$0xf]
        %v2782 = vld [vmem:[%s2725 + $0xe0] sm:$0xf]
        %v2783 = vld [vmem:[%s2725 + $0xe4] sm:$0xf]
        %v2784 = vld [vmem:[%s2725 + $0xe8] sm:$0xf]
        %v2785 = vld [vmem:[%s2725 + $0xec] sm:$0xf]
        %v2786 = vld [vmem:[%s2725 + $0xf0] sm:$0xf]
        %v2787 = vld [vmem:[%s2725 + $0xf4] sm:$0xf]
        %v2788 = vld [vmem:[%s2725 + $0xf8] sm:$0xf]
        %v2789 = vld [vmem:[%s2725 + $0xfc] sm:$0xf]
        %v2854 = vunpack.c.l.b16 %v2726
        %v2855 = vunpack.c.l.b16 %v2727
        %v2856 = vunpack.c.l.b16 %v2728
        %v2857 = vunpack.c.l.b16 %v2729
        %v2858 = vunpack.c.l.b16 %v2730
        %v2859 = vunpack.c.l.b16 %v2731
        %v2860 = vunpack.c.l.b16 %v2732
        %v2861 = vunpack.c.l.b16 %v2733
        %v2862 = vunpack.c.l.b16 %v2734
        %v2863 = vunpack.c.l.b16 %v2735
        %v2864 = vunpack.c.l.b16 %v2736
        %v2865 = vunpack.c.l.b16 %v2737
        %v2866 = vunpack.c.l.b16 %v2738
        %v2867 = vunpack.c.l.b16 %v2739
        %v2868 = vunpack.c.l.b16 %v2740
        %v2869 = vunpack.c.l.b16 %v2741
        %v2870 = vunpack.c.l.b16 %v2742
        %v2871 = vunpack.c.l.b16 %v2743
        %v2872 = vunpack.c.l.b16 %v2744
        %v2873 = vunpack.c.l.b16 %v2745
        %v2874 = vunpack.c.l.b16 %v2746
        %v2875 = vunpack.c.l.b16 %v2747
        %v2876 = vunpack.c.l.b16 %v2748
        %v2877 = vunpack.c.l.b16 %v2749
        %v2878 = vunpack.c.l.b16 %v2750
        %v2879 = vunpack.c.l.b16 %v2751
        %v2880 = vunpack.c.l.b16 %v2752
        %v2881 = vunpack.c.l.b16 %v2753
        %v2882 = vunpack.c.l.b16 %v2754
        %v2883 = vunpack.c.l.b16 %v2755
        %v2884 = vunpack.c.l.b16 %v2756
        %v2885 = vunpack.c.l.b16 %v2757
        %v2886 = vunpack.c.l.b16 %v2758
        %v2887 = vunpack.c.l.b16 %v2759
        %v2888 = vunpack.c.l.b16 %v2760
        %v2889 = vunpack.c.l.b16 %v2761
        %v2890 = vunpack.c.l.b16 %v2762
        %v2891 = vunpack.c.l.b16 %v2763
        %v2892 = vunpack.c.l.b16 %v2764
        %v2893 = vunpack.c.l.b16 %v2765
        %v2894 = vunpack.c.l.b16 %v2766
        %v2895 = vunpack.c.l.b16 %v2767
        %v2896 = vunpack.c.l.b16 %v2768
        %v2897 = vunpack.c.l.b16 %v2769
        %v2898 = vunpack.c.l.b16 %v2770
        %v2899 = vunpack.c.l.b16 %v2771
        %v2900 = vunpack.c.l.b16 %v2772
        %v2901 = vunpack.c.l.b16 %v2773
        %v2902 = vunpack.c.l.b16 %v2774
        %v2903 = vunpack.c.l.b16 %v2775
        %v2904 = vunpack.c.l.b16 %v2776
        %v2905 = vunpack.c.l.b16 %v2777
        %v2906 = vunpack.c.l.b16 %v2778
        %v2907 = vunpack.c.l.b16 %v2779
        %v2908 = vunpack.c.l.b16 %v2780
        %v2909 = vunpack.c.l.b16 %v2781
        %v2910 = vunpack.c.l.b16 %v2782
        %v2911 = vunpack.c.l.b16 %v2783
        %v2912 = vunpack.c.l.b16 %v2784
        %v2913 = vunpack.c.l.b16 %v2785
        %v2914 = vunpack.c.l.b16 %v2786
        %v2915 = vunpack.c.l.b16 %v2787
        %v2916 = vunpack.c.l.b16 %v2788
        %v2917 = vunpack.c.l.b16 %v2789
        %v2918 = vpack.c.b16 %v2855, %v2854
        %v2919 = vpack.c.b16 %v2857, %v2856
        %v2920 = vpack.c.b16 %v2859, %v2858
        %v2921 = vpack.c.b16 %v2861, %v2860
        %v2922 = vpack.c.b16 %v2863, %v2862
        %v2923 = vpack.c.b16 %v2865, %v2864
        %v2924 = vpack.c.b16 %v2867, %v2866
        %v2925 = vpack.c.b16 %v2869, %v2868
        %v2926 = vpack.c.b16 %v2871, %v2870
        %v2927 = vpack.c.b16 %v2873, %v2872
        %v2928 = vpack.c.b16 %v2875, %v2874
        %v2929 = vpack.c.b16 %v2877, %v2876
        %v2930 = vpack.c.b16 %v2879, %v2878
        %v2931 = vpack.c.b16 %v2881, %v2880
        %v2932 = vpack.c.b16 %v2883, %v2882
        %v2933 = vpack.c.b16 %v2885, %v2884
        %v2934 = vpack.c.b16 %v2887, %v2886
        %v2935 = vpack.c.b16 %v2889, %v2888
        %v2936 = vpack.c.b16 %v2891, %v2890
        %v2937 = vpack.c.b16 %v2893, %v2892
        %v2938 = vpack.c.b16 %v2895, %v2894
        %v2939 = vpack.c.b16 %v2897, %v2896
        %v2940 = vpack.c.b16 %v2899, %v2898
        %v2941 = vpack.c.b16 %v2901, %v2900
        %v2942 = vpack.c.b16 %v2903, %v2902
        %v2943 = vpack.c.b16 %v2905, %v2904
        %v2944 = vpack.c.b16 %v2907, %v2906
        %v2945 = vpack.c.b16 %v2909, %v2908
        %v2946 = vpack.c.b16 %v2911, %v2910
        %v2947 = vpack.c.b16 %v2913, %v2912
        %v2948 = vpack.c.b16 %v2915, %v2914
        %v2949 = vpack.c.b16 %v2917, %v2916
        %2982 = vmatprep.subr.bf16.mxu0 0
        %2983 = vmatpush1.bf16.msra.mxu0 %v2925
        %2984 = vmatprep.subr.bf16.mxu0 0
        %2985 = vmatpush1.bf16.msra.mxu0 %v2924
        %2986 = vmatprep.subr.bf16.mxu0 0
        %2987 = vmatpush1.bf16.msra.mxu0 %v2923
        %2988 = vmatprep.subr.bf16.mxu0 0
        %2989 = vmatpush1.bf16.msra.mxu0 %v2922
        %2990 = vmatprep.subr.bf16.mxu0 0
        %2991 = vmatpush1.bf16.msra.mxu0 %v2921
        %2992 = vmatprep.subr.bf16.mxu0 0
        %2993 = vmatpush1.bf16.msra.mxu0 %v2920
        %2994 = vmatprep.subr.bf16.mxu0 0
        %2995 = vmatpush1.bf16.msra.mxu0 %v2919
        %2996 = vmatprep.subr.bf16.mxu0 0
        %2997 = vmatpush1.bf16.msra.mxu0 %v2918
        %2998 = vmatprep.subr.bf16.mxu0 0
        %2999 = vmatpush2.bf16.msra.mxu0 %v2933
        %3000 = vmatprep.subr.bf16.mxu0 0
        %3001 = vmatpush2.bf16.msra.mxu0 %v2932
        %3002 = vmatprep.subr.bf16.mxu0 0
        %3003 = vmatpush2.bf16.msra.mxu0 %v2931
        %3004 = vmatprep.subr.bf16.mxu0 0
        %3005 = vmatpush2.bf16.msra.mxu0 %v2930
        %3006 = vmatprep.subr.bf16.mxu0 0
        %3007 = vmatpush2.bf16.msra.mxu0 %v2929
        %3008 = vmatprep.subr.bf16.mxu0 0
        %3009 = vmatpush2.bf16.msra.mxu0 %v2928
        %3010 = vmatprep.subr.bf16.mxu0 0
        %3011 = vmatpush2.bf16.msra.mxu0 %v2927
        %3012 = vmatprep.subr.bf16.mxu0 0
        %3013 = vmatpush2.bf16.msra.mxu0 %v2926
        %3014 = vmatprep.mubr.bf16.mxu0 %v2718
        %3015 = vmatmul.mubr.bf16.gmra.mxu0 %v2717
        %v3016 = vpop.f32.mrf.mxu0
        %v3017 = vadd.f32 0.0, %v3016
        %v3018 = vpop.f32.mrf.mxu0
        %v3019 = vpop.f32.mrf.mxu0
        %v3020 = vadd.f32 0.0, %v3019
        %v3021 = vpop.f32.mrf.mxu0
        %3022 = vmatprep.mubr.bf16.mxu0 %v2722
        %3023 = vmatmul.mubr.bf16.gmra.mxu0 %v2721
        %v3024 = vpop.f32.mrf.mxu0
        %v3025 = vadd.f32 0.0, %v3024
        %v3026 = vpop.f32.mrf.mxu0
        %v3027 = vpop.f32.mrf.mxu0
        %v3028 = vadd.f32 0.0, %v3027
        %v3029 = vpop.f32.mrf.mxu0
        %3030 = vdwg.mxu0
        %3031 = vmatprep.subr.bf16.mxu0 0
        %3032 = vmatpush1.bf16.msra.mxu0 %v2941
        %3033 = vmatprep.subr.bf16.mxu0 0
        %3034 = vmatpush1.bf16.msra.mxu0 %v2940
        %3035 = vmatprep.subr.bf16.mxu0 0
        %3036 = vmatpush1.bf16.msra.mxu0 %v2939
        %3037 = vmatprep.subr.bf16.mxu0 0
        %3038 = vmatpush1.bf16.msra.mxu0 %v2938
        %3039 = vmatprep.subr.bf16.mxu0 0
        %3040 = vmatpush1.bf16.msra.mxu0 %v2937
        %3041 = vmatprep.subr.bf16.mxu0 0
        %3042 = vmatpush1.bf16.msra.mxu0 %v2936
        %3043 = vmatprep.subr.bf16.mxu0 0
        %3044 = vmatpush1.bf16.msra.mxu0 %v2935
        %3045 = vmatprep.subr.bf16.mxu0 0
        %3046 = vmatpush1.bf16.msra.mxu0 %v2934
        %3047 = vmatprep.subr.bf16.mxu0 0
        %3048 = vmatpush2.bf16.msra.mxu0 %v2949
        %3049 = vmatprep.subr.bf16.mxu0 0
        %3050 = vmatpush2.bf16.msra.mxu0 %v2948
        %3051 = vmatprep.subr.bf16.mxu0 0
        %3052 = vmatpush2.bf16.msra.mxu0 %v2947
        %3053 = vmatprep.subr.bf16.mxu0 0
        %3054 = vmatpush2.bf16.msra.mxu0 %v2946
        %3055 = vmatprep.subr.bf16.mxu0 0
        %3056 = vmatpush2.bf16.msra.mxu0 %v2945
        %3057 = vmatprep.subr.bf16.mxu0 0
        %3058 = vmatpush2.bf16.msra.mxu0 %v2944
        %3059 = vmatprep.subr.bf16.mxu0 0
        %3060 = vmatpush2.bf16.msra.mxu0 %v2943
        %3061 = vmatprep.subr.bf16.mxu0 0
        %3062 = vmatpush2.bf16.msra.mxu0 %v2942
        %3063 = vmatprep.mubr.bf16.mxu0 %v2720
        %3064 = vmatmul.mubr.bf16.gmra.mxu0 %v2719
        %v3065 = vpop.f32.mrf.mxu0
        %v3066 = vadd.f32 %v3017, %v3065
        %v3067 = vpop.f32.mrf.mxu0
        %v3068 = vpop.f32.mrf.mxu0
        %v3069 = vadd.f32 %v3020, %v3068
        %v3070 = vpop.f32.mrf.mxu0
        %3071 = vmatprep.mubr.bf16.mxu0 %v2724
        %3072 = vmatmul.mubr.bf16.gmra.mxu0 %v2723
        %v3073 = vpop.f32.mrf.mxu0
        %v3074 = vadd.f32 %v3025, %v3073
        %v3075 = vpop.f32.mrf.mxu0
        %v3076 = vpop.f32.mrf.mxu0
        %v3077 = vadd.f32 %v3028, %v3076
        %v3078 = vpop.f32.mrf.mxu0
        %3079 = vdwg.mxu0
        %v3080 = vadd.f32 %v2703, %v3066
        %v3081 = vadd.f32 %v2706, %v3069
        %v3082 = vadd.f32 %v2711, %v3074
        %v3083 = vadd.f32 %v2714, %v3077
        %v3085 = vlaneseq
        %v3086 = vshrl.u32 %v3085, 7
        %v3087 = vsub.s32 0, %v3086
        %v3088 = vrot.slane %v1895, %v3087
        %v3090 = vadd.f32 %v3080, %v3088
        %v3091 = vadd.f32 %v3081, %v3088
        %v3092 = vadd.f32 %v3082, %v3088
        %v3093 = vadd.f32 %v3083, %v3088
        %v3094 = vmax.f32 %v3090, 0.0
        %v3095 = vmax.f32 %v3091, 0.0
        %v3096 = vmax.f32 %v3092, 0.0
        %v3097 = vmax.f32 %v3093, 0.0
        %v3098 = vld [vmem:[%s9] sm:$0x1]
        %v3099 = vrot.slane %v3094, 7
        %v3100 = vrot.slane %v3095, 7
        %v3101 = vrot.slane %v3096, 7
        %v3102 = vrot.slane %v3097, 7
        %v3103 = vsel %vm496, %v3101, %v3102
        %v3104 = vsel %vm496, %v3100, %v3101
        %v3105 = vsel %vm496, %v3099, %v3100
        %v3106 = vsel %vm496, %v3102, %v3099
        %v3107 = vsel %vm505, %v3106, 0.0
        %v3108 = vsel %vm506, %v3105, 0.0
        %v3109 = vsel %vm507, %v3104, 0.0
        %v3110 = vsel %vm508, %v3103, 0.0
        %v3111 = vrot.slane %v3094, 1
        %v3112 = vrot.slane %v3095, 1
        %v3113 = vrot.slane %v3096, 1
        %v3114 = vrot.slane %v3097, 1
        %v3115 = vsel %vm517, %v3113, %v3114
        %v3116 = vsel %vm517, %v3112, %v3113
        %v3117 = vsel %vm517, %v3111, %v3112
        %v3118 = vsel %vm517, %v3114, %v3111
        %v3119 = vsel %vm526, %v3117, 0.0
        %v3120 = vsel %vm527, %v3116, 0.0
        %v3121 = vsel %vm528, %v3115, 0.0
        %v3122 = vsel %vm529, %v3118, 0.0
        %v3123 = vpack.c.bf16 %v3108, %v3107
        %v3124 = vpack.c.bf16 %v3110, %v3109
        %v3125 = vld [vmem:[#allocation6] sm:$0xf]
        %v3126 = vld [vmem:[#allocation6 + $0x4] sm:$0xf]
        %v3127 = vld [vmem:[#allocation6 + $0x8] sm:$0xf]
        %v3128 = vld [vmem:[#allocation6 + $0xc] sm:$0xf]
        %v3129 = vld [vmem:[#allocation6 + $0x10] sm:$0xf]
        %v3130 = vld [vmem:[#allocation6 + $0x14] sm:$0xf]
        %v3131 = vld [vmem:[#allocation6 + $0x18] sm:$0xf]
        %v3132 = vld [vmem:[#allocation6 + $0x1c] sm:$0xf]
        %v3133 = vld [vmem:[#allocation6 + $0x20] sm:$0xf]
        %v3134 = vld [vmem:[#allocation6 + $0x24] sm:$0xf]
        %v3135 = vld [vmem:[#allocation6 + $0x28] sm:$0xf]
        %v3136 = vld [vmem:[#allocation6 + $0x2c] sm:$0xf]
        %v3137 = vld [vmem:[#allocation6 + $0x30] sm:$0xf]
        %v3138 = vld [vmem:[#allocation6 + $0x34] sm:$0xf]
        %v3139 = vld [vmem:[#allocation6 + $0x38] sm:$0xf]
        %v3140 = vld [vmem:[#allocation6 + $0x3c] sm:$0xf]
        %v3141 = vpack.c.bf16 %v3095, %v3094
        %v3142 = vpack.c.bf16 %v3097, %v3096
        %s3143 = scalar_lea.vmem [#allocation6], 64
        %v3144 = vld [vmem:[%s3143] sm:$0xf]
        %v3145 = vld [vmem:[%s3143 + $0x4] sm:$0xf]
        %v3146 = vld [vmem:[%s3143 + $0x8] sm:$0xf]
        %v3147 = vld [vmem:[%s3143 + $0xc] sm:$0xf]
        %v3148 = vld [vmem:[%s3143 + $0x10] sm:$0xf]
        %v3149 = vld [vmem:[%s3143 + $0x14] sm:$0xf]
        %v3150 = vld [vmem:[%s3143 + $0x18] sm:$0xf]
        %v3151 = vld [vmem:[%s3143 + $0x1c] sm:$0xf]
        %v3152 = vld [vmem:[%s3143 + $0x20] sm:$0xf]
        %v3153 = vld [vmem:[%s3143 + $0x24] sm:$0xf]
        %v3154 = vld [vmem:[%s3143 + $0x28] sm:$0xf]
        %v3155 = vld [vmem:[%s3143 + $0x2c] sm:$0xf]
        %v3156 = vld [vmem:[%s3143 + $0x30] sm:$0xf]
        %v3157 = vld [vmem:[%s3143 + $0x34] sm:$0xf]
        %v3158 = vld [vmem:[%s3143 + $0x38] sm:$0xf]
        %v3159 = vld [vmem:[%s3143 + $0x3c] sm:$0xf]
        %v3176 = vunpack.c.l.b16 %v3144
        %v3177 = vunpack.c.l.b16 %v3145
        %v3178 = vunpack.c.l.b16 %v3146
        %v3179 = vunpack.c.l.b16 %v3147
        %v3180 = vunpack.c.l.b16 %v3148
        %v3181 = vunpack.c.l.b16 %v3149
        %v3182 = vunpack.c.l.b16 %v3150
        %v3183 = vunpack.c.l.b16 %v3151
        %v3184 = vunpack.c.l.b16 %v3152
        %v3185 = vunpack.c.l.b16 %v3153
        %v3186 = vunpack.c.l.b16 %v3154
        %v3187 = vunpack.c.l.b16 %v3155
        %v3188 = vunpack.c.l.b16 %v3156
        %v3189 = vunpack.c.l.b16 %v3157
        %v3190 = vunpack.c.l.b16 %v3158
        %v3191 = vunpack.c.l.b16 %v3159
        %v3192 = vpack.c.b16 %v3177, %v3176
        %v3193 = vpack.c.b16 %v3179, %v3178
        %v3194 = vpack.c.b16 %v3181, %v3180
        %v3195 = vpack.c.b16 %v3183, %v3182
        %v3196 = vpack.c.b16 %v3185, %v3184
        %v3197 = vpack.c.b16 %v3187, %v3186
        %v3198 = vpack.c.b16 %v3189, %v3188
        %v3199 = vpack.c.b16 %v3191, %v3190
        %3208 = vmatprep.subr.bf16.mxu0 0
        %3209 = vmatpush1.bf16.msra.mxu0 %v3199
        %3210 = vmatprep.subr.bf16.mxu0 0
        %3211 = vmatpush1.bf16.msra.mxu0 %v3198
        %3212 = vmatprep.subr.bf16.mxu0 0
        %3213 = vmatpush1.bf16.msra.mxu0 %v3197
        %3214 = vmatprep.subr.bf16.mxu0 0
        %3215 = vmatpush1.bf16.msra.mxu0 %v3196
        %3216 = vmatprep.subr.bf16.mxu0 0
        %3217 = vmatpush1.bf16.msra.mxu0 %v3195
        %3218 = vmatprep.subr.bf16.mxu0 0
        %3219 = vmatpush1.bf16.msra.mxu0 %v3194
        %3220 = vmatprep.subr.bf16.mxu0 0
        %3221 = vmatpush1.bf16.msra.mxu0 %v3193
        %3222 = vmatprep.subr.bf16.mxu0 0
        %3223 = vmatpush1.bf16.msra.mxu0 %v3192
        %3224 = vmatprep.subr.bf16.mxu0 0
        %3225 = vmatpush2.bf16.msra.mxu0 0
        %3226 = vmatprep.subr.bf16.mxu0 0
        %3227 = vmatpush2.bf16.msra.mxu0 0
        %3228 = vmatprep.subr.bf16.mxu0 0
        %3229 = vmatpush2.bf16.msra.mxu0 0
        %3230 = vmatprep.subr.bf16.mxu0 0
        %3231 = vmatpush2.bf16.msra.mxu0 0
        %3232 = vmatprep.subr.bf16.mxu0 0
        %3233 = vmatpush2.bf16.msra.mxu0 0
        %3234 = vmatprep.subr.bf16.mxu0 0
        %3235 = vmatpush2.bf16.msra.mxu0 0
        %3236 = vmatprep.subr.bf16.mxu0 0
        %3237 = vmatpush2.bf16.msra.mxu0 0
        %3238 = vmatprep.subr.bf16.mxu0 0
        %3239 = vmatpush2.bf16.msra.mxu0 0
        %3240 = vmatprep.mubr.bf16.mxu0 0
        %3241 = vmatmul.mubr.bf16.gmra.mxu0 %v3141
        %v3242 = vpop.f32.mrf.mxu0
        %v3243 = vadd.f32 0.0, %v3242
        %v3244 = vpop.f32.mrf.mxu0
        %v3245 = vpop.f32.mrf.mxu0
        %v3246 = vadd.f32 0.0, %v3245
        %v3247 = vpop.f32.mrf.mxu0
        %3248 = vmatprep.mubr.bf16.mxu0 0
        %3249 = vmatmul.mubr.bf16.gmra.mxu0 %v3142
        %v3250 = vpop.f32.mrf.mxu0
        %v3251 = vadd.f32 0.0, %v3250
        %v3252 = vpop.f32.mrf.mxu0
        %v3253 = vpop.f32.mrf.mxu0
        %v3254 = vadd.f32 0.0, %v3253
        %v3255 = vpop.f32.mrf.mxu0
        %3256 = vdwg.mxu0
        %v3273 = vunpack.c.l.b16 %v3125
        %v3274 = vunpack.c.l.b16 %v3126
        %v3275 = vunpack.c.l.b16 %v3127
        %v3276 = vunpack.c.l.b16 %v3128
        %v3277 = vunpack.c.l.b16 %v3129
        %v3278 = vunpack.c.l.b16 %v3130
        %v3279 = vunpack.c.l.b16 %v3131
        %v3280 = vunpack.c.l.b16 %v3132
        %v3281 = vunpack.c.l.b16 %v3133
        %v3282 = vunpack.c.l.b16 %v3134
        %v3283 = vunpack.c.l.b16 %v3135
        %v3284 = vunpack.c.l.b16 %v3136
        %v3285 = vunpack.c.l.b16 %v3137
        %v3286 = vunpack.c.l.b16 %v3138
        %v3287 = vunpack.c.l.b16 %v3139
        %v3288 = vunpack.c.l.b16 %v3140
        %v3289 = vpack.c.b16 %v3274, %v3273
        %v3290 = vpack.c.b16 %v3276, %v3275
        %v3291 = vpack.c.b16 %v3278, %v3277
        %v3292 = vpack.c.b16 %v3280, %v3279
        %v3293 = vpack.c.b16 %v3282, %v3281
        %v3294 = vpack.c.b16 %v3284, %v3283
        %v3295 = vpack.c.b16 %v3286, %v3285
        %v3296 = vpack.c.b16 %v3288, %v3287
        %3305 = vmatprep.subr.bf16.mxu0 0
        %3306 = vmatpush1.bf16.msra.mxu0 %v3296
        %3307 = vmatprep.subr.bf16.mxu0 0
        %3308 = vmatpush1.bf16.msra.mxu0 %v3295
        %3309 = vmatprep.subr.bf16.mxu0 0
        %3310 = vmatpush1.bf16.msra.mxu0 %v3294
        %3311 = vmatprep.subr.bf16.mxu0 0
        %3312 = vmatpush1.bf16.msra.mxu0 %v3293
        %3313 = vmatprep.subr.bf16.mxu0 0
        %3314 = vmatpush1.bf16.msra.mxu0 %v3292
        %3315 = vmatprep.subr.bf16.mxu0 0
        %3316 = vmatpush1.bf16.msra.mxu0 %v3291
        %3317 = vmatprep.subr.bf16.mxu0 0
        %3318 = vmatpush1.bf16.msra.mxu0 %v3290
        %3319 = vmatprep.subr.bf16.mxu0 0
        %3320 = vmatpush1.bf16.msra.mxu0 %v3289
        %3321 = vmatprep.subr.bf16.mxu0 0
        %3322 = vmatpush2.bf16.msra.mxu0 0
        %3323 = vmatprep.subr.bf16.mxu0 0
        %3324 = vmatpush2.bf16.msra.mxu0 0
        %3325 = vmatprep.subr.bf16.mxu0 0
        %3326 = vmatpush2.bf16.msra.mxu0 0
        %3327 = vmatprep.subr.bf16.mxu0 0
        %3328 = vmatpush2.bf16.msra.mxu0 0
        %3329 = vmatprep.subr.bf16.mxu0 0
        %3330 = vmatpush2.bf16.msra.mxu0 0
        %3331 = vmatprep.subr.bf16.mxu0 0
        %3332 = vmatpush2.bf16.msra.mxu0 0
        %3333 = vmatprep.subr.bf16.mxu0 0
        %3334 = vmatpush2.bf16.msra.mxu0 0
        %3335 = vmatprep.subr.bf16.mxu0 0
        %3336 = vmatpush2.bf16.msra.mxu0 0
        %3337 = vmatprep.mubr.bf16.mxu0 0
        %3338 = vmatmul.mubr.bf16.gmra.mxu0 %v3123
        %v3339 = vpop.f32.mrf.mxu0
        %v3340 = vadd.f32 %v3243, %v3339
        %v3341 = vpop.f32.mrf.mxu0
        %v3342 = vpop.f32.mrf.mxu0
        %v3343 = vadd.f32 %v3246, %v3342
        %v3344 = vpop.f32.mrf.mxu0
        %3345 = vmatprep.mubr.bf16.mxu0 0
        %3346 = vmatmul.mubr.bf16.gmra.mxu0 %v3124
        %v3347 = vpop.f32.mrf.mxu0
        %v3348 = vadd.f32 %v3251, %v3347
        %v3349 = vpop.f32.mrf.mxu0
        %v3350 = vpop.f32.mrf.mxu0
        %v3351 = vadd.f32 %v3254, %v3350
        %v3352 = vpop.f32.mrf.mxu0
        %3353 = vdwg.mxu0
        %v3354 = vpack.c.bf16 %v3120, %v3119
        %v3355 = vpack.c.bf16 %v3122, %v3121
        %s3356 = scalar_lea.vmem [#allocation6], 128
        %v3357 = vld [vmem:[%s3356] sm:$0xf]
        %v3358 = vld [vmem:[%s3356 + $0x4] sm:$0xf]
        %v3359 = vld [vmem:[%s3356 + $0x8] sm:$0xf]
        %v3360 = vld [vmem:[%s3356 + $0xc] sm:$0xf]
        %v3361 = vld [vmem:[%s3356 + $0x10] sm:$0xf]
        %v3362 = vld [vmem:[%s3356 + $0x14] sm:$0xf]
        %v3363 = vld [vmem:[%s3356 + $0x18] sm:$0xf]
        %v3364 = vld [vmem:[%s3356 + $0x1c] sm:$0xf]
        %v3365 = vld [vmem:[%s3356 + $0x20] sm:$0xf]
        %v3366 = vld [vmem:[%s3356 + $0x24] sm:$0xf]
        %v3367 = vld [vmem:[%s3356 + $0x28] sm:$0xf]
        %v3368 = vld [vmem:[%s3356 + $0x2c] sm:$0xf]
        %v3369 = vld [vmem:[%s3356 + $0x30] sm:$0xf]
        %v3370 = vld [vmem:[%s3356 + $0x34] sm:$0xf]
        %v3371 = vld [vmem:[%s3356 + $0x38] sm:$0xf]
        %v3372 = vld [vmem:[%s3356 + $0x3c] sm:$0xf]
        %v3389 = vunpack.c.l.b16 %v3357
        %v3390 = vunpack.c.l.b16 %v3358
        %v3391 = vunpack.c.l.b16 %v3359
        %v3392 = vunpack.c.l.b16 %v3360
        %v3393 = vunpack.c.l.b16 %v3361
        %v3394 = vunpack.c.l.b16 %v3362
        %v3395 = vunpack.c.l.b16 %v3363
        %v3396 = vunpack.c.l.b16 %v3364
        %v3397 = vunpack.c.l.b16 %v3365
        %v3398 = vunpack.c.l.b16 %v3366
        %v3399 = vunpack.c.l.b16 %v3367
        %v3400 = vunpack.c.l.b16 %v3368
        %v3401 = vunpack.c.l.b16 %v3369
        %v3402 = vunpack.c.l.b16 %v3370
        %v3403 = vunpack.c.l.b16 %v3371
        %v3404 = vunpack.c.l.b16 %v3372
        %v3405 = vpack.c.b16 %v3390, %v3389
        %v3406 = vpack.c.b16 %v3392, %v3391
        %v3407 = vpack.c.b16 %v3394, %v3393
        %v3408 = vpack.c.b16 %v3396, %v3395
        %v3409 = vpack.c.b16 %v3398, %v3397
        %v3410 = vpack.c.b16 %v3400, %v3399
        %v3411 = vpack.c.b16 %v3402, %v3401
        %v3412 = vpack.c.b16 %v3404, %v3403
        %3421 = vmatprep.subr.bf16.mxu0 0
        %3422 = vmatpush1.bf16.msra.mxu0 %v3412
        %3423 = vmatprep.subr.bf16.mxu0 0
        %3424 = vmatpush1.bf16.msra.mxu0 %v3411
        %3425 = vmatprep.subr.bf16.mxu0 0
        %3426 = vmatpush1.bf16.msra.mxu0 %v3410
        %3427 = vmatprep.subr.bf16.mxu0 0
        %3428 = vmatpush1.bf16.msra.mxu0 %v3409
        %3429 = vmatprep.subr.bf16.mxu0 0
        %3430 = vmatpush1.bf16.msra.mxu0 %v3408
        %3431 = vmatprep.subr.bf16.mxu0 0
        %3432 = vmatpush1.bf16.msra.mxu0 %v3407
        %3433 = vmatprep.subr.bf16.mxu0 0
        %3434 = vmatpush1.bf16.msra.mxu0 %v3406
        %3435 = vmatprep.subr.bf16.mxu0 0
        %3436 = vmatpush1.bf16.msra.mxu0 %v3405
        %3437 = vmatprep.subr.bf16.mxu0 0
        %3438 = vmatpush2.bf16.msra.mxu0 0
        %3439 = vmatprep.subr.bf16.mxu0 0
        %3440 = vmatpush2.bf16.msra.mxu0 0
        %3441 = vmatprep.subr.bf16.mxu0 0
        %3442 = vmatpush2.bf16.msra.mxu0 0
        %3443 = vmatprep.subr.bf16.mxu0 0
        %3444 = vmatpush2.bf16.msra.mxu0 0
        %3445 = vmatprep.subr.bf16.mxu0 0
        %3446 = vmatpush2.bf16.msra.mxu0 0
        %3447 = vmatprep.subr.bf16.mxu0 0
        %3448 = vmatpush2.bf16.msra.mxu0 0
        %3449 = vmatprep.subr.bf16.mxu0 0
        %3450 = vmatpush2.bf16.msra.mxu0 0
        %3451 = vmatprep.subr.bf16.mxu0 0
        %3452 = vmatpush2.bf16.msra.mxu0 0
        %3453 = vmatprep.mubr.bf16.mxu0 0
        %3454 = vmatmul.mubr.bf16.gmra.mxu0 %v3354
        %v3455 = vpop.f32.mrf.mxu0
        %v3456 = vadd.f32 0.0, %v3455
        %v3457 = vpop.f32.mrf.mxu0
        %v3458 = vpop.f32.mrf.mxu0
        %v3459 = vadd.f32 0.0, %v3458
        %v3460 = vpop.f32.mrf.mxu0
        %3461 = vmatprep.mubr.bf16.mxu0 0
        %3462 = vmatmul.mubr.bf16.gmra.mxu0 %v3355
        %v3463 = vpop.f32.mrf.mxu0
        %v3464 = vadd.f32 0.0, %v3463
        %v3465 = vpop.f32.mrf.mxu0
        %v3466 = vpop.f32.mrf.mxu0
        %v3467 = vadd.f32 0.0, %v3466
        %v3468 = vpop.f32.mrf.mxu0
        %3469 = vdwg.mxu0
        %v3470 = vadd.f32 %v3340, %v3456
        %v3471 = vadd.f32 %v3343, %v3459
        %v3472 = vadd.f32 %v3348, %v3464
        %v3473 = vadd.f32 %v3351, %v3467
        %v3475 = vlaneseq
        %v3476 = vshrl.u32 %v3475, 7
        %v3477 = vsub.s32 0, %v3476
        %v3478 = vrot.slane %v3098, %v3477
        %v3480 = vadd.f32 %v3470, %v3478
        %v3481 = vadd.f32 %v3471, %v3478
        %v3482 = vadd.f32 %v3472, %v3478
        %v3483 = vadd.f32 %v3473, %v3478
        %3484 = vst [vmem:[%s403] sm:$0xff] %v3480
        %3485 = vst [vmem:[%s403 + $0x8] sm:$0xff] %v3481
        %3486 = vst [vmem:[%s403 + $0x10] sm:$0xff] %v3482
        %3487 = vst [vmem:[%s403 + $0x18] sm:$0xff] %v3483
        %p3488 = scmp.lt.s32.totalorder %s23, 1
        %s3489 = scalar_select %p3488, %s23, 1
        %s3490 = smul.addr %s3489, 4
        %s3491 = smul.addr %s3490, 8
        %s3492 = scalar_lea.vmem %s10, %s3491
        // Predicated region
        $region73: #{_lambda_.1} parent=59 // pred_check
          %p3493 = pneg %p256
        $region74: #{_lambda_.1} parent=59 // pred_check_branch
          %3495 = sbr.rel (%p3493) target = $region76
        $region75: #{_lambda_.1} parent=59 // pred_region
          _
        $region76: #{_lambda_.1} parent=59 // pred_fallthru
          _
      $region60: #{_lambda_.1} parent=5 // pred_fallthru
        _
      %p3496 = scmp.le.s32.totalorder 2, %s18
      // Predicated region
      $region77: #{_lambda_.1} parent=5 // pred_check
        %p3497 = pneg %p3496
      $region78: #{_lambda_.1} parent=5 // pred_check_branch
        %3499 = sbr.rel (%p3497) target = $region80
      $region79: #{_lambda_.1} parent=5 // pred_region
        %s3500 = ssub.s32 %s18, 2
        // Predicated region
        $region81: #{_lambda_.1} parent=79 // pred_check
          %p3501 = pneg %p262
        $region82: #{_lambda_.1} parent=79 // pred_check_branch
          %3503 = sbr.rel (%p3501) target = $region84
        $region83: #{_lambda_.1} parent=79 // pred_region
          %p3504 = scmp.lt.s32.totalorder %s24, 1
          %s3505 = scalar_select %p3504, %s24, 1
          %s3506 = smul.addr %s3505, 4
          %s3507 = smul.addr %s3506, 8
          %s3508 = scalar_lea.vmem %s10, %s3507
        $region84: #{_lambda_.1} parent=79 // pred_fallthru
          _
      $region80: #{_lambda_.1} parent=5 // pred_fallthru
        _
    $region6: #{_lambda_.1} parent=1 // loop_footer
      %s22 = sadd.s32 1, %s18
    $region7: #{_lambda_.1} parent=1 // loop_footer_branch
      %17 = sbr.rel target = $region3
    $region8: #{_lambda_.1} parent=1 // loop_exit
      _
    %3509 = vsyncpa [#allocation3], 1
    %s3510 = scalar_lea.sflag [#allocation3], 1
    %3511 = vsyncpa %s3510, 1
    %3512 = vsyncpa [#allocation5], 1

</llo_original>
